<compile_context>
chip_gen: v7x
topology: tpu7x:2x2x1
jax: 0.10.0
libtpu: 0.0.40
codegen_flags: <defaults>
</compile_context>

<pallas_src>
from functools import partial

import jax
import jax.numpy as jnp
from jax.experimental import pallas as pl
from jax.experimental.pallas import tpu as pltpu

NF = 32
GC = 32


def _round_up(x, m):
    return ((x + m - 1) // m) * m


def _interior_mask(n, h, w):
    """(R, 1) f32 over the zero-padded (h+2, w+2) grid: 1 at interior rows, 0 at padding rows."""
    m = jnp.pad(jnp.ones((n, h, w, 1), jnp.float32), ((0, 0), (1, 1), (1, 1), (0, 0)))
    return m.reshape(n * (h + 2) * (w + 2), 1)


def _first_conv_slab(x, stride):
    """9-tap slab of a 3x3 conv (padding=1, given stride), laid out on the conv OUTPUT padded
    grid: (N*(Ho+2)*(Wo+2), 9*Cin) bf16, zero rows at the output-grid padding positions."""
    n, h, w, cin = x.shape
    ho = (h + 2 - 3) // stride + 1
    wo = (w + 2 - 3) // stride + 1
    xp = jnp.pad(x, ((0, 0), (1, 1), (1, 1), (0, 0)))
    parts = []
    for dy in range(3):
        for dx in range(3):
            parts.append(xp[:, dy:dy + stride * (ho - 1) + 1:stride,
                             dx:dx + stride * (wo - 1) + 1:stride, :])
    slab = jnp.concatenate(parts, axis=-1)                    # (N, Ho, Wo, 9*Cin)
    slab = jnp.pad(slab, ((0, 0), (1, 1), (1, 1), (0, 0)))    # place onto padded output grid
    return slab.reshape(n * (ho + 2) * (wo + 2), 9 * cin).astype(jnp.bfloat16)


# ----------------------------------------------------------------------------
# Kernel 1: fused Conv3x3 -> LeakyReLU -> Conv3x3 pair (one pallas_call per pair)
# ----------------------------------------------------------------------------
def _conv_pair_kernel(slab1_ref, mask_ref, w1_ref, b1_ref, w2_ref, b2_ref,
                      o_ref, mid_ref, *, wp, g):
    # slab1_ref: (R, 9*Cin) bf16  taps of conv1, rows = conv1's padded OUTPUT grid
    # mask_ref : (R, 1)     f32   1 at interior rows, 0 at padding rows of that grid
    # mid_ref  : (R+2g, Cm) f32   scratch: flat padded conv1 activation + guard rows
    r = o_ref.shape[0]
    cmid = mid_ref.shape[1]
    mask = mask_ref[...]

    # Only the guard bands need zeroing (interior rows are fully overwritten below).
    mid_ref[:g, :] = jnp.zeros((g, cmid), jnp.float32)
    mid_ref[g + r:, :] = jnp.zeros((g, cmid), jnp.float32)

    a1 = jnp.dot(slab1_ref[...], w1_ref[...], preferred_element_type=jnp.float32)
    a1 = a1 + b1_ref[...]
    a1 = jnp.where(a1 >= 0.0, a1, 0.2 * a1) * mask            # LeakyReLU + exact zero padding
    mid_ref[g:g + r, :] = a1

    offs = [dy * wp + dx - (wp + 1) for dy in range(3) for dx in range(3)]
    slab2 = jnp.concatenate([mid_ref[g + o:g + o + r, :] for o in offs],
                            axis=1).astype(jnp.bfloat16)      # (R, 9*Cmid)
    o_ref[...] = jnp.dot(slab2, w2_ref[...], preferred_element_type=jnp.float32) + b2_ref[...]


@partial(jax.jit, static_argnames=("stride1",))
def conv_pair_pallas(x, p1, p2, *, stride1):
    """Conv3x3(stride1, pad 1) -> LeakyReLU(0.2) -> Conv3x3(stride 1, pad 1), fused."""
    n, h, w, cin = x.shape
    cmid = p1["w"].shape[-1]
    cout = p2["w"].shape[-1]
    ho = (h + 2 - 3) // stride1 + 1
    wo = (w + 2 - 3) // stride1 + 1
    hp, wp = ho + 2, wo + 2
    r = n * hp * wp
    g = _round_up(wp + 1, 8)                                   # guard rows >= max tap shift

    slab1 = _first_conv_slab(x, stride1)                       # (R, 9*Cin) bf16
    mask = _interior_mask(n, ho, wo)                           # (R, 1) f32
    w1 = p1["w"].reshape(9 * cin, cmid).astype(jnp.bfloat16)
    b1 = p1["b"].reshape(1, cmid).astype(jnp.float32)
    w2 = p2["w"].reshape(9 * cmid, cout).astype(jnp.bfloat16)
    b2 = p2["b"].reshape(1, cout).astype(jnp.float32)

    out = pl.pallas_call(
        partial(_conv_pair_kernel, wp=wp, g=g),
        out_shape=jax.ShapeDtypeStruct((r, cout), jnp.float32),
        grid_spec=pltpu.PrefetchScalarGridSpec(
            num_scalar_prefetch=0,
            grid=(1,),
            in_specs=[pl.BlockSpec((r, 9 * cin), lambda i: (0, 0)),
                      pl.BlockSpec((r, 1), lambda i: (0, 0)),
                      pl.BlockSpec((9 * cin, cmid), lambda i: (0, 0)),
                      pl.BlockSpec((1, cmid), lambda i: (0, 0)),
                      pl.BlockSpec((9 * cmid, cout), lambda i: (0, 0)),
                      pl.BlockSpec((1, cout), lambda i: (0, 0))],
            out_specs=pl.BlockSpec((r, cout), lambda i: (0, 0)),
            scratch_shapes=[pltpu.VMEM((r + 2 * g, cmid), jnp.float32)]),
        compiler_params=pltpu.CompilerParams(dimension_semantics=("arbitrary",)),
    )(slab1, mask, w1, b1, w2, b2)
    return out.reshape(n, hp, wp, cout)[:, 1:1 + ho, 1:1 + wo, :]


# ----------------------------------------------------------------------------
# Kernel 2: whole RRDB trunk + trunk_conv + skip connection in ONE pallas_call
# ----------------------------------------------------------------------------
# Flat padded activation layout in VMEM scratch: one "plane" = (Rg, C) f32 with
# Rg = 2*g + N*(H+2)*(W+2); rows [g, g+R) hold the zero-padded spatial map flattened
# row-major, rows [0, g) / [g+R, Rg) are zero guard rows so the 9 row-shifted tap reads
# (shift = (dy-1)*Wp + (dx-1), |shift| <= Wp+1 <= g) always stay in-bounds.
def _trunk_kernel(x_ref, mask_ref, w_ref, b_ref, wt_ref, bt_ref, o_ref,
                  buf, rrdb_in, *, wp, g):
    t = pl.program_id(0)
    nplanes, rg, c = buf.shape
    r = rg - 2 * g
    k = 9 * c

    @pl.when(t == 0)
    def _init():
        zg = jnp.zeros((g, c), jnp.float32)
        for s in range(nplanes):                      # only guard bands need zero init
            buf[s, :g, :] = zg
            buf[s, g + r:, :] = zg
        buf[0, g:g + r, :] = x_ref[...]               # fm_1x on its padded grid

    @pl.when(t % 3 == 0)                              # start of an RRDB: remember its input
    def _save():
        rrdb_in[...] = buf[0, g:g + r, :]

    mask = mask_ref[...]                              # (R, 1): 1 inside, 0 at padding rows
    offs = [dy * wp + dx - (wp + 1) for dy in range(3) for dx in range(3)]

    def build_slab(s):
        parts = [buf[s, g + o:g + o + r, :] for o in offs]
        return jnp.concatenate(parts, axis=1).astype(jnp.bfloat16)   # (R, 9*C)

    slabs = [build_slab(0)]                           # source 0 = the RDB input x
    blk = 0
    x5 = None
    for j in range(5):                                # the 5 dense-block convs
        acc = jnp.zeros((r, c), jnp.float32)
        for s in range(j + 1):                        # per-source matmuls replace torch.cat
            wjs = w_ref[0, blk * k:(blk + 1) * k, :]  # (9*C, C) bf16 channel slice
            acc = acc + jnp.dot(slabs[s], wjs, preferred_element_type=jnp.float32)
            blk += 1
        acc = acc + b_ref[0, j:j + 1, :]
        if j < 4:
            acc = jnp.where(acc >= 0.0, acc, 0.2 * acc) * mask        # LReLU + zero padding
            buf[j + 1, g:g + r, :] = acc                              # x_{j+1} stays in VMEM
            slabs.append(build_slab(j + 1))
        else:
            x5 = acc                                  # conv5: no activation

    new_act = x5 * 0.2 + buf[0, g:g + r, :]           # RDB residual

    @pl.when(t % 3 == 2)                              # end of an RRDB
    def _rrdb_end():
        buf[0, g:g + r, :] = (new_act * 0.2 + rrdb_in[...]) * mask

    @pl.when(t % 3 != 2)
    def _rrdb_mid():
        buf[0, g:g + r, :] = new_act * mask

    @pl.when(t == pl.num_programs(0) - 1)             # fused trunk_conv + skip connection
    def _fin():
        tslab = build_slab(0)
        trunk = jnp.dot(tslab, wt_ref[...], preferred_element_type=jnp.float32)
        o_ref[...] = trunk + bt_ref[...] + x_ref[...]


def _pack_trunk_params(rrdb_params, nf=NF, gc=GC):
    """Stack the RDBs' conv weights as per-(layer, source) (9*gc, nf) blocks.

    Block order matches kernel consumption (layer-major, source-minor); slab columns are
    tap-major then channel, so each block is W[:, :, src_channels, :].reshape(9*gc, nf)."""
    assert nf == gc, "trunk kernel assumes nf == gc (true for HREncoder: 32/32)"
    w_all, b_all = [], []
    for rrdb_p in rrdb_params:
        for rdb_p in rrdb_p:
            blocks = []
            for j in range(5):
                wj = rdb_p[j]["w"]                              # (3, 3, nf + j*gc, out)
                for s in range(j + 1):
                    blocks.append(wj[:, :, s * gc:(s + 1) * gc, :].reshape(9 * gc, -1))
            w_all.append(jnp.concatenate(blocks, axis=0))       # (15*9*gc, nf)
            b_all.append(jnp.stack([rdb_p[j]["b"] for j in range(5)], axis=0))
    w_stack = jnp.stack(w_all, 0).astype(jnp.bfloat16)          # (n_rdb, 4320, 32)
    b_stack = jnp.stack(b_all, 0).astype(jnp.float32)           # (n_rdb, 5, 32)
    return w_stack, b_stack


def rrdb_trunk_residual_pallas(fm, rrdb_params, trunk_p, nf=NF, gc=GC):
    """fm + trunk_conv(RRDB_trunk(fm)): the whole trunk (121 convs) as ONE pallas_call."""
    n, h, w, c = fm.shape
    hp, wp = h + 2, w + 2
    r = n * hp * wp
    g = _round_up(wp + 1, 8)
    rg = r + 2 * g

    x_flat = jnp.pad(fm, ((0, 0), (1, 1), (1, 1), (0, 0))).reshape(r, c)
    mask = _interior_mask(n, h, w)                              # (R, 1)

    w_stack, b_stack = _pack_trunk_params(rrdb_params, nf=nf, gc=gc)
    wt = trunk_p["w"].reshape(9 * c, c).astype(jnp.bfloat16)
    bt = trunk_p["b"].reshape(1, c).astype(jnp.float32)
    n_rdb, kall = w_stack.shape[0], w_stack.shape[1]

    out_flat = pl.pallas_call(
        partial(_trunk_kernel, wp=wp, g=g),
        out_shape=jax.ShapeDtypeStruct((r, c), jnp.float32),
        grid_spec=pltpu.PrefetchScalarGridSpec(
            num_scalar_prefetch=0,
            grid=(n_rdb,),
            in_specs=[pl.BlockSpec((r, c), lambda t: (0, 0)),           # fm_1x (resident)
                      pl.BlockSpec((r, 1), lambda t: (0, 0)),           # validity mask
                      pl.BlockSpec((1, kall, c), lambda t: (t, 0, 0)),  # per-RDB weights
                      pl.BlockSpec((1, 5, c), lambda t: (t, 0, 0)),     # per-RDB biases
                      pl.BlockSpec((9 * c, c), lambda t: (0, 0)),       # trunk_conv W (resident)
                      pl.BlockSpec((1, c), lambda t: (0, 0))],          # trunk_conv b (resident)
            out_specs=pl.BlockSpec((r, c), lambda t: (0, 0)),
            scratch_shapes=[pltpu.VMEM((5, rg, c), jnp.float32),        # x, x1..x4 planes
                            pltpu.VMEM((r, c), jnp.float32)]),          # saved RRDB input
        compiler_params=pltpu.CompilerParams(dimension_semantics=("arbitrary",)),
    )(x_flat, mask, w_stack, b_stack, wt, bt)
    return out_flat.reshape(n, hp, wp, c)[:, 1:1 + h, 1:1 + w, :]
    # TODO(synk): on v7x, add a leading "parallel" batch axis so both TensorCores run the trunk.


# ----------------------------------------------------------------------------
# Pallas forward pass (mirrors HREncoder.forward exactly): 4 pallas_calls total
# ----------------------------------------------------------------------------
@jax.jit
def hr_encoder_forward_pallas(params, x):
    fm_4x = conv_pair_pallas(x, params["in0"], params["in1"], stride1=1)       # conv_input
    fm_2x = conv_pair_pallas(fm_4x, params["d1_0"], params["d1_1"], stride1=2)  # down1
    fm_1x = conv_pair_pallas(fm_2x, params["d2_0"], params["d2_1"], stride1=2)  # down2
    return rrdb_trunk_residual_pallas(fm_1x, params["rrdb"], params["trunk"])   # trunk + skip


# ----------------------------------------------------------------------------
# Pure-JAX f32 reference (for correctness checks only)
# ----------------------------------------------------------------------------
@partial(jax.jit, static_argnames=("stride", "act"))
def conv3x3_ref(x, w, b, *, stride=1, act=False):
    out = jax.lax.conv_general_dilated(
        x, w, window_strides=(stride, stride), padding=((1, 1), (1, 1)),
        dimension_numbers=("NHWC", "HWIO", "NHWC"))
    out = out + b.reshape(1, 1, 1, -1)
    if act:
        out = jnp.where(out >= 0.0, out, 0.2 * out)
    return out


def rdb_forward_ref(x, p):
    x1 = conv3x3_ref(x, p[0]["w"], p[0]["b"], act=True)
    x2 = conv3x3_ref(jnp.concatenate([x, x1], -1), p[1]["w"], p[1]["b"], act=True)
    x3 = conv3x3_ref(jnp.concatenate([x, x1, x2], -1), p[2]["w"], p[2]["b"], act=True)
    x4 = conv3x3_ref(jnp.concatenate([x, x1, x2, x3], -1), p[3]["w"], p[3]["b"], act=True)
    x5 = conv3x3_ref(jnp.concatenate([x, x1, x2, x3, x4], -1), p[4]["w"], p[4]["b"])
    return x5 * 0.2 + x


def rrdb_forward_ref(x, p):
    out = rdb_forward_ref(x, p[0])
    out = rdb_forward_ref(out, p[1])
    out = rdb_forward_ref(out, p[2])
    return out * 0.2 + x


@jax.jit
def hr_encoder_forward_ref(params, x):
    h = conv3x3_ref(x, params["in0"]["w"], params["in0"]["b"], act=True)
    fm_4x = conv3x3_ref(h, params["in1"]["w"], params["in1"]["b"])
    h = conv3x3_ref(fm_4x, params["d1_0"]["w"], params["d1_0"]["b"], stride=2, act=True)
    fm_2x = conv3x3_ref(h, params["d1_1"]["w"], params["d1_1"]["b"])
    h = conv3x3_ref(fm_2x, params["d2_0"]["w"], params["d2_0"]["b"], stride=2, act=True)
    fm_1x = conv3x3_ref(h, params["d2_1"]["w"], params["d2_1"]["b"])
    t = fm_1x
    for rrdb_p in params["rrdb"]:
        t = rrdb_forward_ref(t, rrdb_p)
    trunk = conv3x3_ref(t, params["trunk"]["w"], params["trunk"]["b"])
    return fm_1x + trunk


# ----------------------------------------------------------------------------
# Parameter initialization (deterministic, synthetic)
# ----------------------------------------------------------------------------
def _conv_params(key, cin, cout, wscale=0.05):
    kw, kb = jax.random.split(key)
    return {"w": wscale * jax.random.normal(kw, (3, 3, cin, cout), jnp.float32),
            "b": 0.01 * jax.random.normal(kb, (cout,), jnp.float32)}


def init_params(key, n_rrdb=8, nf=32, gc=32):
    keys = iter(jax.random.split(key, 7 + n_rrdb * 3 * 5))
    p = {}
    p["in0"] = _conv_params(next(keys), 3, nf)
    p["in1"] = _conv_params(next(keys), nf, nf)
    p["d1_0"] = _conv_params(next(keys), nf, nf)
    p["d1_1"] = _conv_params(next(keys), nf, nf)
    p["d2_0"] = _conv_params(next(keys), nf, nf)
    p["d2_1"] = _conv_params(next(keys), nf, nf)
    p["trunk"] = _conv_params(next(keys), nf, nf)
    rrdbs = []
    cins = [nf, nf + gc, nf + 2 * gc, nf + 3 * gc, nf + 4 * gc]
    couts = [gc, gc, gc, gc, nf]
    for _ in range(n_rrdb):
        rdbs = []
        for _ in range(3):
            rdbs.append([_conv_params(next(keys), ci, co) for ci, co in zip(cins, couts)])
        rrdbs.append(rdbs)
    p["rrdb"] = rrdbs
    return p


# ----------------------------------------------------------------------------
if __name__ == "__main__":
    key = jax.random.PRNGKey(0)
    kx, kp = jax.random.split(key)

    # PyTorch module input is NCHW (N=2, C=3, H=W=16); transpose once to NHWC for the kernels.
    x_nchw = jax.random.normal(kx, (2, 3, 16, 16), jnp.float32)
    x = jnp.transpose(x_nchw, (0, 2, 3, 1))                    # (2, 16, 16, 3)

    params = init_params(kp, n_rrdb=8, nf=32, gc=32)

    def _rel(a, b):
        return float(jnp.max(jnp.abs(a - b))) / (float(jnp.max(jnp.abs(b))) + 1e-8)

    # --- stage check: fused conv pair (conv_input) vs f32 lax.conv reference ---
    fm_4x_pal = jax.block_until_ready(
        conv_pair_pallas(x, params["in0"], params["in1"], stride1=1))
    fm_4x_ref = conv3x3_ref(conv3x3_ref(x, params["in0"]["w"], params["in0"]["b"], act=True),
                            params["in1"]["w"], params["in1"]["b"])
    r0 = _rel(fm_4x_pal, fm_4x_ref)
    assert r0 < 3e-2, f"conv pair mismatch: rel={r0}"

    # --- stage check: single RRDB + trunk_conv + skip through the trunk kernel (grid=(3,)) ---
    h = conv3x3_ref(fm_4x_ref, params["d1_0"]["w"], params["d1_0"]["b"], stride=2, act=True)
    fm_2x_ref = conv3x3_ref(h, params["d1_1"]["w"], params["d1_1"]["b"])
    h = conv3x3_ref(fm_2x_ref, params["d2_0"]["w"], params["d2_0"]["b"], stride=2, act=True)
    fm_1x_ref = conv3x3_ref(h, params["d2_1"]["w"], params["d2_1"]["b"])
    one_pal = jax.block_until_ready(
        jax.jit(rrdb_trunk_residual_pallas)(fm_1x_ref, params["rrdb"][:1], params["trunk"]))
    t_ref = rrdb_forward_ref(fm_1x_ref, params["rrdb"][0])
    one_ref = fm_1x_ref + conv3x3_ref(t_ref, params["trunk"]["w"], params["trunk"]["b"])
    r1 = _rel(one_pal, one_ref)
    assert r1 < 5e-2, f"single-RRDB trunk mismatch: rel={r1}"

    # --- full HREncoder forward with the Pallas kernels ---
    out = jax.block_until_ready(hr_encoder_forward_pallas(params, x))
    assert out.shape == (2, 4, 4, 32), out.shape               # fm_1x resolution = 16/4, 32 ch
    assert bool(jnp.all(jnp.isfinite(out)))

    # --- end-to-end check against the pure-JAX f32 reference ---
    ref = jax.block_until_ready(hr_encoder_forward_ref(params, x))
    r2 = _rel(out, ref)
    assert r2 < 1e-1, f"full forward mismatch: rel={r2}"        # bf16 MXU operands, f32 accum

    print("KERNEL_OK")
</pallas_src>

<mosaic_0001>
module attributes {stable_mosaic.version = 11 : i64} {
  func.func @_conv_pair_kernel(%arg0: i32, %arg1: memref<648x27xbf16, #tpu.memory_space<vmem>>, %arg2: memref<648x1xf32, #tpu.memory_space<vmem>>, %arg3: memref<27x32xbf16, #tpu.memory_space<vmem>>, %arg4: memref<1x32xf32, #tpu.memory_space<vmem>>, %arg5: memref<288x32xbf16, #tpu.memory_space<vmem>>, %arg6: memref<1x32xf32, #tpu.memory_space<vmem>>, %arg7: memref<648x32xf32, #tpu.memory_space<vmem>>, %arg8: memref<696x32xf32, #tpu.memory_space<vmem>>) attributes {dimension_semantics = [#tpu.dimension_semantics<arbitrary>], iteration_bounds = array<i64: 1>, scalar_prefetch = 0 : i64, scratch_operands = 1 : i64, tpu.core_type = #tpu.core_type<tc>, window_params = [{pipeline_mode = #tpu.pipeline_mode<synchronous>, transform_indices = @transform_0, window_bounds = array<i64: 648, 27>}, {pipeline_mode = #tpu.pipeline_mode<synchronous>, transform_indices = @transform_1, window_bounds = array<i64: 648, 1>}, {pipeline_mode = #tpu.pipeline_mode<synchronous>, transform_indices = @transform_2, window_bounds = array<i64: 27, 32>}, {pipeline_mode = #tpu.pipeline_mode<synchronous>, transform_indices = @transform_3, window_bounds = array<i64: 1, 32>}, {pipeline_mode = #tpu.pipeline_mode<synchronous>, transform_indices = @transform_4, window_bounds = array<i64: 288, 32>}, {pipeline_mode = #tpu.pipeline_mode<synchronous>, transform_indices = @transform_5, window_bounds = array<i64: 1, 32>}, {pipeline_mode = #tpu.pipeline_mode<synchronous>, transform_indices = @transform_6, window_bounds = array<i64: 648, 32>}]} {
    %c0 = arith.constant 0 : index
    %c0_0 = arith.constant 0 : index
    %0 = vector.load %arg2[%c0, %c0_0] : memref<648x1xf32, #tpu.memory_space<vmem>>, vector<648x1xf32>
    %cst = arith.constant 0.000000e+00 : f32
    %1 = vector.broadcast %cst : f32 to vector<24x32xf32>
    %c0_1 = arith.constant 0 : index
    %c0_2 = arith.constant 0 : index
    %2 = vector.load %arg8[%c0_1, %c0_2] : memref<696x32xf32, #tpu.memory_space<vmem>>, vector<24x32xf32>
    tpu.vector_store %arg8[%c0_1, %c0_2], %1 {strides = array<i32>} : memref<696x32xf32, #tpu.memory_space<vmem>>, vector<24x32xf32>,
    %cst_3 = arith.constant 0.000000e+00 : f32
    %3 = vector.broadcast %cst_3 : f32 to vector<24x32xf32>
    %c672 = arith.constant 672 : index
    %c0_4 = arith.constant 0 : index
    %4 = vector.load %arg8[%c672, %c0_4] : memref<696x32xf32, #tpu.memory_space<vmem>>, vector<24x32xf32>
    tpu.vector_store %arg8[%c672, %c0_4], %3 {strides = array<i32>} : memref<696x32xf32, #tpu.memory_space<vmem>>, vector<24x32xf32>,
    %c0_5 = arith.constant 0 : index
    %c0_6 = arith.constant 0 : index
    %5 = vector.load %arg1[%c0_5, %c0_6] : memref<648x27xbf16, #tpu.memory_space<vmem>>, vector<648x27xbf16>
    %c0_7 = arith.constant 0 : index
    %c0_8 = arith.constant 0 : index
    %6 = vector.load %arg3[%c0_7, %c0_8] : memref<27x32xbf16, #tpu.memory_space<vmem>>, vector<27x32xbf16>
    %cst_9 = arith.constant dense<0.000000e+00> : vector<648x32xf32>
    %7 = tpu.matmul %5, %6, %cst_9 {dimension_numbers = #tpu.dot_dimension_numbers<[1], [0], [0], [1], [0, 0, 1, 1], [], []>} : vector<648x27xbf16>, vector<27x32xbf16>, vector<648x32xf32> -> vector<648x32xf32>
    %c0_10 = arith.constant 0 : index
    %c0_11 = arith.constant 0 : index
    %8 = vector.load %arg4[%c0_10, %c0_11] : memref<1x32xf32, #tpu.memory_space<vmem>>, vector<1x32xf32>
    %9 = vector.broadcast %8 : vector<1x32xf32> to vector<648x32xf32>
    %10 = arith.addf %7, %9 : vector<648x32xf32>
    %cst_12 = arith.constant 0.000000e+00 : f32
    %11 = vector.broadcast %cst_12 : f32 to vector<648x32xf32>
    %12 = arith.cmpf oge, %10, %11 : vector<648x32xf32>
    %cst_13 = arith.constant 2.000000e-01 : f32
    %13 = vector.broadcast %cst_13 : f32 to vector<648x32xf32>
    %14 = arith.mulf %13, %10 : vector<648x32xf32>
    %15 = arith.select %12, %10, %14 : vector<648x32xi1>, vector<648x32xf32>
    %16 = vector.broadcast %0 : vector<648x1xf32> to vector<648x32xf32>
    %17 = arith.mulf %15, %16 : vector<648x32xf32>
    %c24 = arith.constant 24 : index
    %c0_14 = arith.constant 0 : index
    %18 = vector.load %arg8[%c24, %c0_14] : memref<696x32xf32, #tpu.memory_space<vmem>>, vector<648x32xf32>
    tpu.vector_store %arg8[%c24, %c0_14], %17 {strides = array<i32>} : memref<696x32xf32, #tpu.memory_space<vmem>>, vector<648x32xf32>,
    %c5 = arith.constant 5 : index
    %c0_15 = arith.constant 0 : index
    %19 = vector.load %arg8[%c5, %c0_15] : memref<696x32xf32, #tpu.memory_space<vmem>>, vector<648x32xf32>
    %c6 = arith.constant 6 : index
    %c0_16 = arith.constant 0 : index
    %20 = vector.load %arg8[%c6, %c0_16] : memref<696x32xf32, #tpu.memory_space<vmem>>, vector<648x32xf32>
    %c7 = arith.constant 7 : index
    %c0_17 = arith.constant 0 : index
    %21 = vector.load %arg8[%c7, %c0_17] : memref<696x32xf32, #tpu.memory_space<vmem>>, vector<648x32xf32>
    %c23 = arith.constant 23 : index
    %c0_18 = arith.constant 0 : index
    %22 = vector.load %arg8[%c23, %c0_18] : memref<696x32xf32, #tpu.memory_space<vmem>>, vector<648x32xf32>
    %c24_19 = arith.constant 24 : index
    %c0_20 = arith.constant 0 : index
    %23 = vector.load %arg8[%c24_19, %c0_20] : memref<696x32xf32, #tpu.memory_space<vmem>>, vector<648x32xf32>
    %c25 = arith.constant 25 : index
    %c0_21 = arith.constant 0 : index
    %24 = vector.load %arg8[%c25, %c0_21] : memref<696x32xf32, #tpu.memory_space<vmem>>, vector<648x32xf32>
    %c41 = arith.constant 41 : index
    %c0_22 = arith.constant 0 : index
    %25 = vector.load %arg8[%c41, %c0_22] : memref<696x32xf32, #tpu.memory_space<vmem>>, vector<648x32xf32>
    %c42 = arith.constant 42 : index
    %c0_23 = arith.constant 0 : index
    %26 = vector.load %arg8[%c42, %c0_23] : memref<696x32xf32, #tpu.memory_space<vmem>>, vector<648x32xf32>
    %c43 = arith.constant 43 : index
    %c0_24 = arith.constant 0 : index
    %27 = vector.load %arg8[%c43, %c0_24] : memref<696x32xf32, #tpu.memory_space<vmem>>, vector<648x32xf32>
    %28 = tpu.concatenate %19, %20, %21, %22, %23, %24, %25, %26, %27 in 1 : vector<648x32xf32>, vector<648x32xf32>, vector<648x32xf32>, vector<648x32xf32>, vector<648x32xf32>, vector<648x32xf32>, vector<648x32xf32>, vector<648x32xf32>, vector<648x32xf32> -> vector<648x288xf32>
    %29 = arith.truncf %28 : vector<648x288xf32> to vector<648x288xbf16>
    %c0_25 = arith.constant 0 : index
    %c0_26 = arith.constant 0 : index
    %30 = vector.load %arg5[%c0_25, %c0_26] : memref<288x32xbf16, #tpu.memory_space<vmem>>, vector<288x32xbf16>
    %cst_27 = arith.constant dense<0.000000e+00> : vector<648x32xf32>
    %31 = tpu.matmul %29, %30, %cst_27 {dimension_numbers = #tpu.dot_dimension_numbers<[1], [0], [0], [1], [0, 0, 1, 1], [], []>} : vector<648x288xbf16>, vector<288x32xbf16>, vector<648x32xf32> -> vector<648x32xf32>
    %c0_28 = arith.constant 0 : index
    %c0_29 = arith.constant 0 : index
    %32 = vector.load %arg6[%c0_28, %c0_29] : memref<1x32xf32, #tpu.memory_space<vmem>>, vector<1x32xf32>
    %33 = vector.broadcast %32 : vector<1x32xf32> to vector<648x32xf32>
    %34 = arith.addf %31, %33 : vector<648x32xf32>
    %c0_30 = arith.constant 0 : index
    %c0_31 = arith.constant 0 : index
    %35 = vector.load %arg7[%c0_30, %c0_31] : memref<648x32xf32, #tpu.memory_space<vmem>>, vector<648x32xf32>
    tpu.vector_store %arg7[%c0_30, %c0_31], %34 {strides = array<i32>} : memref<648x32xf32, #tpu.memory_space<vmem>>, vector<648x32xf32>,
    return
  }
  func.func @transform_0(%arg0: i32) -> (i32, i32) {
    %c0_i32 = arith.constant 0 : i32
    %c0_i32_0 = arith.constant 0 : i32
    %c0_i32_1 = arith.constant 0 : i32
    return %c0_i32, %c0_i32_0 : i32, i32
  }
  func.func @transform_1(%arg0: i32) -> (i32, i32) {
    %c0_i32 = arith.constant 0 : i32
    %c0_i32_0 = arith.constant 0 : i32
    %c0_i32_1 = arith.constant 0 : i32
    return %c0_i32, %c0_i32_0 : i32, i32
  }
  func.func @transform_2(%arg0: i32) -> (i32, i32) {
    %c0_i32 = arith.constant 0 : i32
    %c0_i32_0 = arith.constant 0 : i32
    %c0_i32_1 = arith.constant 0 : i32
    return %c0_i32, %c0_i32_0 : i32, i32
  }
  func.func @transform_3(%arg0: i32) -> (i32, i32) {
    %c0_i32 = arith.constant 0 : i32
    %c0_i32_0 = arith.constant 0 : i32
    %c0_i32_1 = arith.constant 0 : i32
    return %c0_i32, %c0_i32_0 : i32, i32
  }
  func.func @transform_4(%arg0: i32) -> (i32, i32) {
    %c0_i32 = arith.constant 0 : i32
    %c0_i32_0 = arith.constant 0 : i32
    %c0_i32_1 = arith.constant 0 : i32
    return %c0_i32, %c0_i32_0 : i32, i32
  }
  func.func @transform_5(%arg0: i32) -> (i32, i32) {
    %c0_i32 = arith.constant 0 : i32
    %c0_i32_0 = arith.constant 0 : i32
    %c0_i32_1 = arith.constant 0 : i32
    return %c0_i32, %c0_i32_0 : i32, i32
  }
  func.func @transform_6(%arg0: i32) -> (i32, i32) {
    %c0_i32 = arith.constant 0 : i32
    %c0_i32_0 = arith.constant 0 : i32
    %c0_i32_1 = arith.constant 0 : i32
    return %c0_i32, %c0_i32_0 : i32, i32
  }
}

</mosaic_0001>

<llo_original>
// kernel: conv_pair_pallas.1
$region0: #{conv_pair_pallas.1}
  #allocation0 [shape = 'u32[]', space=smem, size = 0x4, offset = 0x4, fixed_abs, tag = 'smem constant byte address 0x4 - core index']
  #allocation1 [shape = 'u32[144,128]{1,0:T(1,128)}', space=vmem, size = 0x12000, scoped, tag = 'internal scratch']
  #allocation2 [shape = 'f32[696,32]{1,0:T(8,128)}', space=vmem, size = 0x57000, scoped, tag = 'scratch operand']
  %s0 = inlined_call_operand.vmem [shape: bf16[648,27], index: 0, kind: input, shape index: {}]
  %s1 = inlined_call_operand.vmem [shape: f32[648,1], index: 1, kind: input, shape index: {}]
  %s2 = inlined_call_operand.vmem [shape: bf16[27,32], index: 2, kind: input, shape index: {}]
  %s3 = inlined_call_operand.vmem [shape: f32[1,32], index: 3, kind: input, shape index: {}]
  %s4 = inlined_call_operand.vmem [shape: bf16[288,32], index: 4, kind: input, shape index: {}]
  %s5 = inlined_call_operand.vmem [shape: f32[1,32], index: 5, kind: input, shape index: {}]
  %s6 = inlined_call_operand.vmem [shape: f32[648,32], index: 6, kind: output, shape index: {}]
  %s7 = sld [smem:[#allocation0]]
  $region34: #{conv_pair_pallas.1} parent=0
    _
  %s9 = ssub.s32 1, %s7
  %s10 = scalar_select 0, %s9, %s7
  // Predicated region
  $region2: #{conv_pair_pallas.1} parent=0 // pred_check
    _
  $region3: #{conv_pair_pallas.1} parent=0 // pred_check_branch
    %12 = sbr.rel (0) target = $region5
  $region4: #{conv_pair_pallas.1} parent=0 // pred_region
    _
  $region5: #{conv_pair_pallas.1} parent=0 // pred_fallthru
    _
  // Predicated region
  $region6: #{conv_pair_pallas.1} parent=0 // pred_check
    _
  $region7: #{conv_pair_pallas.1} parent=0 // pred_check_branch
    %14 = sbr.rel (0) target = $region9
  $region8: #{conv_pair_pallas.1} parent=0 // pred_region
    _
  $region9: #{conv_pair_pallas.1} parent=0 // pred_fallthru
    _
  // Predicated region
  $region10: #{conv_pair_pallas.1} parent=0 // pred_check
    _
  $region11: #{conv_pair_pallas.1} parent=0 // pred_check_branch
    %16 = sbr.rel (0) target = $region13
  $region12: #{conv_pair_pallas.1} parent=0 // pred_region
    _
  $region13: #{conv_pair_pallas.1} parent=0 // pred_fallthru
    _
  // Predicated region
  $region14: #{conv_pair_pallas.1} parent=0 // pred_check
    _
  $region15: #{conv_pair_pallas.1} parent=0 // pred_check_branch
    %18 = sbr.rel (0) target = $region17
  $region16: #{conv_pair_pallas.1} parent=0 // pred_region
    _
  $region17: #{conv_pair_pallas.1} parent=0 // pred_fallthru
    _
  // Predicated region
  $region18: #{conv_pair_pallas.1} parent=0 // pred_check
    _
  $region19: #{conv_pair_pallas.1} parent=0 // pred_check_branch
    %20 = sbr.rel (0) target = $region21
  $region20: #{conv_pair_pallas.1} parent=0 // pred_region
    _
  $region21: #{conv_pair_pallas.1} parent=0 // pred_fallthru
    _
  // Predicated region
  $region22: #{conv_pair_pallas.1} parent=0 // pred_check
    _
  $region23: #{conv_pair_pallas.1} parent=0 // pred_check_branch
    %22 = sbr.rel (0) target = $region25
  $region24: #{conv_pair_pallas.1} parent=0 // pred_region
    _
  $region25: #{conv_pair_pallas.1} parent=0 // pred_fallthru
    _
  %v24 = vld [vmem:[%s1] sm:$0xff]
  %v25 = vld [vmem:[%s1 + $0x8] sm:$0xff]
  %v26 = vld [vmem:[%s1 + $0x10] sm:$0xff]
  %v27 = vld [vmem:[%s1 + $0x18] sm:$0xff]
  %v28 = vld [vmem:[%s1 + $0x20] sm:$0xff]
  %v29 = vld [vmem:[%s1 + $0x28] sm:$0xff]
  %v30 = vld [vmem:[%s1 + $0x30] sm:$0xff]
  %v31 = vld [vmem:[%s1 + $0x38] sm:$0xff]
  %v32 = vld [vmem:[%s1 + $0x40] sm:$0xff]
  %v33 = vld [vmem:[%s1 + $0x48] sm:$0xff]
  %v34 = vld [vmem:[%s1 + $0x50] sm:$0xff]
  %v35 = vld [vmem:[%s1 + $0x58] sm:$0xff]
  %v36 = vld [vmem:[%s1 + $0x60] sm:$0xff]
  %v37 = vld [vmem:[%s1 + $0x68] sm:$0xff]
  %v38 = vld [vmem:[%s1 + $0x70] sm:$0xff]
  %v39 = vld [vmem:[%s1 + $0x78] sm:$0xff]
  %v40 = vld [vmem:[%s1 + $0x80] sm:$0xff]
  %v41 = vld [vmem:[%s1 + $0x88] sm:$0xff]
  %v42 = vld [vmem:[%s1 + $0x90] sm:$0xff]
  %v43 = vld [vmem:[%s1 + $0x98] sm:$0xff]
  %v44 = vld [vmem:[%s1 + $0xa0] sm:$0xff]
  %v45 = vld [vmem:[%s1 + $0xa8] sm:$0xff]
  %v46 = vld [vmem:[%s1 + $0xb0] sm:$0xff]
  %v47 = vld [vmem:[%s1 + $0xb8] sm:$0xff]
  %v48 = vld [vmem:[%s1 + $0xc0] sm:$0xff]
  %v49 = vld [vmem:[%s1 + $0xc8] sm:$0xff]
  %v50 = vld [vmem:[%s1 + $0xd0] sm:$0xff]
  %v51 = vld [vmem:[%s1 + $0xd8] sm:$0xff]
  %v52 = vld [vmem:[%s1 + $0xe0] sm:$0xff]
  %v53 = vld [vmem:[%s1 + $0xe8] sm:$0xff]
  %v54 = vld [vmem:[%s1 + $0xf0] sm:$0xff]
  %v55 = vld [vmem:[%s1 + $0xf8] sm:$0xff]
  %v56 = vld [vmem:[%s1 + $0x100] sm:$0xff]
  %v57 = vld [vmem:[%s1 + $0x108] sm:$0xff]
  %v58 = vld [vmem:[%s1 + $0x110] sm:$0xff]
  %v59 = vld [vmem:[%s1 + $0x118] sm:$0xff]
  %v60 = vld [vmem:[%s1 + $0x120] sm:$0xff]
  %v61 = vld [vmem:[%s1 + $0x128] sm:$0xff]
  %v62 = vld [vmem:[%s1 + $0x130] sm:$0xff]
  %v63 = vld [vmem:[%s1 + $0x138] sm:$0xff]
  %v64 = vld [vmem:[%s1 + $0x140] sm:$0xff]
  %v65 = vld [vmem:[%s1 + $0x148] sm:$0xff]
  %v66 = vld [vmem:[%s1 + $0x150] sm:$0xff]
  %v67 = vld [vmem:[%s1 + $0x158] sm:$0xff]
  %v68 = vld [vmem:[%s1 + $0x160] sm:$0xff]
  %v69 = vld [vmem:[%s1 + $0x168] sm:$0xff]
  %v70 = vld [vmem:[%s1 + $0x170] sm:$0xff]
  %v71 = vld [vmem:[%s1 + $0x178] sm:$0xff]
  %v72 = vld [vmem:[%s1 + $0x180] sm:$0xff]
  %v73 = vld [vmem:[%s1 + $0x188] sm:$0xff]
  %v74 = vld [vmem:[%s1 + $0x190] sm:$0xff]
  %v75 = vld [vmem:[%s1 + $0x198] sm:$0xff]
  %v76 = vld [vmem:[%s1 + $0x1a0] sm:$0xff]
  %v77 = vld [vmem:[%s1 + $0x1a8] sm:$0xff]
  %v78 = vld [vmem:[%s1 + $0x1b0] sm:$0xff]
  %v79 = vld [vmem:[%s1 + $0x1b8] sm:$0xff]
  %v80 = vld [vmem:[%s1 + $0x1c0] sm:$0xff]
  %v81 = vld [vmem:[%s1 + $0x1c8] sm:$0xff]
  %v82 = vld [vmem:[%s1 + $0x1d0] sm:$0xff]
  %v83 = vld [vmem:[%s1 + $0x1d8] sm:$0xff]
  %v84 = vld [vmem:[%s1 + $0x1e0] sm:$0xff]
  %v85 = vld [vmem:[%s1 + $0x1e8] sm:$0xff]
  %v86 = vld [vmem:[%s1 + $0x1f0] sm:$0xff]
  %v87 = vld [vmem:[%s1 + $0x1f8] sm:$0xff]
  %v88 = vld [vmem:[%s1 + $0x200] sm:$0xff]
  %v89 = vld [vmem:[%s1 + $0x208] sm:$0xff]
  %v90 = vld [vmem:[%s1 + $0x210] sm:$0xff]
  %v91 = vld [vmem:[%s1 + $0x218] sm:$0xff]
  %v92 = vld [vmem:[%s1 + $0x220] sm:$0xff]
  %v93 = vld [vmem:[%s1 + $0x228] sm:$0xff]
  %v94 = vld [vmem:[%s1 + $0x230] sm:$0xff]
  %v95 = vld [vmem:[%s1 + $0x238] sm:$0xff]
  %v96 = vld [vmem:[%s1 + $0x240] sm:$0xff]
  %v97 = vld [vmem:[%s1 + $0x248] sm:$0xff]
  %v98 = vld [vmem:[%s1 + $0x250] sm:$0xff]
  %v99 = vld [vmem:[%s1 + $0x258] sm:$0xff]
  %v100 = vld [vmem:[%s1 + $0x260] sm:$0xff]
  %v101 = vld [vmem:[%s1 + $0x268] sm:$0xff]
  %v102 = vld [vmem:[%s1 + $0x270] sm:$0xff]
  %v103 = vld [vmem:[%s1 + $0x278] sm:$0xff]
  %v104 = vld [vmem:[%s1 + $0x280] sm:$0xff]
  %vm105 = vcmask 261120
  %106 = vst.msk [vmem:[#allocation2] sm:$0xff] %vm105, 0.0
  %107 = vst.msk [vmem:[#allocation2 + $0x8] sm:$0xff] %vm105, 0.0
  %108 = vst.msk [vmem:[#allocation2 + $0x10] sm:$0xff] %vm105, 0.0
  %109 = vst.msk [vmem:[#allocation2 + $0x2a0] sm:$0xff] %vm105, 0.0
  %110 = vst.msk [vmem:[#allocation2 + $0x2a8] sm:$0xff] %vm105, 0.0
  %111 = vst.msk [vmem:[#allocation2 + $0x2b0] sm:$0xff] %vm105, 0.0
  %v112 = vld [vmem:[%s0] sm:$0xf]
  %v113 = vld [vmem:[%s0 + $0x4] sm:$0xf]
  %v114 = vld [vmem:[%s0 + $0x8] sm:$0xf]
  %v115 = vld [vmem:[%s0 + $0xc] sm:$0xf]
  %v116 = vld [vmem:[%s0 + $0x10] sm:$0xf]
  %v117 = vld [vmem:[%s0 + $0x14] sm:$0xf]
  %v118 = vld [vmem:[%s0 + $0x18] sm:$0xf]
  %v119 = vld [vmem:[%s0 + $0x1c] sm:$0xf]
  %v120 = vld [vmem:[%s0 + $0x20] sm:$0xf]
  %v121 = vld [vmem:[%s0 + $0x24] sm:$0xf]
  %v122 = vld [vmem:[%s0 + $0x28] sm:$0xf]
  %v123 = vld [vmem:[%s0 + $0x2c] sm:$0xf]
  %v124 = vld [vmem:[%s0 + $0x30] sm:$0xf]
  %v125 = vld [vmem:[%s0 + $0x34] sm:$0xf]
  %v126 = vld [vmem:[%s0 + $0x38] sm:$0xf]
  %v127 = vld [vmem:[%s0 + $0x3c] sm:$0xf]
  %v128 = vld [vmem:[%s0 + $0x40] sm:$0xf]
  %v129 = vld [vmem:[%s0 + $0x44] sm:$0xf]
  %v130 = vld [vmem:[%s0 + $0x48] sm:$0xf]
  %v131 = vld [vmem:[%s0 + $0x4c] sm:$0xf]
  %v132 = vld [vmem:[%s0 + $0x50] sm:$0xf]
  %v133 = vld [vmem:[%s0 + $0x54] sm:$0xf]
  %v134 = vld [vmem:[%s0 + $0x58] sm:$0xf]
  %v135 = vld [vmem:[%s0 + $0x5c] sm:$0xf]
  %v136 = vld [vmem:[%s0 + $0x60] sm:$0xf]
  %v137 = vld [vmem:[%s0 + $0x64] sm:$0xf]
  %v138 = vld [vmem:[%s0 + $0x68] sm:$0xf]
  %v139 = vld [vmem:[%s0 + $0x6c] sm:$0xf]
  %v140 = vld [vmem:[%s0 + $0x70] sm:$0xf]
  %v141 = vld [vmem:[%s0 + $0x74] sm:$0xf]
  %v142 = vld [vmem:[%s0 + $0x78] sm:$0xf]
  %v143 = vld [vmem:[%s0 + $0x7c] sm:$0xf]
  %v144 = vld [vmem:[%s0 + $0x80] sm:$0xf]
  %v145 = vld [vmem:[%s0 + $0x84] sm:$0xf]
  %v146 = vld [vmem:[%s0 + $0x88] sm:$0xf]
  %v147 = vld [vmem:[%s0 + $0x8c] sm:$0xf]
  %v148 = vld [vmem:[%s0 + $0x90] sm:$0xf]
  %v149 = vld [vmem:[%s0 + $0x94] sm:$0xf]
  %v150 = vld [vmem:[%s0 + $0x98] sm:$0xf]
  %v151 = vld [vmem:[%s0 + $0x9c] sm:$0xf]
  %v152 = vld [vmem:[%s0 + $0xa0] sm:$0xf]
  %v153 = vld [vmem:[%s0 + $0xa4] sm:$0xf]
  %v154 = vld [vmem:[%s0 + $0xa8] sm:$0xf]
  %v155 = vld [vmem:[%s0 + $0xac] sm:$0xf]
  %v156 = vld [vmem:[%s0 + $0xb0] sm:$0xf]
  %v157 = vld [vmem:[%s0 + $0xb4] sm:$0xf]
  %v158 = vld [vmem:[%s0 + $0xb8] sm:$0xf]
  %v159 = vld [vmem:[%s0 + $0xbc] sm:$0xf]
  %v160 = vld [vmem:[%s0 + $0xc0] sm:$0xf]
  %v161 = vld [vmem:[%s0 + $0xc4] sm:$0xf]
  %v162 = vld [vmem:[%s0 + $0xc8] sm:$0xf]
  %v163 = vld [vmem:[%s0 + $0xcc] sm:$0xf]
  %v164 = vld [vmem:[%s0 + $0xd0] sm:$0xf]
  %v165 = vld [vmem:[%s0 + $0xd4] sm:$0xf]
  %v166 = vld [vmem:[%s0 + $0xd8] sm:$0xf]
  %v167 = vld [vmem:[%s0 + $0xdc] sm:$0xf]
  %v168 = vld [vmem:[%s0 + $0xe0] sm:$0xf]
  %v169 = vld [vmem:[%s0 + $0xe4] sm:$0xf]
  %v170 = vld [vmem:[%s0 + $0xe8] sm:$0xf]
  %v171 = vld [vmem:[%s0 + $0xec] sm:$0xf]
  %v172 = vld [vmem:[%s0 + $0xf0] sm:$0xf]
  %v173 = vld [vmem:[%s0 + $0xf4] sm:$0xf]
  %v174 = vld [vmem:[%s0 + $0xf8] sm:$0xf]
  %v175 = vld [vmem:[%s0 + $0xfc] sm:$0xf]
  %v176 = vld [vmem:[%s0 + $0x100] sm:$0xf]
  %v177 = vld [vmem:[%s0 + $0x104] sm:$0xf]
  %v178 = vld [vmem:[%s0 + $0x108] sm:$0xf]
  %v179 = vld [vmem:[%s0 + $0x10c] sm:$0xf]
  %v180 = vld [vmem:[%s0 + $0x110] sm:$0xf]
  %v181 = vld [vmem:[%s0 + $0x114] sm:$0xf]
  %v182 = vld [vmem:[%s0 + $0x118] sm:$0xf]
  %v183 = vld [vmem:[%s0 + $0x11c] sm:$0xf]
  %v184 = vld [vmem:[%s0 + $0x120] sm:$0xf]
  %v185 = vld [vmem:[%s0 + $0x124] sm:$0xf]
  %v186 = vld [vmem:[%s0 + $0x128] sm:$0xf]
  %v187 = vld [vmem:[%s0 + $0x12c] sm:$0xf]
  %v188 = vld [vmem:[%s0 + $0x130] sm:$0xf]
  %v189 = vld [vmem:[%s0 + $0x134] sm:$0xf]
  %v190 = vld [vmem:[%s0 + $0x138] sm:$0xf]
  %v191 = vld [vmem:[%s0 + $0x13c] sm:$0xf]
  %v192 = vld [vmem:[%s0 + $0x140] sm:$0xf]
  %v193 = vld [vmem:[%s2] sm:$0xf]
  %v194 = vld [vmem:[%s2 + $0x4] sm:$0xf]
  %v195 = vld [vmem:[%s2 + $0x8] sm:$0xf]
  %v196 = vld [vmem:[%s2 + $0xc] sm:$0x3]
  %v197 = vld [vmem:[%s3] sm:$0x1]
  %v199 = vlaneseq
  %v200 = vshrl.u32 %v199, 7
  %v201 = vsub.s32 0, %v200
  %v202 = vrot.slane %v197, %v201
  %v285 = vunpack.c.l.b16 %v112
  %v286 = vunpack.c.l.b16 %v113
  %v287 = vunpack.c.l.b16 %v114
  %v288 = vunpack.c.l.b16 %v115
  %v289 = vunpack.c.l.b16 %v116
  %v290 = vunpack.c.l.b16 %v117
  %v291 = vunpack.c.l.b16 %v118
  %v292 = vunpack.c.l.b16 %v119
  %v293 = vunpack.c.l.b16 %v120
  %v294 = vunpack.c.l.b16 %v121
  %v295 = vunpack.c.l.b16 %v122
  %v296 = vunpack.c.l.b16 %v123
  %v297 = vunpack.c.l.b16 %v124
  %v298 = vunpack.c.l.b16 %v125
  %v299 = vunpack.c.l.b16 %v126
  %v300 = vunpack.c.l.b16 %v127
  %v301 = vunpack.c.l.b16 %v128
  %v302 = vunpack.c.l.b16 %v129
  %v303 = vunpack.c.l.b16 %v130
  %v304 = vunpack.c.l.b16 %v131
  %v305 = vunpack.c.l.b16 %v132
  %v306 = vunpack.c.l.b16 %v133
  %v307 = vunpack.c.l.b16 %v134
  %v308 = vunpack.c.l.b16 %v135
  %v309 = vunpack.c.l.b16 %v136
  %v310 = vunpack.c.l.b16 %v137
  %v311 = vunpack.c.l.b16 %v138
  %v312 = vunpack.c.l.b16 %v139
  %v313 = vunpack.c.l.b16 %v140
  %v314 = vunpack.c.l.b16 %v141
  %v315 = vunpack.c.l.b16 %v142
  %v316 = vunpack.c.l.b16 %v143
  %v317 = vunpack.c.l.b16 %v144
  %v318 = vunpack.c.l.b16 %v145
  %v319 = vunpack.c.l.b16 %v146
  %v320 = vunpack.c.l.b16 %v147
  %v321 = vunpack.c.l.b16 %v148
  %v322 = vunpack.c.l.b16 %v149
  %v323 = vunpack.c.l.b16 %v150
  %v324 = vunpack.c.l.b16 %v151
  %v325 = vunpack.c.l.b16 %v152
  %v326 = vunpack.c.l.b16 %v153
  %v327 = vunpack.c.l.b16 %v154
  %v328 = vunpack.c.l.b16 %v155
  %v329 = vunpack.c.l.b16 %v156
  %v330 = vunpack.c.l.b16 %v157
  %v331 = vunpack.c.l.b16 %v158
  %v332 = vunpack.c.l.b16 %v159
  %v333 = vunpack.c.l.b16 %v160
  %v334 = vunpack.c.l.b16 %v161
  %v335 = vunpack.c.l.b16 %v162
  %v336 = vunpack.c.l.b16 %v163
  %v337 = vunpack.c.l.b16 %v164
  %v338 = vunpack.c.l.b16 %v165
  %v339 = vunpack.c.l.b16 %v166
  %v340 = vunpack.c.l.b16 %v167
  %v341 = vunpack.c.l.b16 %v168
  %v342 = vunpack.c.l.b16 %v169
  %v343 = vunpack.c.l.b16 %v170
  %v344 = vunpack.c.l.b16 %v171
  %v345 = vunpack.c.l.b16 %v172
  %v346 = vunpack.c.l.b16 %v173
  %v347 = vunpack.c.l.b16 %v174
  %v348 = vunpack.c.l.b16 %v175
  %v349 = vunpack.c.l.b16 %v176
  %v350 = vunpack.c.l.b16 %v177
  %v351 = vunpack.c.l.b16 %v178
  %v352 = vunpack.c.l.b16 %v179
  %v353 = vunpack.c.l.b16 %v180
  %v354 = vunpack.c.l.b16 %v181
  %v355 = vunpack.c.l.b16 %v182
  %v356 = vunpack.c.l.b16 %v183
  %v357 = vunpack.c.l.b16 %v184
  %v358 = vunpack.c.l.b16 %v185
  %v359 = vunpack.c.l.b16 %v186
  %v360 = vunpack.c.l.b16 %v187
  %v361 = vunpack.c.l.b16 %v188
  %v362 = vunpack.c.l.b16 %v189
  %v363 = vunpack.c.l.b16 %v190
  %v364 = vunpack.c.l.b16 %v191
  %v365 = vunpack.c.l.b16 %v192
  %v366 = vpack.c.b16 %v286, %v285
  %v367 = vpack.c.b16 %v288, %v287
  %v368 = vpack.c.b16 %v290, %v289
  %v369 = vpack.c.b16 %v292, %v291
  %v370 = vpack.c.b16 %v294, %v293
  %v371 = vpack.c.b16 %v296, %v295
  %v372 = vpack.c.b16 %v298, %v297
  %v373 = vpack.c.b16 %v300, %v299
  %v374 = vpack.c.b16 %v302, %v301
  %v375 = vpack.c.b16 %v304, %v303
  %v376 = vpack.c.b16 %v306, %v305
  %v377 = vpack.c.b16 %v308, %v307
  %v378 = vpack.c.b16 %v310, %v309
  %v379 = vpack.c.b16 %v312, %v311
  %v380 = vpack.c.b16 %v314, %v313
  %v381 = vpack.c.b16 %v316, %v315
  %v382 = vpack.c.b16 %v318, %v317
  %v383 = vpack.c.b16 %v320, %v319
  %v384 = vpack.c.b16 %v322, %v321
  %v385 = vpack.c.b16 %v324, %v323
  %v386 = vpack.c.b16 %v326, %v325
  %v387 = vpack.c.b16 %v328, %v327
  %v388 = vpack.c.b16 %v330, %v329
  %v389 = vpack.c.b16 %v332, %v331
  %v390 = vpack.c.b16 %v334, %v333
  %v391 = vpack.c.b16 %v336, %v335
  %v392 = vpack.c.b16 %v338, %v337
  %v393 = vpack.c.b16 %v340, %v339
  %v394 = vpack.c.b16 %v342, %v341
  %v395 = vpack.c.b16 %v344, %v343
  %v396 = vpack.c.b16 %v346, %v345
  %v397 = vpack.c.b16 %v348, %v347
  %v398 = vpack.c.b16 %v350, %v349
  %v399 = vpack.c.b16 %v352, %v351
  %v400 = vpack.c.b16 %v354, %v353
  %v401 = vpack.c.b16 %v356, %v355
  %v402 = vpack.c.b16 %v358, %v357
  %v403 = vpack.c.b16 %v360, %v359
  %v404 = vpack.c.b16 %v362, %v361
  %v405 = vpack.c.b16 %v364, %v363
  %v406 = vpack.c.b16 %v365, %v365
  %v411 = vunpack.c.l.b16 %v193
  %v412 = vunpack.c.l.b16 %v194
  %v413 = vunpack.c.l.b16 %v195
  %v414 = vunpack.c.l.b16 %v196
  %v415 = vpack.c.b16 %v412, %v411
  %v416 = vpack.c.b16 %v414, %v413
  %vm418 = vcmask 220160
  %v420 = vsel %vm418, %v366, 0
  %v423 = vsel %vm418, %v367, 0
  %v426 = vsel %vm418, %v368, 0
  %v429 = vsel %vm418, %v369, 0
  %v432 = vsel %vm418, %v370, 0
  %v435 = vsel %vm418, %v371, 0
  %v438 = vsel %vm418, %v372, 0
  %v441 = vsel %vm418, %v373, 0
  %v444 = vsel %vm418, %v374, 0
  %v447 = vsel %vm418, %v375, 0
  %v450 = vsel %vm418, %v376, 0
  %v453 = vsel %vm418, %v377, 0
  %v456 = vsel %vm418, %v378, 0
  %v459 = vsel %vm418, %v379, 0
  %v462 = vsel %vm418, %v380, 0
  %v465 = vsel %vm418, %v381, 0
  %v468 = vsel %vm418, %v382, 0
  %v471 = vsel %vm418, %v383, 0
  %v474 = vsel %vm418, %v384, 0
  %v477 = vsel %vm418, %v385, 0
  %v480 = vsel %vm418, %v386, 0
  %v483 = vsel %vm418, %v387, 0
  %v486 = vsel %vm418, %v388, 0
  %v489 = vsel %vm418, %v389, 0
  %v492 = vsel %vm418, %v390, 0
  %v495 = vsel %vm418, %v391, 0
  %v498 = vsel %vm418, %v392, 0
  %v501 = vsel %vm418, %v393, 0
  %v504 = vsel %vm418, %v394, 0
  %v507 = vsel %vm418, %v395, 0
  %v510 = vsel %vm418, %v396, 0
  %v513 = vsel %vm418, %v397, 0
  %v516 = vsel %vm418, %v398, 0
  %v519 = vsel %vm418, %v399, 0
  %v522 = vsel %vm418, %v400, 0
  %v525 = vsel %vm418, %v401, 0
  %v528 = vsel %vm418, %v402, 0
  %v531 = vsel %vm418, %v403, 0
  %v534 = vsel %vm418, %v404, 0
  %v537 = vsel %vm418, %v405, 0
  %v540 = vsel %vm418, %v406, 0
  %vm542 = vcmask 1044480
  %vm543 = vcmask 1045504
  %v544 = vsel %vm542, 4294967295, 65535
  %v545 = vsel %vm543, %v544, 0
  %v547 = vand.u32 %v416, %v545
  %549 = vmatprep.subr.bf16.mxu0 0
  %550 = vmatpush1.bf16.msra.mxu0 %v415
  %551 = vmatprep.subr.bf16.mxu0 0
  %552 = vmatpush1.bf16.msra.mxu0 %v547
  %553 = vmatprep.subr.bf16.mxu0 0
  %554 = vmatpush1.bf16.msra.mxu0 0
  %555 = vmatprep.subr.bf16.mxu0 0
  %556 = vmatpush1.bf16.msra.mxu0 0
  %557 = vmatprep.subr.bf16.mxu0 0
  %558 = vmatpush1.bf16.msra.mxu0 0
  %559 = vmatprep.subr.bf16.mxu0 0
  %560 = vmatpush1.bf16.msra.mxu0 0
  %561 = vmatprep.subr.bf16.mxu0 0
  %562 = vmatpush1.bf16.msra.mxu0 0
  %563 = vmatprep.subr.bf16.mxu0 0
  %564 = vmatpush1.bf16.msra.mxu0 0
  %565 = vmatprep.subr.bf16.mxu0 0
  %566 = vmatpush1.bf16.msra.mxu0 0
  %567 = vmatprep.subr.bf16.mxu0 0
  %568 = vmatpush1.bf16.msra.mxu0 0
  %569 = vmatprep.subr.bf16.mxu0 0
  %570 = vmatpush1.bf16.msra.mxu0 0
  %571 = vmatprep.subr.bf16.mxu0 0
  %572 = vmatpush1.bf16.msra.mxu0 0
  %573 = vmatprep.subr.bf16.mxu0 0
  %574 = vmatpush1.bf16.msra.mxu0 0
  %575 = vmatprep.subr.bf16.mxu0 0
  %576 = vmatpush1.bf16.msra.mxu0 0
  %577 = vmatprep.subr.bf16.mxu0 0
  %578 = vmatpush1.bf16.msra.mxu0 0
  %579 = vmatprep.subr.bf16.mxu0 0
  %580 = vmatpush1.bf16.msra.mxu0 0
  %581 = vmatprep.mubr.bf16.mxu0 0
  %582 = vmatmul.mubr.bf16.gmra.mrb[0].mxu0 %v420
  %v583 = vpop.f32.mrb[0].mxu0
  %v584 = vadd.f32 %v202, %v583
  %v585 = vpop.f32.mrb[0].mxu0
  %v586 = vpop.f32.mrb[0].mxu0
  %v587 = vadd.f32 %v202, %v586
  %v588 = vpop.f32.mrb[0].mxu0
  %589 = vmatprep.mubr.bf16.mxu0 0
  %590 = vmatmul.mubr.bf16.gmra.mrb[0].mxu0 %v423
  %v591 = vpop.f32.mrb[0].mxu0
  %v592 = vadd.f32 %v202, %v591
  %v593 = vpop.f32.mrb[0].mxu0
  %v594 = vpop.f32.mrb[0].mxu0
  %v595 = vadd.f32 %v202, %v594
  %v596 = vpop.f32.mrb[0].mxu0
  %597 = vmatprep.mubr.bf16.mxu0 0
  %598 = vmatmul.mubr.bf16.gmra.mrb[0].mxu0 %v426
  %v599 = vpop.f32.mrb[0].mxu0
  %v600 = vadd.f32 %v202, %v599
  %v601 = vpop.f32.mrb[0].mxu0
  %v602 = vpop.f32.mrb[0].mxu0
  %v603 = vadd.f32 %v202, %v602
  %v604 = vpop.f32.mrb[0].mxu0
  %605 = vmatprep.mubr.bf16.mxu0 0
  %606 = vmatmul.mubr.bf16.gmra.mrb[0].mxu0 %v429
  %v607 = vpop.f32.mrb[0].mxu0
  %v608 = vadd.f32 %v202, %v607
  %v609 = vpop.f32.mrb[0].mxu0
  %v610 = vpop.f32.mrb[0].mxu0
  %v611 = vadd.f32 %v202, %v610
  %v612 = vpop.f32.mrb[0].mxu0
  %613 = vmatprep.mubr.bf16.mxu0 0
  %614 = vmatmul.mubr.bf16.gmra.mrb[0].mxu0 %v432
  %v615 = vpop.f32.mrb[0].mxu0
  %v616 = vadd.f32 %v202, %v615
  %v617 = vpop.f32.mrb[0].mxu0
  %v618 = vpop.f32.mrb[0].mxu0
  %v619 = vadd.f32 %v202, %v618
  %v620 = vpop.f32.mrb[0].mxu0
  %621 = vmatprep.mubr.bf16.mxu0 0
  %622 = vmatmul.mubr.bf16.gmra.mrb[0].mxu0 %v435
  %v623 = vpop.f32.mrb[0].mxu0
  %v624 = vadd.f32 %v202, %v623
  %v625 = vpop.f32.mrb[0].mxu0
  %v626 = vpop.f32.mrb[0].mxu0
  %v627 = vadd.f32 %v202, %v626
  %v628 = vpop.f32.mrb[0].mxu0
  %629 = vmatprep.mubr.bf16.mxu0 0
  %630 = vmatmul.mubr.bf16.gmra.mrb[0].mxu0 %v438
  %v631 = vpop.f32.mrb[0].mxu0
  %v632 = vadd.f32 %v202, %v631
  %v633 = vpop.f32.mrb[0].mxu0
  %v634 = vpop.f32.mrb[0].mxu0
  %v635 = vadd.f32 %v202, %v634
  %v636 = vpop.f32.mrb[0].mxu0
  %637 = vmatprep.mubr.bf16.mxu0 0
  %638 = vmatmul.mubr.bf16.gmra.mrb[0].mxu0 %v441
  %v639 = vpop.f32.mrb[0].mxu0
  %v640 = vadd.f32 %v202, %v639
  %v641 = vpop.f32.mrb[0].mxu0
  %v642 = vpop.f32.mrb[0].mxu0
  %v643 = vadd.f32 %v202, %v642
  %v644 = vpop.f32.mrb[0].mxu0
  %645 = vmatprep.mubr.bf16.mxu0 0
  %646 = vmatmul.mubr.bf16.gmra.mrb[0].mxu0 %v444
  %v647 = vpop.f32.mrb[0].mxu0
  %v648 = vadd.f32 %v202, %v647
  %v649 = vpop.f32.mrb[0].mxu0
  %v650 = vpop.f32.mrb[0].mxu0
  %v651 = vadd.f32 %v202, %v650
  %v652 = vpop.f32.mrb[0].mxu0
  %653 = vmatprep.mubr.bf16.mxu0 0
  %654 = vmatmul.mubr.bf16.gmra.mrb[0].mxu0 %v447
  %v655 = vpop.f32.mrb[0].mxu0
  %v656 = vadd.f32 %v202, %v655
  %v657 = vpop.f32.mrb[0].mxu0
  %v658 = vpop.f32.mrb[0].mxu0
  %v659 = vadd.f32 %v202, %v658
  %v660 = vpop.f32.mrb[0].mxu0
  %661 = vmatprep.mubr.bf16.mxu0 0
  %662 = vmatmul.mubr.bf16.gmra.mrb[0].mxu0 %v450
  %v663 = vpop.f32.mrb[0].mxu0
  %v664 = vadd.f32 %v202, %v663
  %v665 = vpop.f32.mrb[0].mxu0
  %v666 = vpop.f32.mrb[0].mxu0
  %v667 = vadd.f32 %v202, %v666
  %v668 = vpop.f32.mrb[0].mxu0
  %669 = vmatprep.mubr.bf16.mxu0 0
  %670 = vmatmul.mubr.bf16.gmra.mrb[0].mxu0 %v453
  %v671 = vpop.f32.mrb[0].mxu0
  %v672 = vadd.f32 %v202, %v671
  %v673 = vpop.f32.mrb[0].mxu0
  %v674 = vpop.f32.mrb[0].mxu0
  %v675 = vadd.f32 %v202, %v674
  %v676 = vpop.f32.mrb[0].mxu0
  %677 = vmatprep.mubr.bf16.mxu0 0
  %678 = vmatmul.mubr.bf16.gmra.mrb[0].mxu0 %v456
  %v679 = vpop.f32.mrb[0].mxu0
  %v680 = vadd.f32 %v202, %v679
  %v681 = vpop.f32.mrb[0].mxu0
  %v682 = vpop.f32.mrb[0].mxu0
  %v683 = vadd.f32 %v202, %v682
  %v684 = vpop.f32.mrb[0].mxu0
  %685 = vmatprep.mubr.bf16.mxu0 0
  %686 = vmatmul.mubr.bf16.gmra.mrb[0].mxu0 %v459
  %v687 = vpop.f32.mrb[0].mxu0
  %v688 = vadd.f32 %v202, %v687
  %v689 = vpop.f32.mrb[0].mxu0
  %v690 = vpop.f32.mrb[0].mxu0
  %v691 = vadd.f32 %v202, %v690
  %v692 = vpop.f32.mrb[0].mxu0
  %693 = vmatprep.mubr.bf16.mxu0 0
  %694 = vmatmul.mubr.bf16.gmra.mrb[0].mxu0 %v462
  %v695 = vpop.f32.mrb[0].mxu0
  %v696 = vadd.f32 %v202, %v695
  %v697 = vpop.f32.mrb[0].mxu0
  %v698 = vpop.f32.mrb[0].mxu0
  %v699 = vadd.f32 %v202, %v698
  %v700 = vpop.f32.mrb[0].mxu0
  %701 = vmatprep.mubr.bf16.mxu0 0
  %702 = vmatmul.mubr.bf16.gmra.mrb[0].mxu0 %v465
  %v703 = vpop.f32.mrb[0].mxu0
  %v704 = vadd.f32 %v202, %v703
  %v705 = vpop.f32.mrb[0].mxu0
  %v706 = vpop.f32.mrb[0].mxu0
  %v707 = vadd.f32 %v202, %v706
  %v708 = vpop.f32.mrb[0].mxu0
  %709 = vmatprep.mubr.bf16.mxu0 0
  %710 = vmatmul.mubr.bf16.gmra.mrb[0].mxu0 %v468
  %v711 = vpop.f32.mrb[0].mxu0
  %v712 = vadd.f32 %v202, %v711
  %v713 = vpop.f32.mrb[0].mxu0
  %v714 = vpop.f32.mrb[0].mxu0
  %v715 = vadd.f32 %v202, %v714
  %v716 = vpop.f32.mrb[0].mxu0
  %717 = vmatprep.mubr.bf16.mxu0 0
  %718 = vmatmul.mubr.bf16.gmra.mrb[0].mxu0 %v471
  %v719 = vpop.f32.mrb[0].mxu0
  %v720 = vadd.f32 %v202, %v719
  %v721 = vpop.f32.mrb[0].mxu0
  %v722 = vpop.f32.mrb[0].mxu0
  %v723 = vadd.f32 %v202, %v722
  %v724 = vpop.f32.mrb[0].mxu0
  %725 = vmatprep.mubr.bf16.mxu0 0
  %726 = vmatmul.mubr.bf16.gmra.mrb[0].mxu0 %v474
  %v727 = vpop.f32.mrb[0].mxu0
  %v728 = vadd.f32 %v202, %v727
  %v729 = vpop.f32.mrb[0].mxu0
  %v730 = vpop.f32.mrb[0].mxu0
  %v731 = vadd.f32 %v202, %v730
  %v732 = vpop.f32.mrb[0].mxu0
  %733 = vmatprep.mubr.bf16.mxu0 0
  %734 = vmatmul.mubr.bf16.gmra.mrb[0].mxu0 %v477
  %v735 = vpop.f32.mrb[0].mxu0
  %v736 = vadd.f32 %v202, %v735
  %v737 = vpop.f32.mrb[0].mxu0
  %v738 = vpop.f32.mrb[0].mxu0
  %v739 = vadd.f32 %v202, %v738
  %v740 = vpop.f32.mrb[0].mxu0
  %741 = vmatprep.mubr.bf16.mxu0 0
  %742 = vmatmul.mubr.bf16.gmra.mrb[0].mxu0 %v480
  %v743 = vpop.f32.mrb[0].mxu0
  %v744 = vadd.f32 %v202, %v743
  %v745 = vpop.f32.mrb[0].mxu0
  %v746 = vpop.f32.mrb[0].mxu0
  %v747 = vadd.f32 %v202, %v746
  %v748 = vpop.f32.mrb[0].mxu0
  %749 = vmatprep.mubr.bf16.mxu0 0
  %750 = vmatmul.mubr.bf16.gmra.mrb[0].mxu0 %v483
  %v751 = vpop.f32.mrb[0].mxu0
  %v752 = vadd.f32 %v202, %v751
  %v753 = vpop.f32.mrb[0].mxu0
  %v754 = vpop.f32.mrb[0].mxu0
  %v755 = vadd.f32 %v202, %v754
  %v756 = vpop.f32.mrb[0].mxu0
  %757 = vmatprep.mubr.bf16.mxu0 0
  %758 = vmatmul.mubr.bf16.gmra.mrb[0].mxu0 %v486
  %v759 = vpop.f32.mrb[0].mxu0
  %v760 = vadd.f32 %v202, %v759
  %v761 = vpop.f32.mrb[0].mxu0
  %v762 = vpop.f32.mrb[0].mxu0
  %v763 = vadd.f32 %v202, %v762
  %v764 = vpop.f32.mrb[0].mxu0
  %765 = vmatprep.mubr.bf16.mxu0 0
  %766 = vmatmul.mubr.bf16.gmra.mrb[0].mxu0 %v489
  %v767 = vpop.f32.mrb[0].mxu0
  %v768 = vadd.f32 %v202, %v767
  %v769 = vpop.f32.mrb[0].mxu0
  %v770 = vpop.f32.mrb[0].mxu0
  %v771 = vadd.f32 %v202, %v770
  %v772 = vpop.f32.mrb[0].mxu0
  %773 = vmatprep.mubr.bf16.mxu0 0
  %774 = vmatmul.mubr.bf16.gmra.mrb[0].mxu0 %v492
  %v775 = vpop.f32.mrb[0].mxu0
  %v776 = vadd.f32 %v202, %v775
  %v777 = vpop.f32.mrb[0].mxu0
  %v778 = vpop.f32.mrb[0].mxu0
  %v779 = vadd.f32 %v202, %v778
  %v780 = vpop.f32.mrb[0].mxu0
  %781 = vmatprep.mubr.bf16.mxu0 0
  %782 = vmatmul.mubr.bf16.gmra.mrb[0].mxu0 %v495
  %v783 = vpop.f32.mrb[0].mxu0
  %v784 = vadd.f32 %v202, %v783
  %v785 = vpop.f32.mrb[0].mxu0
  %v786 = vpop.f32.mrb[0].mxu0
  %v787 = vadd.f32 %v202, %v786
  %v788 = vpop.f32.mrb[0].mxu0
  %789 = vmatprep.mubr.bf16.mxu0 0
  %790 = vmatmul.mubr.bf16.gmra.mrb[0].mxu0 %v498
  %v791 = vpop.f32.mrb[0].mxu0
  %v792 = vadd.f32 %v202, %v791
  %v793 = vpop.f32.mrb[0].mxu0
  %v794 = vpop.f32.mrb[0].mxu0
  %v795 = vadd.f32 %v202, %v794
  %v796 = vpop.f32.mrb[0].mxu0
  %797 = vmatprep.mubr.bf16.mxu0 0
  %798 = vmatmul.mubr.bf16.gmra.mrb[0].mxu0 %v501
  %v799 = vpop.f32.mrb[0].mxu0
  %v800 = vadd.f32 %v202, %v799
  %v801 = vpop.f32.mrb[0].mxu0
  %v802 = vpop.f32.mrb[0].mxu0
  %v803 = vadd.f32 %v202, %v802
  %v804 = vpop.f32.mrb[0].mxu0
  %805 = vmatprep.mubr.bf16.mxu0 0
  %806 = vmatmul.mubr.bf16.gmra.mrb[0].mxu0 %v504
  %v807 = vpop.f32.mrb[0].mxu0
  %v808 = vadd.f32 %v202, %v807
  %v809 = vpop.f32.mrb[0].mxu0
  %v810 = vpop.f32.mrb[0].mxu0
  %v811 = vadd.f32 %v202, %v810
  %v812 = vpop.f32.mrb[0].mxu0
  %813 = vmatprep.mubr.bf16.mxu0 0
  %814 = vmatmul.mubr.bf16.gmra.mrb[0].mxu0 %v507
  %v815 = vpop.f32.mrb[0].mxu0
  %v816 = vadd.f32 %v202, %v815
  %v817 = vpop.f32.mrb[0].mxu0
  %v818 = vpop.f32.mrb[0].mxu0
  %v819 = vadd.f32 %v202, %v818
  %v820 = vpop.f32.mrb[0].mxu0
  %821 = vmatprep.mubr.bf16.mxu0 0
  %822 = vmatmul.mubr.bf16.gmra.mrb[0].mxu0 %v510
  %v823 = vpop.f32.mrb[0].mxu0
  %v824 = vadd.f32 %v202, %v823
  %v825 = vpop.f32.mrb[0].mxu0
  %v826 = vpop.f32.mrb[0].mxu0
  %v827 = vadd.f32 %v202, %v826
  %v828 = vpop.f32.mrb[0].mxu0
  %829 = vmatprep.mubr.bf16.mxu0 0
  %830 = vmatmul.mubr.bf16.gmra.mrb[0].mxu0 %v513
  %v831 = vpop.f32.mrb[0].mxu0
  %v832 = vadd.f32 %v202, %v831
  %v833 = vpop.f32.mrb[0].mxu0
  %v834 = vpop.f32.mrb[0].mxu0
  %v835 = vadd.f32 %v202, %v834
  %v836 = vpop.f32.mrb[0].mxu0
  %837 = vmatprep.mubr.bf16.mxu0 0
  %838 = vmatmul.mubr.bf16.gmra.mrb[0].mxu0 %v516
  %v839 = vpop.f32.mrb[0].mxu0
  %v840 = vadd.f32 %v202, %v839
  %v841 = vpop.f32.mrb[0].mxu0
  %v842 = vpop.f32.mrb[0].mxu0
  %v843 = vadd.f32 %v202, %v842
  %v844 = vpop.f32.mrb[0].mxu0
  %845 = vmatprep.mubr.bf16.mxu0 0
  %846 = vmatmul.mubr.bf16.gmra.mrb[0].mxu0 %v519
  %v847 = vpop.f32.mrb[0].mxu0
  %v848 = vadd.f32 %v202, %v847
  %v849 = vpop.f32.mrb[0].mxu0
  %v850 = vpop.f32.mrb[0].mxu0
  %v851 = vadd.f32 %v202, %v850
  %v852 = vpop.f32.mrb[0].mxu0
  %853 = vmatprep.mubr.bf16.mxu0 0
  %854 = vmatmul.mubr.bf16.gmra.mrb[0].mxu0 %v522
  %v855 = vpop.f32.mrb[0].mxu0
  %v856 = vadd.f32 %v202, %v855
  %v857 = vpop.f32.mrb[0].mxu0
  %v858 = vpop.f32.mrb[0].mxu0
  %v859 = vadd.f32 %v202, %v858
  %v860 = vpop.f32.mrb[0].mxu0
  %861 = vmatprep.mubr.bf16.mxu0 0
  %862 = vmatmul.mubr.bf16.gmra.mrb[0].mxu0 %v525
  %v863 = vpop.f32.mrb[0].mxu0
  %v864 = vadd.f32 %v202, %v863
  %v865 = vpop.f32.mrb[0].mxu0
  %v866 = vpop.f32.mrb[0].mxu0
  %v867 = vadd.f32 %v202, %v866
  %v868 = vpop.f32.mrb[0].mxu0
  %869 = vmatprep.mubr.bf16.mxu0 0
  %870 = vmatmul.mubr.bf16.gmra.mrb[0].mxu0 %v528
  %v871 = vpop.f32.mrb[0].mxu0
  %v872 = vadd.f32 %v202, %v871
  %v873 = vpop.f32.mrb[0].mxu0
  %v874 = vpop.f32.mrb[0].mxu0
  %v875 = vadd.f32 %v202, %v874
  %v876 = vpop.f32.mrb[0].mxu0
  %877 = vmatprep.mubr.bf16.mxu0 0
  %878 = vmatmul.mubr.bf16.gmra.mrb[0].mxu0 %v531
  %v879 = vpop.f32.mrb[0].mxu0
  %v880 = vadd.f32 %v202, %v879
  %v881 = vpop.f32.mrb[0].mxu0
  %v882 = vpop.f32.mrb[0].mxu0
  %v883 = vadd.f32 %v202, %v882
  %v884 = vpop.f32.mrb[0].mxu0
  %885 = vmatprep.mubr.bf16.mxu0 0
  %886 = vmatmul.mubr.bf16.gmra.mrb[0].mxu0 %v534
  %v887 = vpop.f32.mrb[0].mxu0
  %v888 = vadd.f32 %v202, %v887
  %v889 = vpop.f32.mrb[0].mxu0
  %v890 = vpop.f32.mrb[0].mxu0
  %v891 = vadd.f32 %v202, %v890
  %v892 = vpop.f32.mrb[0].mxu0
  %893 = vmatprep.mubr.bf16.mxu0 0
  %894 = vmatmul.mubr.bf16.gmra.mrb[0].mxu0 %v537
  %v895 = vpop.f32.mrb[0].mxu0
  %v896 = vadd.f32 %v202, %v895
  %v897 = vpop.f32.mrb[0].mxu0
  %v898 = vpop.f32.mrb[0].mxu0
  %v899 = vadd.f32 %v202, %v898
  %v900 = vpop.f32.mrb[0].mxu0
  %901 = vmatprep.mubr.bf16.mxu0 0
  %902 = vmatmul.mubr.bf16.gmra.mrb[0].mxu0 %v540
  %v903 = vpop.f32.mrb[0].mxu0
  %v904 = vadd.f32 %v202, %v903
  %v905 = vpop.f32.mrb[0].mxu0
  %v906 = vpop.f32.mrb[0].mxu0
  %v907 = vpop.f32.mrb[0].mxu0
  %908 = vdwg.mxu0
  %vm909 = vcmp.ge.f32.partialorder %v584, 0.0
  %vm910 = vcmp.ge.f32.partialorder %v587, 0.0
  %vm911 = vcmp.ge.f32.partialorder %v592, 0.0
  %vm912 = vcmp.ge.f32.partialorder %v595, 0.0
  %vm913 = vcmp.ge.f32.partialorder %v600, 0.0
  %vm914 = vcmp.ge.f32.partialorder %v603, 0.0
  %vm915 = vcmp.ge.f32.partialorder %v608, 0.0
  %vm916 = vcmp.ge.f32.partialorder %v611, 0.0
  %vm917 = vcmp.ge.f32.partialorder %v616, 0.0
  %vm918 = vcmp.ge.f32.partialorder %v619, 0.0
  %vm919 = vcmp.ge.f32.partialorder %v624, 0.0
  %vm920 = vcmp.ge.f32.partialorder %v627, 0.0
  %vm921 = vcmp.ge.f32.partialorder %v632, 0.0
  %vm922 = vcmp.ge.f32.partialorder %v635, 0.0
  %vm923 = vcmp.ge.f32.partialorder %v640, 0.0
  %vm924 = vcmp.ge.f32.partialorder %v643, 0.0
  %vm925 = vcmp.ge.f32.partialorder %v648, 0.0
  %vm926 = vcmp.ge.f32.partialorder %v651, 0.0
  %vm927 = vcmp.ge.f32.partialorder %v656, 0.0
  %vm928 = vcmp.ge.f32.partialorder %v659, 0.0
  %vm929 = vcmp.ge.f32.partialorder %v664, 0.0
  %vm930 = vcmp.ge.f32.partialorder %v667, 0.0
  %vm931 = vcmp.ge.f32.partialorder %v672, 0.0
  %vm932 = vcmp.ge.f32.partialorder %v675, 0.0
  %vm933 = vcmp.ge.f32.partialorder %v680, 0.0
  %vm934 = vcmp.ge.f32.partialorder %v683, 0.0
  %vm935 = vcmp.ge.f32.partialorder %v688, 0.0
  %vm936 = vcmp.ge.f32.partialorder %v691, 0.0
  %vm937 = vcmp.ge.f32.partialorder %v696, 0.0
  %vm938 = vcmp.ge.f32.partialorder %v699, 0.0
  %vm939 = vcmp.ge.f32.partialorder %v704, 0.0
  %vm940 = vcmp.ge.f32.partialorder %v707, 0.0
  %vm941 = vcmp.ge.f32.partialorder %v712, 0.0
  %vm942 = vcmp.ge.f32.partialorder %v715, 0.0
  %vm943 = vcmp.ge.f32.partialorder %v720, 0.0
  %vm944 = vcmp.ge.f32.partialorder %v723, 0.0
  %vm945 = vcmp.ge.f32.partialorder %v728, 0.0
  %vm946 = vcmp.ge.f32.partialorder %v731, 0.0
  %vm947 = vcmp.ge.f32.partialorder %v736, 0.0
  %vm948 = vcmp.ge.f32.partialorder %v739, 0.0
  %vm949 = vcmp.ge.f32.partialorder %v744, 0.0
  %vm950 = vcmp.ge.f32.partialorder %v747, 0.0
  %vm951 = vcmp.ge.f32.partialorder %v752, 0.0
  %vm952 = vcmp.ge.f32.partialorder %v755, 0.0
  %vm953 = vcmp.ge.f32.partialorder %v760, 0.0
  %vm954 = vcmp.ge.f32.partialorder %v763, 0.0
  %vm955 = vcmp.ge.f32.partialorder %v768, 0.0
  %vm956 = vcmp.ge.f32.partialorder %v771, 0.0
  %vm957 = vcmp.ge.f32.partialorder %v776, 0.0
  %vm958 = vcmp.ge.f32.partialorder %v779, 0.0
  %vm959 = vcmp.ge.f32.partialorder %v784, 0.0
  %vm960 = vcmp.ge.f32.partialorder %v787, 0.0
  %vm961 = vcmp.ge.f32.partialorder %v792, 0.0
  %vm962 = vcmp.ge.f32.partialorder %v795, 0.0
  %vm963 = vcmp.ge.f32.partialorder %v800, 0.0
  %vm964 = vcmp.ge.f32.partialorder %v803, 0.0
  %vm965 = vcmp.ge.f32.partialorder %v808, 0.0
  %vm966 = vcmp.ge.f32.partialorder %v811, 0.0
  %vm967 = vcmp.ge.f32.partialorder %v816, 0.0
  %vm968 = vcmp.ge.f32.partialorder %v819, 0.0
  %vm969 = vcmp.ge.f32.partialorder %v824, 0.0
  %vm970 = vcmp.ge.f32.partialorder %v827, 0.0
  %vm971 = vcmp.ge.f32.partialorder %v832, 0.0
  %vm972 = vcmp.ge.f32.partialorder %v835, 0.0
  %vm973 = vcmp.ge.f32.partialorder %v840, 0.0
  %vm974 = vcmp.ge.f32.partialorder %v843, 0.0
  %vm975 = vcmp.ge.f32.partialorder %v848, 0.0
  %vm976 = vcmp.ge.f32.partialorder %v851, 0.0
  %vm977 = vcmp.ge.f32.partialorder %v856, 0.0
  %vm978 = vcmp.ge.f32.partialorder %v859, 0.0
  %vm979 = vcmp.ge.f32.partialorder %v864, 0.0
  %vm980 = vcmp.ge.f32.partialorder %v867, 0.0
  %vm981 = vcmp.ge.f32.partialorder %v872, 0.0
  %vm982 = vcmp.ge.f32.partialorder %v875, 0.0
  %vm983 = vcmp.ge.f32.partialorder %v880, 0.0
  %vm984 = vcmp.ge.f32.partialorder %v883, 0.0
  %vm985 = vcmp.ge.f32.partialorder %v888, 0.0
  %vm986 = vcmp.ge.f32.partialorder %v891, 0.0
  %vm987 = vcmp.ge.f32.partialorder %v896, 0.0
  %vm988 = vcmp.ge.f32.partialorder %v899, 0.0
  %vm989 = vcmp.ge.f32.partialorder %v904, 0.0
  %v990 = vmul.f32 %v584, 0.2
  %v991 = vmul.f32 %v587, 0.2
  %v992 = vmul.f32 %v592, 0.2
  %v993 = vmul.f32 %v595, 0.2
  %v994 = vmul.f32 %v600, 0.2
  %v995 = vmul.f32 %v603, 0.2
  %v996 = vmul.f32 %v608, 0.2
  %v997 = vmul.f32 %v611, 0.2
  %v998 = vmul.f32 %v616, 0.2
  %v999 = vmul.f32 %v619, 0.2
  %v1000 = vmul.f32 %v624, 0.2
  %v1001 = vmul.f32 %v627, 0.2
  %v1002 = vmul.f32 %v632, 0.2
  %v1003 = vmul.f32 %v635, 0.2
  %v1004 = vmul.f32 %v640, 0.2
  %v1005 = vmul.f32 %v643, 0.2
  %v1006 = vmul.f32 %v648, 0.2
  %v1007 = vmul.f32 %v651, 0.2
  %v1008 = vmul.f32 %v656, 0.2
  %v1009 = vmul.f32 %v659, 0.2
  %v1010 = vmul.f32 %v664, 0.2
  %v1011 = vmul.f32 %v667, 0.2
  %v1012 = vmul.f32 %v672, 0.2
  %v1013 = vmul.f32 %v675, 0.2
  %v1014 = vmul.f32 %v680, 0.2
  %v1015 = vmul.f32 %v683, 0.2
  %v1016 = vmul.f32 %v688, 0.2
  %v1017 = vmul.f32 %v691, 0.2
  %v1018 = vmul.f32 %v696, 0.2
  %v1019 = vmul.f32 %v699, 0.2
  %v1020 = vmul.f32 %v704, 0.2
  %v1021 = vmul.f32 %v707, 0.2
  %v1022 = vmul.f32 %v712, 0.2
  %v1023 = vmul.f32 %v715, 0.2
  %v1024 = vmul.f32 %v720, 0.2
  %v1025 = vmul.f32 %v723, 0.2
  %v1026 = vmul.f32 %v728, 0.2
  %v1027 = vmul.f32 %v731, 0.2
  %v1028 = vmul.f32 %v736, 0.2
  %v1029 = vmul.f32 %v739, 0.2
  %v1030 = vmul.f32 %v744, 0.2
  %v1031 = vmul.f32 %v747, 0.2
  %v1032 = vmul.f32 %v752, 0.2
  %v1033 = vmul.f32 %v755, 0.2
  %v1034 = vmul.f32 %v760, 0.2
  %v1035 = vmul.f32 %v763, 0.2
  %v1036 = vmul.f32 %v768, 0.2
  %v1037 = vmul.f32 %v771, 0.2
  %v1038 = vmul.f32 %v776, 0.2
  %v1039 = vmul.f32 %v779, 0.2
  %v1040 = vmul.f32 %v784, 0.2
  %v1041 = vmul.f32 %v787, 0.2
  %v1042 = vmul.f32 %v792, 0.2
  %v1043 = vmul.f32 %v795, 0.2
  %v1044 = vmul.f32 %v800, 0.2
  %v1045 = vmul.f32 %v803, 0.2
  %v1046 = vmul.f32 %v808, 0.2
  %v1047 = vmul.f32 %v811, 0.2
  %v1048 = vmul.f32 %v816, 0.2
  %v1049 = vmul.f32 %v819, 0.2
  %v1050 = vmul.f32 %v824, 0.2
  %v1051 = vmul.f32 %v827, 0.2
  %v1052 = vmul.f32 %v832, 0.2
  %v1053 = vmul.f32 %v835, 0.2
  %v1054 = vmul.f32 %v840, 0.2
  %v1055 = vmul.f32 %v843, 0.2
  %v1056 = vmul.f32 %v848, 0.2
  %v1057 = vmul.f32 %v851, 0.2
  %v1058 = vmul.f32 %v856, 0.2
  %v1059 = vmul.f32 %v859, 0.2
  %v1060 = vmul.f32 %v864, 0.2
  %v1061 = vmul.f32 %v867, 0.2
  %v1062 = vmul.f32 %v872, 0.2
  %v1063 = vmul.f32 %v875, 0.2
  %v1064 = vmul.f32 %v880, 0.2
  %v1065 = vmul.f32 %v883, 0.2
  %v1066 = vmul.f32 %v888, 0.2
  %v1067 = vmul.f32 %v891, 0.2
  %v1068 = vmul.f32 %v896, 0.2
  %v1069 = vmul.f32 %v899, 0.2
  %v1070 = vmul.f32 %v904, 0.2
  %v1071 = vsel %vm909, %v584, %v990
  %v1072 = vsel %vm910, %v587, %v991
  %v1073 = vsel %vm911, %v592, %v992
  %v1074 = vsel %vm912, %v595, %v993
  %v1075 = vsel %vm913, %v600, %v994
  %v1076 = vsel %vm914, %v603, %v995
  %v1077 = vsel %vm915, %v608, %v996
  %v1078 = vsel %vm916, %v611, %v997
  %v1079 = vsel %vm917, %v616, %v998
  %v1080 = vsel %vm918, %v619, %v999
  %v1081 = vsel %vm919, %v624, %v1000
  %v1082 = vsel %vm920, %v627, %v1001
  %v1083 = vsel %vm921, %v632, %v1002
  %v1084 = vsel %vm922, %v635, %v1003
  %v1085 = vsel %vm923, %v640, %v1004
  %v1086 = vsel %vm924, %v643, %v1005
  %v1087 = vsel %vm925, %v648, %v1006
  %v1088 = vsel %vm926, %v651, %v1007
  %v1089 = vsel %vm927, %v656, %v1008
  %v1090 = vsel %vm928, %v659, %v1009
  %v1091 = vsel %vm929, %v664, %v1010
  %v1092 = vsel %vm930, %v667, %v1011
  %v1093 = vsel %vm931, %v672, %v1012
  %v1094 = vsel %vm932, %v675, %v1013
  %v1095 = vsel %vm933, %v680, %v1014
  %v1096 = vsel %vm934, %v683, %v1015
  %v1097 = vsel %vm935, %v688, %v1016
  %v1098 = vsel %vm936, %v691, %v1017
  %v1099 = vsel %vm937, %v696, %v1018
  %v1100 = vsel %vm938, %v699, %v1019
  %v1101 = vsel %vm939, %v704, %v1020
  %v1102 = vsel %vm940, %v707, %v1021
  %v1103 = vsel %vm941, %v712, %v1022
  %v1104 = vsel %vm942, %v715, %v1023
  %v1105 = vsel %vm943, %v720, %v1024
  %v1106 = vsel %vm944, %v723, %v1025
  %v1107 = vsel %vm945, %v728, %v1026
  %v1108 = vsel %vm946, %v731, %v1027
  %v1109 = vsel %vm947, %v736, %v1028
  %v1110 = vsel %vm948, %v739, %v1029
  %v1111 = vsel %vm949, %v744, %v1030
  %v1112 = vsel %vm950, %v747, %v1031
  %v1113 = vsel %vm951, %v752, %v1032
  %v1114 = vsel %vm952, %v755, %v1033
  %v1115 = vsel %vm953, %v760, %v1034
  %v1116 = vsel %vm954, %v763, %v1035
  %v1117 = vsel %vm955, %v768, %v1036
  %v1118 = vsel %vm956, %v771, %v1037
  %v1119 = vsel %vm957, %v776, %v1038
  %v1120 = vsel %vm958, %v779, %v1039
  %v1121 = vsel %vm959, %v784, %v1040
  %v1122 = vsel %vm960, %v787, %v1041
  %v1123 = vsel %vm961, %v792, %v1042
  %v1124 = vsel %vm962, %v795, %v1043
  %v1125 = vsel %vm963, %v800, %v1044
  %v1126 = vsel %vm964, %v803, %v1045
  %v1127 = vsel %vm965, %v808, %v1046
  %v1128 = vsel %vm966, %v811, %v1047
  %v1129 = vsel %vm967, %v816, %v1048
  %v1130 = vsel %vm968, %v819, %v1049
  %v1131 = vsel %vm969, %v824, %v1050
  %v1132 = vsel %vm970, %v827, %v1051
  %v1133 = vsel %vm971, %v832, %v1052
  %v1134 = vsel %vm972, %v835, %v1053
  %v1135 = vsel %vm973, %v840, %v1054
  %v1136 = vsel %vm974, %v843, %v1055
  %v1137 = vsel %vm975, %v848, %v1056
  %v1138 = vsel %vm976, %v851, %v1057
  %v1139 = vsel %vm977, %v856, %v1058
  %v1140 = vsel %vm978, %v859, %v1059
  %v1141 = vsel %vm979, %v864, %v1060
  %v1142 = vsel %vm980, %v867, %v1061
  %v1143 = vsel %vm981, %v872, %v1062
  %v1144 = vsel %vm982, %v875, %v1063
  %v1145 = vsel %vm983, %v880, %v1064
  %v1146 = vsel %vm984, %v883, %v1065
  %v1147 = vsel %vm985, %v888, %v1066
  %v1148 = vsel %vm986, %v891, %v1067
  %v1149 = vsel %vm987, %v896, %v1068
  %v1150 = vsel %vm988, %v899, %v1069
  %v1151 = vsel %vm989, %v904, %v1070
  %1153 = vset.pattern.permute.xlu0 0
  %1154 = vperm.xlu0 %1153, %v24
  %v1155 = vpop.permute.xlu0 %1154
  %1158 = vset.pattern.permute.xlu0 0
  %1159 = vperm.xlu0 %1158, %v25
  %v1160 = vpop.permute.xlu0 %1159
  %1163 = vset.pattern.permute.xlu0 0
  %1164 = vperm.xlu0 %1163, %v26
  %v1165 = vpop.permute.xlu0 %1164
  %1168 = vset.pattern.permute.xlu0 0
  %1169 = vperm.xlu0 %1168, %v27
  %v1170 = vpop.permute.xlu0 %1169
  %1173 = vset.pattern.permute.xlu0 0
  %1174 = vperm.xlu0 %1173, %v28
  %v1175 = vpop.permute.xlu0 %1174
  %1178 = vset.pattern.permute.xlu0 0
  %1179 = vperm.xlu0 %1178, %v29
  %v1180 = vpop.permute.xlu0 %1179
  %1183 = vset.pattern.permute.xlu0 0
  %1184 = vperm.xlu0 %1183, %v30
  %v1185 = vpop.permute.xlu0 %1184
  %1188 = vset.pattern.permute.xlu0 0
  %1189 = vperm.xlu0 %1188, %v31
  %v1190 = vpop.permute.xlu0 %1189
  %1193 = vset.pattern.permute.xlu0 0
  %1194 = vperm.xlu0 %1193, %v32
  %v1195 = vpop.permute.xlu0 %1194
  %1198 = vset.pattern.permute.xlu0 0
  %1199 = vperm.xlu0 %1198, %v33
  %v1200 = vpop.permute.xlu0 %1199
  %1203 = vset.pattern.permute.xlu0 0
  %1204 = vperm.xlu0 %1203, %v34
  %v1205 = vpop.permute.xlu0 %1204
  %1208 = vset.pattern.permute.xlu0 0
  %1209 = vperm.xlu0 %1208, %v35
  %v1210 = vpop.permute.xlu0 %1209
  %1213 = vset.pattern.permute.xlu0 0
  %1214 = vperm.xlu0 %1213, %v36
  %v1215 = vpop.permute.xlu0 %1214
  %1218 = vset.pattern.permute.xlu0 0
  %1219 = vperm.xlu0 %1218, %v37
  %v1220 = vpop.permute.xlu0 %1219
  %1223 = vset.pattern.permute.xlu0 0
  %1224 = vperm.xlu0 %1223, %v38
  %v1225 = vpop.permute.xlu0 %1224
  %1228 = vset.pattern.permute.xlu0 0
  %1229 = vperm.xlu0 %1228, %v39
  %v1230 = vpop.permute.xlu0 %1229
  %1233 = vset.pattern.permute.xlu0 0
  %1234 = vperm.xlu0 %1233, %v40
  %v1235 = vpop.permute.xlu0 %1234
  %1238 = vset.pattern.permute.xlu0 0
  %1239 = vperm.xlu0 %1238, %v41
  %v1240 = vpop.permute.xlu0 %1239
  %1243 = vset.pattern.permute.xlu0 0
  %1244 = vperm.xlu0 %1243, %v42
  %v1245 = vpop.permute.xlu0 %1244
  %1248 = vset.pattern.permute.xlu0 0
  %1249 = vperm.xlu0 %1248, %v43
  %v1250 = vpop.permute.xlu0 %1249
  %1253 = vset.pattern.permute.xlu0 0
  %1254 = vperm.xlu0 %1253, %v44
  %v1255 = vpop.permute.xlu0 %1254
  %1258 = vset.pattern.permute.xlu0 0
  %1259 = vperm.xlu0 %1258, %v45
  %v1260 = vpop.permute.xlu0 %1259
  %1263 = vset.pattern.permute.xlu0 0
  %1264 = vperm.xlu0 %1263, %v46
  %v1265 = vpop.permute.xlu0 %1264
  %1268 = vset.pattern.permute.xlu0 0
  %1269 = vperm.xlu0 %1268, %v47
  %v1270 = vpop.permute.xlu0 %1269
  %1273 = vset.pattern.permute.xlu0 0
  %1274 = vperm.xlu0 %1273, %v48
  %v1275 = vpop.permute.xlu0 %1274
  %1278 = vset.pattern.permute.xlu0 0
  %1279 = vperm.xlu0 %1278, %v49
  %v1280 = vpop.permute.xlu0 %1279
  %1283 = vset.pattern.permute.xlu0 0
  %1284 = vperm.xlu0 %1283, %v50
  %v1285 = vpop.permute.xlu0 %1284
  %1288 = vset.pattern.permute.xlu0 0
  %1289 = vperm.xlu0 %1288, %v51
  %v1290 = vpop.permute.xlu0 %1289
  %1293 = vset.pattern.permute.xlu0 0
  %1294 = vperm.xlu0 %1293, %v52
  %v1295 = vpop.permute.xlu0 %1294
  %1298 = vset.pattern.permute.xlu0 0
  %1299 = vperm.xlu0 %1298, %v53
  %v1300 = vpop.permute.xlu0 %1299
  %1303 = vset.pattern.permute.xlu0 0
  %1304 = vperm.xlu0 %1303, %v54
  %v1305 = vpop.permute.xlu0 %1304
  %1308 = vset.pattern.permute.xlu0 0
  %1309 = vperm.xlu0 %1308, %v55
  %v1310 = vpop.permute.xlu0 %1309
  %1313 = vset.pattern.permute.xlu0 0
  %1314 = vperm.xlu0 %1313, %v56
  %v1315 = vpop.permute.xlu0 %1314
  %1318 = vset.pattern.permute.xlu0 0
  %1319 = vperm.xlu0 %1318, %v57
  %v1320 = vpop.permute.xlu0 %1319
  %1323 = vset.pattern.permute.xlu0 0
  %1324 = vperm.xlu0 %1323, %v58
  %v1325 = vpop.permute.xlu0 %1324
  %1328 = vset.pattern.permute.xlu0 0
  %1329 = vperm.xlu0 %1328, %v59
  %v1330 = vpop.permute.xlu0 %1329
  %1333 = vset.pattern.permute.xlu0 0
  %1334 = vperm.xlu0 %1333, %v60
  %v1335 = vpop.permute.xlu0 %1334
  %1338 = vset.pattern.permute.xlu0 0
  %1339 = vperm.xlu0 %1338, %v61
  %v1340 = vpop.permute.xlu0 %1339
  %1343 = vset.pattern.permute.xlu0 0
  %1344 = vperm.xlu0 %1343, %v62
  %v1345 = vpop.permute.xlu0 %1344
  %1348 = vset.pattern.permute.xlu0 0
  %1349 = vperm.xlu0 %1348, %v63
  %v1350 = vpop.permute.xlu0 %1349
  %1353 = vset.pattern.permute.xlu0 0
  %1354 = vperm.xlu0 %1353, %v64
  %v1355 = vpop.permute.xlu0 %1354
  %1358 = vset.pattern.permute.xlu0 0
  %1359 = vperm.xlu0 %1358, %v65
  %v1360 = vpop.permute.xlu0 %1359
  %1363 = vset.pattern.permute.xlu0 0
  %1364 = vperm.xlu0 %1363, %v66
  %v1365 = vpop.permute.xlu0 %1364
  %1368 = vset.pattern.permute.xlu0 0
  %1369 = vperm.xlu0 %1368, %v67
  %v1370 = vpop.permute.xlu0 %1369
  %1373 = vset.pattern.permute.xlu0 0
  %1374 = vperm.xlu0 %1373, %v68
  %v1375 = vpop.permute.xlu0 %1374
  %1378 = vset.pattern.permute.xlu0 0
  %1379 = vperm.xlu0 %1378, %v69
  %v1380 = vpop.permute.xlu0 %1379
  %1383 = vset.pattern.permute.xlu0 0
  %1384 = vperm.xlu0 %1383, %v70
  %v1385 = vpop.permute.xlu0 %1384
  %1388 = vset.pattern.permute.xlu0 0
  %1389 = vperm.xlu0 %1388, %v71
  %v1390 = vpop.permute.xlu0 %1389
  %1393 = vset.pattern.permute.xlu0 0
  %1394 = vperm.xlu0 %1393, %v72
  %v1395 = vpop.permute.xlu0 %1394
  %1398 = vset.pattern.permute.xlu0 0
  %1399 = vperm.xlu0 %1398, %v73
  %v1400 = vpop.permute.xlu0 %1399
  %1403 = vset.pattern.permute.xlu0 0
  %1404 = vperm.xlu0 %1403, %v74
  %v1405 = vpop.permute.xlu0 %1404
  %1408 = vset.pattern.permute.xlu0 0
  %1409 = vperm.xlu0 %1408, %v75
  %v1410 = vpop.permute.xlu0 %1409
  %1413 = vset.pattern.permute.xlu0 0
  %1414 = vperm.xlu0 %1413, %v76
  %v1415 = vpop.permute.xlu0 %1414
  %1418 = vset.pattern.permute.xlu0 0
  %1419 = vperm.xlu0 %1418, %v77
  %v1420 = vpop.permute.xlu0 %1419
  %1423 = vset.pattern.permute.xlu0 0
  %1424 = vperm.xlu0 %1423, %v78
  %v1425 = vpop.permute.xlu0 %1424
  %1428 = vset.pattern.permute.xlu0 0
  %1429 = vperm.xlu0 %1428, %v79
  %v1430 = vpop.permute.xlu0 %1429
  %1433 = vset.pattern.permute.xlu0 0
  %1434 = vperm.xlu0 %1433, %v80
  %v1435 = vpop.permute.xlu0 %1434
  %1438 = vset.pattern.permute.xlu0 0
  %1439 = vperm.xlu0 %1438, %v81
  %v1440 = vpop.permute.xlu0 %1439
  %1443 = vset.pattern.permute.xlu0 0
  %1444 = vperm.xlu0 %1443, %v82
  %v1445 = vpop.permute.xlu0 %1444
  %1448 = vset.pattern.permute.xlu0 0
  %1449 = vperm.xlu0 %1448, %v83
  %v1450 = vpop.permute.xlu0 %1449
  %1453 = vset.pattern.permute.xlu0 0
  %1454 = vperm.xlu0 %1453, %v84
  %v1455 = vpop.permute.xlu0 %1454
  %1458 = vset.pattern.permute.xlu0 0
  %1459 = vperm.xlu0 %1458, %v85
  %v1460 = vpop.permute.xlu0 %1459
  %1463 = vset.pattern.permute.xlu0 0
  %1464 = vperm.xlu0 %1463, %v86
  %v1465 = vpop.permute.xlu0 %1464
  %1468 = vset.pattern.permute.xlu0 0
  %1469 = vperm.xlu0 %1468, %v87
  %v1470 = vpop.permute.xlu0 %1469
  %1473 = vset.pattern.permute.xlu0 0
  %1474 = vperm.xlu0 %1473, %v88
  %v1475 = vpop.permute.xlu0 %1474
  %1478 = vset.pattern.permute.xlu0 0
  %1479 = vperm.xlu0 %1478, %v89
  %v1480 = vpop.permute.xlu0 %1479
  %1483 = vset.pattern.permute.xlu0 0
  %1484 = vperm.xlu0 %1483, %v90
  %v1485 = vpop.permute.xlu0 %1484
  %1488 = vset.pattern.permute.xlu0 0
  %1489 = vperm.xlu0 %1488, %v91
  %v1490 = vpop.permute.xlu0 %1489
  %1493 = vset.pattern.permute.xlu0 0
  %1494 = vperm.xlu0 %1493, %v92
  %v1495 = vpop.permute.xlu0 %1494
  %1498 = vset.pattern.permute.xlu0 0
  %1499 = vperm.xlu0 %1498, %v93
  %v1500 = vpop.permute.xlu0 %1499
  %1503 = vset.pattern.permute.xlu0 0
  %1504 = vperm.xlu0 %1503, %v94
  %v1505 = vpop.permute.xlu0 %1504
  %1508 = vset.pattern.permute.xlu0 0
  %1509 = vperm.xlu0 %1508, %v95
  %v1510 = vpop.permute.xlu0 %1509
  %1513 = vset.pattern.permute.xlu0 0
  %1514 = vperm.xlu0 %1513, %v96
  %v1515 = vpop.permute.xlu0 %1514
  %1518 = vset.pattern.permute.xlu0 0
  %1519 = vperm.xlu0 %1518, %v97
  %v1520 = vpop.permute.xlu0 %1519
  %1523 = vset.pattern.permute.xlu0 0
  %1524 = vperm.xlu0 %1523, %v98
  %v1525 = vpop.permute.xlu0 %1524
  %1528 = vset.pattern.permute.xlu0 0
  %1529 = vperm.xlu0 %1528, %v99
  %v1530 = vpop.permute.xlu0 %1529
  %1533 = vset.pattern.permute.xlu0 0
  %1534 = vperm.xlu0 %1533, %v100
  %v1535 = vpop.permute.xlu0 %1534
  %1538 = vset.pattern.permute.xlu0 0
  %1539 = vperm.xlu0 %1538, %v101
  %v1540 = vpop.permute.xlu0 %1539
  %1543 = vset.pattern.permute.xlu0 0
  %1544 = vperm.xlu0 %1543, %v102
  %v1545 = vpop.permute.xlu0 %1544
  %1548 = vset.pattern.permute.xlu0 0
  %1549 = vperm.xlu0 %1548, %v103
  %v1550 = vpop.permute.xlu0 %1549
  %1553 = vset.pattern.permute.xlu0 0
  %1554 = vperm.xlu0 %1553, %v104
  %v1555 = vpop.permute.xlu0 %1554
  %v1557 = vmul.f32 %v1071, %v1155
  %v1558 = vmul.f32 %v1072, %v1160
  %v1559 = vmul.f32 %v1073, %v1165
  %v1560 = vmul.f32 %v1074, %v1170
  %v1561 = vmul.f32 %v1075, %v1175
  %v1562 = vmul.f32 %v1076, %v1180
  %v1563 = vmul.f32 %v1077, %v1185
  %v1564 = vmul.f32 %v1078, %v1190
  %v1565 = vmul.f32 %v1079, %v1195
  %v1566 = vmul.f32 %v1080, %v1200
  %v1567 = vmul.f32 %v1081, %v1205
  %v1568 = vmul.f32 %v1082, %v1210
  %v1569 = vmul.f32 %v1083, %v1215
  %v1570 = vmul.f32 %v1084, %v1220
  %v1571 = vmul.f32 %v1085, %v1225
  %v1572 = vmul.f32 %v1086, %v1230
  %v1573 = vmul.f32 %v1087, %v1235
  %v1574 = vmul.f32 %v1088, %v1240
  %v1575 = vmul.f32 %v1089, %v1245
  %v1576 = vmul.f32 %v1090, %v1250
  %v1577 = vmul.f32 %v1091, %v1255
  %v1578 = vmul.f32 %v1092, %v1260
  %v1579 = vmul.f32 %v1093, %v1265
  %v1580 = vmul.f32 %v1094, %v1270
  %v1581 = vmul.f32 %v1095, %v1275
  %v1582 = vmul.f32 %v1096, %v1280
  %v1583 = vmul.f32 %v1097, %v1285
  %v1584 = vmul.f32 %v1098, %v1290
  %v1585 = vmul.f32 %v1099, %v1295
  %v1586 = vmul.f32 %v1100, %v1300
  %v1587 = vmul.f32 %v1101, %v1305
  %v1588 = vmul.f32 %v1102, %v1310
  %v1589 = vmul.f32 %v1103, %v1315
  %v1590 = vmul.f32 %v1104, %v1320
  %v1591 = vmul.f32 %v1105, %v1325
  %v1592 = vmul.f32 %v1106, %v1330
  %v1593 = vmul.f32 %v1107, %v1335
  %v1594 = vmul.f32 %v1108, %v1340
  %v1595 = vmul.f32 %v1109, %v1345
  %v1596 = vmul.f32 %v1110, %v1350
  %v1597 = vmul.f32 %v1111, %v1355
  %v1598 = vmul.f32 %v1112, %v1360
  %v1599 = vmul.f32 %v1113, %v1365
  %v1600 = vmul.f32 %v1114, %v1370
  %v1601 = vmul.f32 %v1115, %v1375
  %v1602 = vmul.f32 %v1116, %v1380
  %v1603 = vmul.f32 %v1117, %v1385
  %v1604 = vmul.f32 %v1118, %v1390
  %v1605 = vmul.f32 %v1119, %v1395
  %v1606 = vmul.f32 %v1120, %v1400
  %v1607 = vmul.f32 %v1121, %v1405
  %v1608 = vmul.f32 %v1122, %v1410
  %v1609 = vmul.f32 %v1123, %v1415
  %v1610 = vmul.f32 %v1124, %v1420
  %v1611 = vmul.f32 %v1125, %v1425
  %v1612 = vmul.f32 %v1126, %v1430
  %v1613 = vmul.f32 %v1127, %v1435
  %v1614 = vmul.f32 %v1128, %v1440
  %v1615 = vmul.f32 %v1129, %v1445
  %v1616 = vmul.f32 %v1130, %v1450
  %v1617 = vmul.f32 %v1131, %v1455
  %v1618 = vmul.f32 %v1132, %v1460
  %v1619 = vmul.f32 %v1133, %v1465
  %v1620 = vmul.f32 %v1134, %v1470
  %v1621 = vmul.f32 %v1135, %v1475
  %v1622 = vmul.f32 %v1136, %v1480
  %v1623 = vmul.f32 %v1137, %v1485
  %v1624 = vmul.f32 %v1138, %v1490
  %v1625 = vmul.f32 %v1139, %v1495
  %v1626 = vmul.f32 %v1140, %v1500
  %v1627 = vmul.f32 %v1141, %v1505
  %v1628 = vmul.f32 %v1142, %v1510
  %v1629 = vmul.f32 %v1143, %v1515
  %v1630 = vmul.f32 %v1144, %v1520
  %v1631 = vmul.f32 %v1145, %v1525
  %v1632 = vmul.f32 %v1146, %v1530
  %v1633 = vmul.f32 %v1147, %v1535
  %v1634 = vmul.f32 %v1148, %v1540
  %v1635 = vmul.f32 %v1149, %v1545
  %v1636 = vmul.f32 %v1150, %v1550
  %v1637 = vmul.f32 %v1151, %v1555
  %1638 = vst.msk [vmem:[#allocation2 + $0x18] sm:$0xff] %vm105, %v1557
  %1639 = vst.msk [vmem:[#allocation2 + $0x20] sm:$0xff] %vm105, %v1558
  %1640 = vst.msk [vmem:[#allocation2 + $0x28] sm:$0xff] %vm105, %v1559
  %1641 = vst.msk [vmem:[#allocation2 + $0x30] sm:$0xff] %vm105, %v1560
  %1642 = vst.msk [vmem:[#allocation2 + $0x38] sm:$0xff] %vm105, %v1561
  %1643 = vst.msk [vmem:[#allocation2 + $0x40] sm:$0xff] %vm105, %v1562
  %1644 = vst.msk [vmem:[#allocation2 + $0x48] sm:$0xff] %vm105, %v1563
  %1645 = vst.msk [vmem:[#allocation2 + $0x50] sm:$0xff] %vm105, %v1564
  %1646 = vst.msk [vmem:[#allocation2 + $0x58] sm:$0xff] %vm105, %v1565
  %1647 = vst.msk [vmem:[#allocation2 + $0x60] sm:$0xff] %vm105, %v1566
  %1648 = vst.msk [vmem:[#allocation2 + $0x68] sm:$0xff] %vm105, %v1567
  %1649 = vst.msk [vmem:[#allocation2 + $0x70] sm:$0xff] %vm105, %v1568
  %1650 = vst.msk [vmem:[#allocation2 + $0x78] sm:$0xff] %vm105, %v1569
  %1651 = vst.msk [vmem:[#allocation2 + $0x80] sm:$0xff] %vm105, %v1570
  %1652 = vst.msk [vmem:[#allocation2 + $0x88] sm:$0xff] %vm105, %v1571
  %1653 = vst.msk [vmem:[#allocation2 + $0x90] sm:$0xff] %vm105, %v1572
  %1654 = vst.msk [vmem:[#allocation2 + $0x98] sm:$0xff] %vm105, %v1573
  %1655 = vst.msk [vmem:[#allocation2 + $0xa0] sm:$0xff] %vm105, %v1574
  %1656 = vst.msk [vmem:[#allocation2 + $0xa8] sm:$0xff] %vm105, %v1575
  %1657 = vst.msk [vmem:[#allocation2 + $0xb0] sm:$0xff] %vm105, %v1576
  %1658 = vst.msk [vmem:[#allocation2 + $0xb8] sm:$0xff] %vm105, %v1577
  %1659 = vst.msk [vmem:[#allocation2 + $0xc0] sm:$0xff] %vm105, %v1578
  %1660 = vst.msk [vmem:[#allocation2 + $0xc8] sm:$0xff] %vm105, %v1579
  %1661 = vst.msk [vmem:[#allocation2 + $0xd0] sm:$0xff] %vm105, %v1580
  %1662 = vst.msk [vmem:[#allocation2 + $0xd8] sm:$0xff] %vm105, %v1581
  %1663 = vst.msk [vmem:[#allocation2 + $0xe0] sm:$0xff] %vm105, %v1582
  %1664 = vst.msk [vmem:[#allocation2 + $0xe8] sm:$0xff] %vm105, %v1583
  %1665 = vst.msk [vmem:[#allocation2 + $0xf0] sm:$0xff] %vm105, %v1584
  %1666 = vst.msk [vmem:[#allocation2 + $0xf8] sm:$0xff] %vm105, %v1585
  %1667 = vst.msk [vmem:[#allocation2 + $0x100] sm:$0xff] %vm105, %v1586
  %1668 = vst.msk [vmem:[#allocation2 + $0x108] sm:$0xff] %vm105, %v1587
  %1669 = vst.msk [vmem:[#allocation2 + $0x110] sm:$0xff] %vm105, %v1588
  %1670 = vst.msk [vmem:[#allocation2 + $0x118] sm:$0xff] %vm105, %v1589
  %1671 = vst.msk [vmem:[#allocation2 + $0x120] sm:$0xff] %vm105, %v1590
  %1672 = vst.msk [vmem:[#allocation2 + $0x128] sm:$0xff] %vm105, %v1591
  %1673 = vst.msk [vmem:[#allocation2 + $0x130] sm:$0xff] %vm105, %v1592
  %1674 = vst.msk [vmem:[#allocation2 + $0x138] sm:$0xff] %vm105, %v1593
  %1675 = vst.msk [vmem:[#allocation2 + $0x140] sm:$0xff] %vm105, %v1594
  %1676 = vst.msk [vmem:[#allocation2 + $0x148] sm:$0xff] %vm105, %v1595
  %1677 = vst.msk [vmem:[#allocation2 + $0x150] sm:$0xff] %vm105, %v1596
  %1678 = vst.msk [vmem:[#allocation2 + $0x158] sm:$0xff] %vm105, %v1597
  %1679 = vst.msk [vmem:[#allocation2 + $0x160] sm:$0xff] %vm105, %v1598
  %1680 = vst.msk [vmem:[#allocation2 + $0x168] sm:$0xff] %vm105, %v1599
  %1681 = vst.msk [vmem:[#allocation2 + $0x170] sm:$0xff] %vm105, %v1600
  %1682 = vst.msk [vmem:[#allocation2 + $0x178] sm:$0xff] %vm105, %v1601
  %1683 = vst.msk [vmem:[#allocation2 + $0x180] sm:$0xff] %vm105, %v1602
  %1684 = vst.msk [vmem:[#allocation2 + $0x188] sm:$0xff] %vm105, %v1603
  %1685 = vst.msk [vmem:[#allocation2 + $0x190] sm:$0xff] %vm105, %v1604
  %1686 = vst.msk [vmem:[#allocation2 + $0x198] sm:$0xff] %vm105, %v1605
  %1687 = vst.msk [vmem:[#allocation2 + $0x1a0] sm:$0xff] %vm105, %v1606
  %1688 = vst.msk [vmem:[#allocation2 + $0x1a8] sm:$0xff] %vm105, %v1607
  %1689 = vst.msk [vmem:[#allocation2 + $0x1b0] sm:$0xff] %vm105, %v1608
  %1690 = vst.msk [vmem:[#allocation2 + $0x1b8] sm:$0xff] %vm105, %v1609
  %1691 = vst.msk [vmem:[#allocation2 + $0x1c0] sm:$0xff] %vm105, %v1610
  %1692 = vst.msk [vmem:[#allocation2 + $0x1c8] sm:$0xff] %vm105, %v1611
  %1693 = vst.msk [vmem:[#allocation2 + $0x1d0] sm:$0xff] %vm105, %v1612
  %1694 = vst.msk [vmem:[#allocation2 + $0x1d8] sm:$0xff] %vm105, %v1613
  %1695 = vst.msk [vmem:[#allocation2 + $0x1e0] sm:$0xff] %vm105, %v1614
  %1696 = vst.msk [vmem:[#allocation2 + $0x1e8] sm:$0xff] %vm105, %v1615
  %1697 = vst.msk [vmem:[#allocation2 + $0x1f0] sm:$0xff] %vm105, %v1616
  %1698 = vst.msk [vmem:[#allocation2 + $0x1f8] sm:$0xff] %vm105, %v1617
  %1699 = vst.msk [vmem:[#allocation2 + $0x200] sm:$0xff] %vm105, %v1618
  %1700 = vst.msk [vmem:[#allocation2 + $0x208] sm:$0xff] %vm105, %v1619
  %1701 = vst.msk [vmem:[#allocation2 + $0x210] sm:$0xff] %vm105, %v1620
  %1702 = vst.msk [vmem:[#allocation2 + $0x218] sm:$0xff] %vm105, %v1621
  %1703 = vst.msk [vmem:[#allocation2 + $0x220] sm:$0xff] %vm105, %v1622
  %1704 = vst.msk [vmem:[#allocation2 + $0x228] sm:$0xff] %vm105, %v1623
  %1705 = vst.msk [vmem:[#allocation2 + $0x230] sm:$0xff] %vm105, %v1624
  %1706 = vst.msk [vmem:[#allocation2 + $0x238] sm:$0xff] %vm105, %v1625
  %1707 = vst.msk [vmem:[#allocation2 + $0x240] sm:$0xff] %vm105, %v1626
  %1708 = vst.msk [vmem:[#allocation2 + $0x248] sm:$0xff] %vm105, %v1627
  %1709 = vst.msk [vmem:[#allocation2 + $0x250] sm:$0xff] %vm105, %v1628
  %1710 = vst.msk [vmem:[#allocation2 + $0x258] sm:$0xff] %vm105, %v1629
  %1711 = vst.msk [vmem:[#allocation2 + $0x260] sm:$0xff] %vm105, %v1630
  %1712 = vst.msk [vmem:[#allocation2 + $0x268] sm:$0xff] %vm105, %v1631
  %1713 = vst.msk [vmem:[#allocation2 + $0x270] sm:$0xff] %vm105, %v1632
  %1714 = vst.msk [vmem:[#allocation2 + $0x278] sm:$0xff] %vm105, %v1633
  %1715 = vst.msk [vmem:[#allocation2 + $0x280] sm:$0xff] %vm105, %v1634
  %1716 = vst.msk [vmem:[#allocation2 + $0x288] sm:$0xff] %vm105, %v1635
  %1717 = vst.msk [vmem:[#allocation2 + $0x290] sm:$0xff] %vm105, %v1636
  %1718 = vst.msk [vmem:[#allocation2 + $0x298] sm:$0xff] %vm105, %v1637
  %v1719 = vld [vmem:[#allocation2 + $0x5] sm:$0xff]
  %v1720 = vld [vmem:[#allocation2 + $0xd] sm:$0xff]
  %v1721 = vld [vmem:[#allocation2 + $0x15] sm:$0xff]
  %v1722 = vld [vmem:[#allocation2 + $0x1d] sm:$0xff]
  %v1723 = vld [vmem:[#allocation2 + $0x25] sm:$0xff]
  %v1724 = vld [vmem:[#allocation2 + $0x2d] sm:$0xff]
  %v1725 = vld [vmem:[#allocation2 + $0x35] sm:$0xff]
  %v1726 = vld [vmem:[#allocation2 + $0x3d] sm:$0xff]
  %v1727 = vld [vmem:[#allocation2 + $0x45] sm:$0xff]
  %v1728 = vld [vmem:[#allocation2 + $0x4d] sm:$0xff]
  %v1729 = vld [vmem:[#allocation2 + $0x55] sm:$0xff]
  %v1730 = vld [vmem:[#allocation2 + $0x5d] sm:$0xff]
  %v1731 = vld [vmem:[#allocation2 + $0x65] sm:$0xff]
  %v1732 = vld [vmem:[#allocation2 + $0x6d] sm:$0xff]
  %v1733 = vld [vmem:[#allocation2 + $0x75] sm:$0xff]
  %v1734 = vld [vmem:[#allocation2 + $0x7d] sm:$0xff]
  %v1735 = vld [vmem:[#allocation2 + $0x85] sm:$0xff]
  %v1736 = vld [vmem:[#allocation2 + $0x8d] sm:$0xff]
  %v1737 = vld [vmem:[#allocation2 + $0x95] sm:$0xff]
  %v1738 = vld [vmem:[#allocation2 + $0x9d] sm:$0xff]
  %v1739 = vld [vmem:[#allocation2 + $0xa5] sm:$0xff]
  %v1740 = vld [vmem:[#allocation2 + $0xad] sm:$0xff]
  %v1741 = vld [vmem:[#allocation2 + $0xb5] sm:$0xff]
  %v1742 = vld [vmem:[#allocation2 + $0xbd] sm:$0xff]
  %v1743 = vld [vmem:[#allocation2 + $0xc5] sm:$0xff]
  %v1744 = vld [vmem:[#allocation2 + $0xcd] sm:$0xff]
  %v1745 = vld [vmem:[#allocation2 + $0xd5] sm:$0xff]
  %v1746 = vld [vmem:[#allocation2 + $0xdd] sm:$0xff]
  %v1747 = vld [vmem:[#allocation2 + $0xe5] sm:$0xff]
  %v1748 = vld [vmem:[#allocation2 + $0xed] sm:$0xff]
  %v1749 = vld [vmem:[#allocation2 + $0xf5] sm:$0xff]
  %v1750 = vld [vmem:[#allocation2 + $0xfd] sm:$0xff]
  %v1751 = vld [vmem:[#allocation2 + $0x105] sm:$0xff]
  %v1752 = vld [vmem:[#allocation2 + $0x10d] sm:$0xff]
  %v1753 = vld [vmem:[#allocation2 + $0x115] sm:$0xff]
  %v1754 = vld [vmem:[#allocation2 + $0x11d] sm:$0xff]
  %v1755 = vld [vmem:[#allocation2 + $0x125] sm:$0xff]
  %v1756 = vld [vmem:[#allocation2 + $0x12d] sm:$0xff]
  %v1757 = vld [vmem:[#allocation2 + $0x135] sm:$0xff]
  %v1758 = vld [vmem:[#allocation2 + $0x13d] sm:$0xff]
  %v1759 = vld [vmem:[#allocation2 + $0x145] sm:$0xff]
  %v1760 = vld [vmem:[#allocation2 + $0x14d] sm:$0xff]
  %v1761 = vld [vmem:[#allocation2 + $0x155] sm:$0xff]
  %v1762 = vld [vmem:[#allocation2 + $0x15d] sm:$0xff]
  %v1763 = vld [vmem:[#allocation2 + $0x165] sm:$0xff]
  %v1764 = vld [vmem:[#allocation2 + $0x16d] sm:$0xff]
  %v1765 = vld [vmem:[#allocation2 + $0x175] sm:$0xff]
  %v1766 = vld [vmem:[#allocation2 + $0x17d] sm:$0xff]
  %v1767 = vld [vmem:[#allocation2 + $0x185] sm:$0xff]
  %v1768 = vld [vmem:[#allocation2 + $0x18d] sm:$0xff]
  %v1769 = vld [vmem:[#allocation2 + $0x195] sm:$0xff]
  %v1770 = vld [vmem:[#allocation2 + $0x19d] sm:$0xff]
  %v1771 = vld [vmem:[#allocation2 + $0x1a5] sm:$0xff]
  %v1772 = vld [vmem:[#allocation2 + $0x1ad] sm:$0xff]
  %v1773 = vld [vmem:[#allocation2 + $0x1b5] sm:$0xff]
  %v1774 = vld [vmem:[#allocation2 + $0x1bd] sm:$0xff]
  %v1775 = vld [vmem:[#allocation2 + $0x1c5] sm:$0xff]
  %v1776 = vld [vmem:[#allocation2 + $0x1cd] sm:$0xff]
  %v1777 = vld [vmem:[#allocation2 + $0x1d5] sm:$0xff]
  %v1778 = vld [vmem:[#allocation2 + $0x1dd] sm:$0xff]
  %v1779 = vld [vmem:[#allocation2 + $0x1e5] sm:$0xff]
  %v1780 = vld [vmem:[#allocation2 + $0x1ed] sm:$0xff]
  %v1781 = vld [vmem:[#allocation2 + $0x1f5] sm:$0xff]
  %v1782 = vld [vmem:[#allocation2 + $0x1fd] sm:$0xff]
  %v1783 = vld [vmem:[#allocation2 + $0x205] sm:$0xff]
  %v1784 = vld [vmem:[#allocation2 + $0x20d] sm:$0xff]
  %v1785 = vld [vmem:[#allocation2 + $0x215] sm:$0xff]
  %v1786 = vld [vmem:[#allocation2 + $0x21d] sm:$0xff]
  %v1787 = vld [vmem:[#allocation2 + $0x225] sm:$0xff]
  %v1788 = vld [vmem:[#allocation2 + $0x22d] sm:$0xff]
  %v1789 = vld [vmem:[#allocation2 + $0x235] sm:$0xff]
  %v1790 = vld [vmem:[#allocation2 + $0x23d] sm:$0xff]
  %v1791 = vld [vmem:[#allocation2 + $0x245] sm:$0xff]
  %v1792 = vld [vmem:[#allocation2 + $0x24d] sm:$0xff]
  %v1793 = vld [vmem:[#allocation2 + $0x255] sm:$0xff]
  %v1794 = vld [vmem:[#allocation2 + $0x25d] sm:$0xff]
  %v1795 = vld [vmem:[#allocation2 + $0x265] sm:$0xff]
  %v1796 = vld [vmem:[#allocation2 + $0x26d] sm:$0xff]
  %v1797 = vld [vmem:[#allocation2 + $0x275] sm:$0xff]
  %v1798 = vld [vmem:[#allocation2 + $0x27d] sm:$0xff]
  %v1799 = vld [vmem:[#allocation2 + $0x285] sm:$0xff]
  %v1800 = vld [vmem:[#allocation2 + $0x6] sm:$0xff]
  %v1801 = vld [vmem:[#allocation2 + $0xe] sm:$0xff]
  %v1802 = vld [vmem:[#allocation2 + $0x16] sm:$0xff]
  %v1803 = vld [vmem:[#allocation2 + $0x1e] sm:$0xff]
  %v1804 = vld [vmem:[#allocation2 + $0x26] sm:$0xff]
  %v1805 = vld [vmem:[#allocation2 + $0x2e] sm:$0xff]
  %v1806 = vld [vmem:[#allocation2 + $0x36] sm:$0xff]
  %v1807 = vld [vmem:[#allocation2 + $0x3e] sm:$0xff]
  %v1808 = vld [vmem:[#allocation2 + $0x46] sm:$0xff]
  %v1809 = vld [vmem:[#allocation2 + $0x4e] sm:$0xff]
  %v1810 = vld [vmem:[#allocation2 + $0x56] sm:$0xff]
  %v1811 = vld [vmem:[#allocation2 + $0x5e] sm:$0xff]
  %v1812 = vld [vmem:[#allocation2 + $0x66] sm:$0xff]
  %v1813 = vld [vmem:[#allocation2 + $0x6e] sm:$0xff]
  %v1814 = vld [vmem:[#allocation2 + $0x76] sm:$0xff]
  %v1815 = vld [vmem:[#allocation2 + $0x7e] sm:$0xff]
  %v1816 = vld [vmem:[#allocation2 + $0x86] sm:$0xff]
  %v1817 = vld [vmem:[#allocation2 + $0x8e] sm:$0xff]
  %v1818 = vld [vmem:[#allocation2 + $0x96] sm:$0xff]
  %v1819 = vld [vmem:[#allocation2 + $0x9e] sm:$0xff]
  %v1820 = vld [vmem:[#allocation2 + $0xa6] sm:$0xff]
  %v1821 = vld [vmem:[#allocation2 + $0xae] sm:$0xff]
  %v1822 = vld [vmem:[#allocation2 + $0xb6] sm:$0xff]
  %v1823 = vld [vmem:[#allocation2 + $0xbe] sm:$0xff]
  %v1824 = vld [vmem:[#allocation2 + $0xc6] sm:$0xff]
  %v1825 = vld [vmem:[#allocation2 + $0xce] sm:$0xff]
  %v1826 = vld [vmem:[#allocation2 + $0xd6] sm:$0xff]
  %v1827 = vld [vmem:[#allocation2 + $0xde] sm:$0xff]
  %v1828 = vld [vmem:[#allocation2 + $0xe6] sm:$0xff]
  %v1829 = vld [vmem:[#allocation2 + $0xee] sm:$0xff]
  %v1830 = vld [vmem:[#allocation2 + $0xf6] sm:$0xff]
  %v1831 = vld [vmem:[#allocation2 + $0xfe] sm:$0xff]
  %v1832 = vld [vmem:[#allocation2 + $0x106] sm:$0xff]
  %v1833 = vld [vmem:[#allocation2 + $0x10e] sm:$0xff]
  %v1834 = vld [vmem:[#allocation2 + $0x116] sm:$0xff]
  %v1835 = vld [vmem:[#allocation2 + $0x11e] sm:$0xff]
  %v1836 = vld [vmem:[#allocation2 + $0x126] sm:$0xff]
  %v1837 = vld [vmem:[#allocation2 + $0x12e] sm:$0xff]
  %v1838 = vld [vmem:[#allocation2 + $0x136] sm:$0xff]
  %v1839 = vld [vmem:[#allocation2 + $0x13e] sm:$0xff]
  %v1840 = vld [vmem:[#allocation2 + $0x146] sm:$0xff]
  %v1841 = vld [vmem:[#allocation2 + $0x14e] sm:$0xff]
  %v1842 = vld [vmem:[#allocation2 + $0x156] sm:$0xff]
  %v1843 = vld [vmem:[#allocation2 + $0x15e] sm:$0xff]
  %v1844 = vld [vmem:[#allocation2 + $0x166] sm:$0xff]
  %v1845 = vld [vmem:[#allocation2 + $0x16e] sm:$0xff]
  %v1846 = vld [vmem:[#allocation2 + $0x176] sm:$0xff]
  %v1847 = vld [vmem:[#allocation2 + $0x17e] sm:$0xff]
  %v1848 = vld [vmem:[#allocation2 + $0x186] sm:$0xff]
  %v1849 = vld [vmem:[#allocation2 + $0x18e] sm:$0xff]
  %v1850 = vld [vmem:[#allocation2 + $0x196] sm:$0xff]
  %v1851 = vld [vmem:[#allocation2 + $0x19e] sm:$0xff]
  %v1852 = vld [vmem:[#allocation2 + $0x1a6] sm:$0xff]
  %v1853 = vld [vmem:[#allocation2 + $0x1ae] sm:$0xff]
  %v1854 = vld [vmem:[#allocation2 + $0x1b6] sm:$0xff]
  %v1855 = vld [vmem:[#allocation2 + $0x1be] sm:$0xff]
  %v1856 = vld [vmem:[#allocation2 + $0x1c6] sm:$0xff]
  %v1857 = vld [vmem:[#allocation2 + $0x1ce] sm:$0xff]
  %v1858 = vld [vmem:[#allocation2 + $0x1d6] sm:$0xff]
  %v1859 = vld [vmem:[#allocation2 + $0x1de] sm:$0xff]
  %v1860 = vld [vmem:[#allocation2 + $0x1e6] sm:$0xff]
  %v1861 = vld [vmem:[#allocation2 + $0x1ee] sm:$0xff]
  %v1862 = vld [vmem:[#allocation2 + $0x1f6] sm:$0xff]
  %v1863 = vld [vmem:[#allocation2 + $0x1fe] sm:$0xff]
  %v1864 = vld [vmem:[#allocation2 + $0x206] sm:$0xff]
  %v1865 = vld [vmem:[#allocation2 + $0x20e] sm:$0xff]
  %v1866 = vld [vmem:[#allocation2 + $0x216] sm:$0xff]
  %v1867 = vld [vmem:[#allocation2 + $0x21e] sm:$0xff]
  %v1868 = vld [vmem:[#allocation2 + $0x226] sm:$0xff]
  %v1869 = vld [vmem:[#allocation2 + $0x22e] sm:$0xff]
  %v1870 = vld [vmem:[#allocation2 + $0x236] sm:$0xff]
  %v1871 = vld [vmem:[#allocation2 + $0x23e] sm:$0xff]
  %v1872 = vld [vmem:[#allocation2 + $0x246] sm:$0xff]
  %v1873 = vld [vmem:[#allocation2 + $0x24e] sm:$0xff]
  %v1874 = vld [vmem:[#allocation2 + $0x256] sm:$0xff]
  %v1875 = vld [vmem:[#allocation2 + $0x25e] sm:$0xff]
  %v1876 = vld [vmem:[#allocation2 + $0x266] sm:$0xff]
  %v1877 = vld [vmem:[#allocation2 + $0x26e] sm:$0xff]
  %v1878 = vld [vmem:[#allocation2 + $0x276] sm:$0xff]
  %v1879 = vld [vmem:[#allocation2 + $0x27e] sm:$0xff]
  %v1880 = vld [vmem:[#allocation2 + $0x286] sm:$0xff]
  %v1881 = vld [vmem:[#allocation2 + $0x7] sm:$0xff]
  %v1882 = vld [vmem:[#allocation2 + $0xf] sm:$0xff]
  %v1883 = vld [vmem:[#allocation2 + $0x17] sm:$0xff]
  %v1884 = vld [vmem:[#allocation2 + $0x1f] sm:$0xff]
  %v1885 = vld [vmem:[#allocation2 + $0x27] sm:$0xff]
  %v1886 = vld [vmem:[#allocation2 + $0x2f] sm:$0xff]
  %v1887 = vld [vmem:[#allocation2 + $0x37] sm:$0xff]
  %v1888 = vld [vmem:[#allocation2 + $0x3f] sm:$0xff]
  %v1889 = vld [vmem:[#allocation2 + $0x47] sm:$0xff]
  %v1890 = vld [vmem:[#allocation2 + $0x4f] sm:$0xff]
  %v1891 = vld [vmem:[#allocation2 + $0x57] sm:$0xff]
  %v1892 = vld [vmem:[#allocation2 + $0x5f] sm:$0xff]
  %v1893 = vld [vmem:[#allocation2 + $0x67] sm:$0xff]
  %v1894 = vld [vmem:[#allocation2 + $0x6f] sm:$0xff]
  %v1895 = vld [vmem:[#allocation2 + $0x77] sm:$0xff]
  %v1896 = vld [vmem:[#allocation2 + $0x7f] sm:$0xff]
  %v1897 = vld [vmem:[#allocation2 + $0x87] sm:$0xff]
  %v1898 = vld [vmem:[#allocation2 + $0x8f] sm:$0xff]
  %v1899 = vld [vmem:[#allocation2 + $0x97] sm:$0xff]
  %v1900 = vld [vmem:[#allocation2 + $0x9f] sm:$0xff]
  %v1901 = vld [vmem:[#allocation2 + $0xa7] sm:$0xff]
  %v1902 = vld [vmem:[#allocation2 + $0xaf] sm:$0xff]
  %v1903 = vld [vmem:[#allocation2 + $0xb7] sm:$0xff]
  %v1904 = vld [vmem:[#allocation2 + $0xbf] sm:$0xff]
  %v1905 = vld [vmem:[#allocation2 + $0xc7] sm:$0xff]
  %v1906 = vld [vmem:[#allocation2 + $0xcf] sm:$0xff]
  %v1907 = vld [vmem:[#allocation2 + $0xd7] sm:$0xff]
  %v1908 = vld [vmem:[#allocation2 + $0xdf] sm:$0xff]
  %v1909 = vld [vmem:[#allocation2 + $0xe7] sm:$0xff]
  %v1910 = vld [vmem:[#allocation2 + $0xef] sm:$0xff]
  %v1911 = vld [vmem:[#allocation2 + $0xf7] sm:$0xff]
  %v1912 = vld [vmem:[#allocation2 + $0xff] sm:$0xff]
  %v1913 = vld [vmem:[#allocation2 + $0x107] sm:$0xff]
  %v1914 = vld [vmem:[#allocation2 + $0x10f] sm:$0xff]
  %v1915 = vld [vmem:[#allocation2 + $0x117] sm:$0xff]
  %v1916 = vld [vmem:[#allocation2 + $0x11f] sm:$0xff]
  %v1917 = vld [vmem:[#allocation2 + $0x127] sm:$0xff]
  %v1918 = vld [vmem:[#allocation2 + $0x12f] sm:$0xff]
  %v1919 = vld [vmem:[#allocation2 + $0x137] sm:$0xff]
  %v1920 = vld [vmem:[#allocation2 + $0x13f] sm:$0xff]
  %v1921 = vld [vmem:[#allocation2 + $0x147] sm:$0xff]
  %v1922 = vld [vmem:[#allocation2 + $0x14f] sm:$0xff]
  %v1923 = vld [vmem:[#allocation2 + $0x157] sm:$0xff]
  %v1924 = vld [vmem:[#allocation2 + $0x15f] sm:$0xff]
  %v1925 = vld [vmem:[#allocation2 + $0x167] sm:$0xff]
  %v1926 = vld [vmem:[#allocation2 + $0x16f] sm:$0xff]
  %v1927 = vld [vmem:[#allocation2 + $0x177] sm:$0xff]
  %v1928 = vld [vmem:[#allocation2 + $0x17f] sm:$0xff]
  %v1929 = vld [vmem:[#allocation2 + $0x187] sm:$0xff]
  %v1930 = vld [vmem:[#allocation2 + $0x18f] sm:$0xff]
  %v1931 = vld [vmem:[#allocation2 + $0x197] sm:$0xff]
  %v1932 = vld [vmem:[#allocation2 + $0x19f] sm:$0xff]
  %v1933 = vld [vmem:[#allocation2 + $0x1a7] sm:$0xff]
  %v1934 = vld [vmem:[#allocation2 + $0x1af] sm:$0xff]
  %v1935 = vld [vmem:[#allocation2 + $0x1b7] sm:$0xff]
  %v1936 = vld [vmem:[#allocation2 + $0x1bf] sm:$0xff]
  %v1937 = vld [vmem:[#allocation2 + $0x1c7] sm:$0xff]
  %v1938 = vld [vmem:[#allocation2 + $0x1cf] sm:$0xff]
  %v1939 = vld [vmem:[#allocation2 + $0x1d7] sm:$0xff]
  %v1940 = vld [vmem:[#allocation2 + $0x1df] sm:$0xff]
  %v1941 = vld [vmem:[#allocation2 + $0x1e7] sm:$0xff]
  %v1942 = vld [vmem:[#allocation2 + $0x1ef] sm:$0xff]
  %v1943 = vld [vmem:[#allocation2 + $0x1f7] sm:$0xff]
  %v1944 = vld [vmem:[#allocation2 + $0x1ff] sm:$0xff]
  %v1945 = vld [vmem:[#allocation2 + $0x207] sm:$0xff]
  %v1946 = vld [vmem:[#allocation2 + $0x20f] sm:$0xff]
  %v1947 = vld [vmem:[#allocation2 + $0x217] sm:$0xff]
  %v1948 = vld [vmem:[#allocation2 + $0x21f] sm:$0xff]
  %v1949 = vld [vmem:[#allocation2 + $0x227] sm:$0xff]
  %v1950 = vld [vmem:[#allocation2 + $0x22f] sm:$0xff]
  %v1951 = vld [vmem:[#allocation2 + $0x237] sm:$0xff]
  %v1952 = vld [vmem:[#allocation2 + $0x23f] sm:$0xff]
  %v1953 = vld [vmem:[#allocation2 + $0x247] sm:$0xff]
  %v1954 = vld [vmem:[#allocation2 + $0x24f] sm:$0xff]
  %v1955 = vld [vmem:[#allocation2 + $0x257] sm:$0xff]
  %v1956 = vld [vmem:[#allocation2 + $0x25f] sm:$0xff]
  %v1957 = vld [vmem:[#allocation2 + $0x267] sm:$0xff]
  %v1958 = vld [vmem:[#allocation2 + $0x26f] sm:$0xff]
  %v1959 = vld [vmem:[#allocation2 + $0x277] sm:$0xff]
  %v1960 = vld [vmem:[#allocation2 + $0x27f] sm:$0xff]
  %v1961 = vld [vmem:[#allocation2 + $0x287] sm:$0xff]
  %v1962 = vld [vmem:[#allocation2 + $0x28f] sm:$0xff]
  %v1963 = vld [vmem:[#allocation2 + $0x297] sm:$0xff]
  %v1964 = vld [vmem:[#allocation2 + $0x18] sm:$0xff]
  %v1965 = vld [vmem:[#allocation2 + $0x20] sm:$0xff]
  %v1966 = vld [vmem:[#allocation2 + $0x28] sm:$0xff]
  %v1967 = vld [vmem:[#allocation2 + $0x30] sm:$0xff]
  %v1968 = vld [vmem:[#allocation2 + $0x38] sm:$0xff]
  %v1969 = vld [vmem:[#allocation2 + $0x40] sm:$0xff]
  %v1970 = vld [vmem:[#allocation2 + $0x48] sm:$0xff]
  %v1971 = vld [vmem:[#allocation2 + $0x50] sm:$0xff]
  %v1972 = vld [vmem:[#allocation2 + $0x58] sm:$0xff]
  %v1973 = vld [vmem:[#allocation2 + $0x60] sm:$0xff]
  %v1974 = vld [vmem:[#allocation2 + $0x68] sm:$0xff]
  %v1975 = vld [vmem:[#allocation2 + $0x70] sm:$0xff]
  %v1976 = vld [vmem:[#allocation2 + $0x78] sm:$0xff]
  %v1977 = vld [vmem:[#allocation2 + $0x80] sm:$0xff]
  %v1978 = vld [vmem:[#allocation2 + $0x88] sm:$0xff]
  %v1979 = vld [vmem:[#allocation2 + $0x90] sm:$0xff]
  %v1980 = vld [vmem:[#allocation2 + $0x98] sm:$0xff]
  %v1981 = vld [vmem:[#allocation2 + $0xa0] sm:$0xff]
  %v1982 = vld [vmem:[#allocation2 + $0xa8] sm:$0xff]
  %v1983 = vld [vmem:[#allocation2 + $0xb0] sm:$0xff]
  %v1984 = vld [vmem:[#allocation2 + $0xb8] sm:$0xff]
  %v1985 = vld [vmem:[#allocation2 + $0xc0] sm:$0xff]
  %v1986 = vld [vmem:[#allocation2 + $0xc8] sm:$0xff]
  %v1987 = vld [vmem:[#allocation2 + $0xd0] sm:$0xff]
  %v1988 = vld [vmem:[#allocation2 + $0xd8] sm:$0xff]
  %v1989 = vld [vmem:[#allocation2 + $0xe0] sm:$0xff]
  %v1990 = vld [vmem:[#allocation2 + $0xe8] sm:$0xff]
  %v1991 = vld [vmem:[#allocation2 + $0xf0] sm:$0xff]
  %v1992 = vld [vmem:[#allocation2 + $0xf8] sm:$0xff]
  %v1993 = vld [vmem:[#allocation2 + $0x100] sm:$0xff]
  %v1994 = vld [vmem:[#allocation2 + $0x108] sm:$0xff]
  %v1995 = vld [vmem:[#allocation2 + $0x110] sm:$0xff]
  %v1996 = vld [vmem:[#allocation2 + $0x118] sm:$0xff]
  %v1997 = vld [vmem:[#allocation2 + $0x120] sm:$0xff]
  %v1998 = vld [vmem:[#allocation2 + $0x128] sm:$0xff]
  %v1999 = vld [vmem:[#allocation2 + $0x130] sm:$0xff]
  %v2000 = vld [vmem:[#allocation2 + $0x138] sm:$0xff]
  %v2001 = vld [vmem:[#allocation2 + $0x140] sm:$0xff]
  %v2002 = vld [vmem:[#allocation2 + $0x148] sm:$0xff]
  %v2003 = vld [vmem:[#allocation2 + $0x150] sm:$0xff]
  %v2004 = vld [vmem:[#allocation2 + $0x158] sm:$0xff]
  %v2005 = vld [vmem:[#allocation2 + $0x160] sm:$0xff]
  %v2006 = vld [vmem:[#allocation2 + $0x168] sm:$0xff]
  %v2007 = vld [vmem:[#allocation2 + $0x170] sm:$0xff]
  %v2008 = vld [vmem:[#allocation2 + $0x178] sm:$0xff]
  %v2009 = vld [vmem:[#allocation2 + $0x180] sm:$0xff]
  %v2010 = vld [vmem:[#allocation2 + $0x188] sm:$0xff]
  %v2011 = vld [vmem:[#allocation2 + $0x190] sm:$0xff]
  %v2012 = vld [vmem:[#allocation2 + $0x198] sm:$0xff]
  %v2013 = vld [vmem:[#allocation2 + $0x1a0] sm:$0xff]
  %v2014 = vld [vmem:[#allocation2 + $0x1a8] sm:$0xff]
  %v2015 = vld [vmem:[#allocation2 + $0x1b0] sm:$0xff]
  %v2016 = vld [vmem:[#allocation2 + $0x1b8] sm:$0xff]
  %v2017 = vld [vmem:[#allocation2 + $0x1c0] sm:$0xff]
  %v2018 = vld [vmem:[#allocation2 + $0x1c8] sm:$0xff]
  %v2019 = vld [vmem:[#allocation2 + $0x1d0] sm:$0xff]
  %v2020 = vld [vmem:[#allocation2 + $0x1d8] sm:$0xff]
  %v2021 = vld [vmem:[#allocation2 + $0x1e0] sm:$0xff]
  %v2022 = vld [vmem:[#allocation2 + $0x1e8] sm:$0xff]
  %v2023 = vld [vmem:[#allocation2 + $0x1f0] sm:$0xff]
  %v2024 = vld [vmem:[#allocation2 + $0x1f8] sm:$0xff]
  %v2025 = vld [vmem:[#allocation2 + $0x200] sm:$0xff]
  %v2026 = vld [vmem:[#allocation2 + $0x208] sm:$0xff]
  %v2027 = vld [vmem:[#allocation2 + $0x210] sm:$0xff]
  %v2028 = vld [vmem:[#allocation2 + $0x218] sm:$0xff]
  %v2029 = vld [vmem:[#allocation2 + $0x220] sm:$0xff]
  %v2030 = vld [vmem:[#allocation2 + $0x228] sm:$0xff]
  %v2031 = vld [vmem:[#allocation2 + $0x230] sm:$0xff]
  %v2032 = vld [vmem:[#allocation2 + $0x238] sm:$0xff]
  %v2033 = vld [vmem:[#allocation2 + $0x240] sm:$0xff]
  %v2034 = vld [vmem:[#allocation2 + $0x248] sm:$0xff]
  %v2035 = vld [vmem:[#allocation2 + $0x250] sm:$0xff]
  %v2036 = vld [vmem:[#allocation2 + $0x258] sm:$0xff]
  %v2037 = vld [vmem:[#allocation2 + $0x260] sm:$0xff]
  %v2038 = vld [vmem:[#allocation2 + $0x268] sm:$0xff]
  %v2039 = vld [vmem:[#allocation2 + $0x270] sm:$0xff]
  %v2040 = vld [vmem:[#allocation2 + $0x278] sm:$0xff]
  %v2041 = vld [vmem:[#allocation2 + $0x280] sm:$0xff]
  %v2042 = vld [vmem:[#allocation2 + $0x288] sm:$0xff]
  %v2043 = vld [vmem:[#allocation2 + $0x290] sm:$0xff]
  %v2044 = vld [vmem:[#allocation2 + $0x298] sm:$0xff]
  %v2045 = vld [vmem:[#allocation2 + $0x19] sm:$0xff]
  %v2046 = vld [vmem:[#allocation2 + $0x21] sm:$0xff]
  %v2047 = vld [vmem:[#allocation2 + $0x29] sm:$0xff]
  %v2048 = vld [vmem:[#allocation2 + $0x31] sm:$0xff]
  %v2049 = vld [vmem:[#allocation2 + $0x39] sm:$0xff]
  %v2050 = vld [vmem:[#allocation2 + $0x41] sm:$0xff]
  %v2051 = vld [vmem:[#allocation2 + $0x49] sm:$0xff]
  %v2052 = vld [vmem:[#allocation2 + $0x51] sm:$0xff]
  %v2053 = vld [vmem:[#allocation2 + $0x59] sm:$0xff]
  %v2054 = vld [vmem:[#allocation2 + $0x61] sm:$0xff]
  %v2055 = vld [vmem:[#allocation2 + $0x69] sm:$0xff]
  %v2056 = vld [vmem:[#allocation2 + $0x71] sm:$0xff]
  %v2057 = vld [vmem:[#allocation2 + $0x79] sm:$0xff]
  %v2058 = vld [vmem:[#allocation2 + $0x81] sm:$0xff]
  %v2059 = vld [vmem:[#allocation2 + $0x89] sm:$0xff]
  %v2060 = vld [vmem:[#allocation2 + $0x91] sm:$0xff]
  %v2061 = vld [vmem:[#allocation2 + $0x99] sm:$0xff]
  %v2062 = vld [vmem:[#allocation2 + $0xa1] sm:$0xff]
  %v2063 = vld [vmem:[#allocation2 + $0xa9] sm:$0xff]
  %v2064 = vld [vmem:[#allocation2 + $0xb1] sm:$0xff]
  %v2065 = vld [vmem:[#allocation2 + $0xb9] sm:$0xff]
  %v2066 = vld [vmem:[#allocation2 + $0xc1] sm:$0xff]
  %v2067 = vld [vmem:[#allocation2 + $0xc9] sm:$0xff]
  %v2068 = vld [vmem:[#allocation2 + $0xd1] sm:$0xff]
  %v2069 = vld [vmem:[#allocation2 + $0xd9] sm:$0xff]
  %v2070 = vld [vmem:[#allocation2 + $0xe1] sm:$0xff]
  %v2071 = vld [vmem:[#allocation2 + $0xe9] sm:$0xff]
  %v2072 = vld [vmem:[#allocation2 + $0xf1] sm:$0xff]
  %v2073 = vld [vmem:[#allocation2 + $0xf9] sm:$0xff]
  %v2074 = vld [vmem:[#allocation2 + $0x101] sm:$0xff]
  %v2075 = vld [vmem:[#allocation2 + $0x109] sm:$0xff]
  %v2076 = vld [vmem:[#allocation2 + $0x111] sm:$0xff]
  %v2077 = vld [vmem:[#allocation2 + $0x119] sm:$0xff]
  %v2078 = vld [vmem:[#allocation2 + $0x121] sm:$0xff]
  %v2079 = vld [vmem:[#allocation2 + $0x129] sm:$0xff]
  %v2080 = vld [vmem:[#allocation2 + $0x131] sm:$0xff]
  %v2081 = vld [vmem:[#allocation2 + $0x139] sm:$0xff]
  %v2082 = vld [vmem:[#allocation2 + $0x141] sm:$0xff]
  %v2083 = vld [vmem:[#allocation2 + $0x149] sm:$0xff]
  %v2084 = vld [vmem:[#allocation2 + $0x151] sm:$0xff]
  %v2085 = vld [vmem:[#allocation2 + $0x159] sm:$0xff]
  %v2086 = vld [vmem:[#allocation2 + $0x161] sm:$0xff]
  %v2087 = vld [vmem:[#allocation2 + $0x169] sm:$0xff]
  %v2088 = vld [vmem:[#allocation2 + $0x171] sm:$0xff]
  %v2089 = vld [vmem:[#allocation2 + $0x179] sm:$0xff]
  %v2090 = vld [vmem:[#allocation2 + $0x181] sm:$0xff]
  %v2091 = vld [vmem:[#allocation2 + $0x189] sm:$0xff]
  %v2092 = vld [vmem:[#allocation2 + $0x191] sm:$0xff]
  %v2093 = vld [vmem:[#allocation2 + $0x199] sm:$0xff]
  %v2094 = vld [vmem:[#allocation2 + $0x1a1] sm:$0xff]
  %v2095 = vld [vmem:[#allocation2 + $0x1a9] sm:$0xff]
  %v2096 = vld [vmem:[#allocation2 + $0x1b1] sm:$0xff]
  %v2097 = vld [vmem:[#allocation2 + $0x1b9] sm:$0xff]
  %v2098 = vld [vmem:[#allocation2 + $0x1c1] sm:$0xff]
  %v2099 = vld [vmem:[#allocation2 + $0x1c9] sm:$0xff]
  %v2100 = vld [vmem:[#allocation2 + $0x1d1] sm:$0xff]
  %v2101 = vld [vmem:[#allocation2 + $0x1d9] sm:$0xff]
  %v2102 = vld [vmem:[#allocation2 + $0x1e1] sm:$0xff]
  %v2103 = vld [vmem:[#allocation2 + $0x1e9] sm:$0xff]
  %v2104 = vld [vmem:[#allocation2 + $0x1f1] sm:$0xff]
  %v2105 = vld [vmem:[#allocation2 + $0x1f9] sm:$0xff]
  %v2106 = vld [vmem:[#allocation2 + $0x201] sm:$0xff]
  %v2107 = vld [vmem:[#allocation2 + $0x209] sm:$0xff]
  %v2108 = vld [vmem:[#allocation2 + $0x211] sm:$0xff]
  %v2109 = vld [vmem:[#allocation2 + $0x219] sm:$0xff]
  %v2110 = vld [vmem:[#allocation2 + $0x221] sm:$0xff]
  %v2111 = vld [vmem:[#allocation2 + $0x229] sm:$0xff]
  %v2112 = vld [vmem:[#allocation2 + $0x231] sm:$0xff]
  %v2113 = vld [vmem:[#allocation2 + $0x239] sm:$0xff]
  %v2114 = vld [vmem:[#allocation2 + $0x241] sm:$0xff]
  %v2115 = vld [vmem:[#allocation2 + $0x249] sm:$0xff]
  %v2116 = vld [vmem:[#allocation2 + $0x251] sm:$0xff]
  %v2117 = vld [vmem:[#allocation2 + $0x259] sm:$0xff]
  %v2118 = vld [vmem:[#allocation2 + $0x261] sm:$0xff]
  %v2119 = vld [vmem:[#allocation2 + $0x269] sm:$0xff]
  %v2120 = vld [vmem:[#allocation2 + $0x271] sm:$0xff]
  %v2121 = vld [vmem:[#allocation2 + $0x279] sm:$0xff]
  %v2122 = vld [vmem:[#allocation2 + $0x281] sm:$0xff]
  %v2123 = vld [vmem:[#allocation2 + $0x289] sm:$0xff]
  %v2124 = vld [vmem:[#allocation2 + $0x291] sm:$0xff]
  %v2125 = vld [vmem:[#allocation2 + $0x299] sm:$0xff]
  %v2126 = vld [vmem:[#allocation2 + $0x2a1] sm:$0xff]
  %v2127 = vld [vmem:[#allocation2 + $0x2a9] sm:$0xff]
  %v2128 = vld [vmem:[#allocation2 + $0x2a] sm:$0xff]
  %v2129 = vld [vmem:[#allocation2 + $0x32] sm:$0xff]
  %v2130 = vld [vmem:[#allocation2 + $0x3a] sm:$0xff]
  %v2131 = vld [vmem:[#allocation2 + $0x42] sm:$0xff]
  %v2132 = vld [vmem:[#allocation2 + $0x4a] sm:$0xff]
  %v2133 = vld [vmem:[#allocation2 + $0x52] sm:$0xff]
  %v2134 = vld [vmem:[#allocation2 + $0x5a] sm:$0xff]
  %v2135 = vld [vmem:[#allocation2 + $0x62] sm:$0xff]
  %v2136 = vld [vmem:[#allocation2 + $0x6a] sm:$0xff]
  %v2137 = vld [vmem:[#allocation2 + $0x72] sm:$0xff]
  %v2138 = vld [vmem:[#allocation2 + $0x7a] sm:$0xff]
  %v2139 = vld [vmem:[#allocation2 + $0x82] sm:$0xff]
  %v2140 = vld [vmem:[#allocation2 + $0x8a] sm:$0xff]
  %v2141 = vld [vmem:[#allocation2 + $0x92] sm:$0xff]
  %v2142 = vld [vmem:[#allocation2 + $0x9a] sm:$0xff]
  %v2143 = vld [vmem:[#allocation2 + $0xa2] sm:$0xff]
  %v2144 = vld [vmem:[#allocation2 + $0xaa] sm:$0xff]
  %v2145 = vld [vmem:[#allocation2 + $0xb2] sm:$0xff]
  %v2146 = vld [vmem:[#allocation2 + $0xba] sm:$0xff]
  %v2147 = vld [vmem:[#allocation2 + $0xc2] sm:$0xff]
  %v2148 = vld [vmem:[#allocation2 + $0xca] sm:$0xff]
  %v2149 = vld [vmem:[#allocation2 + $0xd2] sm:$0xff]
  %v2150 = vld [vmem:[#allocation2 + $0xda] sm:$0xff]
  %v2151 = vld [vmem:[#allocation2 + $0xe2] sm:$0xff]
  %v2152 = vld [vmem:[#allocation2 + $0xea] sm:$0xff]
  %v2153 = vld [vmem:[#allocation2 + $0xf2] sm:$0xff]
  %v2154 = vld [vmem:[#allocation2 + $0xfa] sm:$0xff]
  %v2155 = vld [vmem:[#allocation2 + $0x102] sm:$0xff]
  %v2156 = vld [vmem:[#allocation2 + $0x10a] sm:$0xff]
  %v2157 = vld [vmem:[#allocation2 + $0x112] sm:$0xff]
  %v2158 = vld [vmem:[#allocation2 + $0x11a] sm:$0xff]
  %v2159 = vld [vmem:[#allocation2 + $0x122] sm:$0xff]
  %v2160 = vld [vmem:[#allocation2 + $0x12a] sm:$0xff]
  %v2161 = vld [vmem:[#allocation2 + $0x132] sm:$0xff]
  %v2162 = vld [vmem:[#allocation2 + $0x13a] sm:$0xff]
  %v2163 = vld [vmem:[#allocation2 + $0x142] sm:$0xff]
  %v2164 = vld [vmem:[#allocation2 + $0x14a] sm:$0xff]
  %v2165 = vld [vmem:[#allocation2 + $0x152] sm:$0xff]
  %v2166 = vld [vmem:[#allocation2 + $0x15a] sm:$0xff]
  %v2167 = vld [vmem:[#allocation2 + $0x162] sm:$0xff]
  %v2168 = vld [vmem:[#allocation2 + $0x16a] sm:$0xff]
  %v2169 = vld [vmem:[#allocation2 + $0x172] sm:$0xff]
  %v2170 = vld [vmem:[#allocation2 + $0x17a] sm:$0xff]
  %v2171 = vld [vmem:[#allocation2 + $0x182] sm:$0xff]
  %v2172 = vld [vmem:[#allocation2 + $0x18a] sm:$0xff]
  %v2173 = vld [vmem:[#allocation2 + $0x192] sm:$0xff]
  %v2174 = vld [vmem:[#allocation2 + $0x19a] sm:$0xff]
  %v2175 = vld [vmem:[#allocation2 + $0x1a2] sm:$0xff]
  %v2176 = vld [vmem:[#allocation2 + $0x1aa] sm:$0xff]
  %v2177 = vld [vmem:[#allocation2 + $0x1b2] sm:$0xff]
  %v2178 = vld [vmem:[#allocation2 + $0x1ba] sm:$0xff]
  %v2179 = vld [vmem:[#allocation2 + $0x1c2] sm:$0xff]
  %v2180 = vld [vmem:[#allocation2 + $0x1ca] sm:$0xff]
  %v2181 = vld [vmem:[#allocation2 + $0x1d2] sm:$0xff]
  %v2182 = vld [vmem:[#allocation2 + $0x1da] sm:$0xff]
  %v2183 = vld [vmem:[#allocation2 + $0x1e2] sm:$0xff]
  %v2184 = vld [vmem:[#allocation2 + $0x1ea] sm:$0xff]
  %v2185 = vld [vmem:[#allocation2 + $0x1f2] sm:$0xff]
  %v2186 = vld [vmem:[#allocation2 + $0x1fa] sm:$0xff]
  %v2187 = vld [vmem:[#allocation2 + $0x202] sm:$0xff]
  %v2188 = vld [vmem:[#allocation2 + $0x20a] sm:$0xff]
  %v2189 = vld [vmem:[#allocation2 + $0x212] sm:$0xff]
  %v2190 = vld [vmem:[#allocation2 + $0x21a] sm:$0xff]
  %v2191 = vld [vmem:[#allocation2 + $0x222] sm:$0xff]
  %v2192 = vld [vmem:[#allocation2 + $0x22a] sm:$0xff]
  %v2193 = vld [vmem:[#allocation2 + $0x232] sm:$0xff]
  %v2194 = vld [vmem:[#allocation2 + $0x23a] sm:$0xff]
  %v2195 = vld [vmem:[#allocation2 + $0x242] sm:$0xff]
  %v2196 = vld [vmem:[#allocation2 + $0x24a] sm:$0xff]
  %v2197 = vld [vmem:[#allocation2 + $0x252] sm:$0xff]
  %v2198 = vld [vmem:[#allocation2 + $0x25a] sm:$0xff]
  %v2199 = vld [vmem:[#allocation2 + $0x262] sm:$0xff]
  %v2200 = vld [vmem:[#allocation2 + $0x26a] sm:$0xff]
  %v2201 = vld [vmem:[#allocation2 + $0x272] sm:$0xff]
  %v2202 = vld [vmem:[#allocation2 + $0x27a] sm:$0xff]
  %v2203 = vld [vmem:[#allocation2 + $0x282] sm:$0xff]
  %v2204 = vld [vmem:[#allocation2 + $0x28a] sm:$0xff]
  %v2205 = vld [vmem:[#allocation2 + $0x292] sm:$0xff]
  %v2206 = vld [vmem:[#allocation2 + $0x29a] sm:$0xff]
  %v2207 = vld [vmem:[#allocation2 + $0x2a2] sm:$0xff]
  %v2208 = vld [vmem:[#allocation2 + $0x2aa] sm:$0xff]
  %v2209 = vld [vmem:[#allocation2 + $0x2b] sm:$0xff]
  %v2210 = vld [vmem:[#allocation2 + $0x33] sm:$0xff]
  %v2211 = vld [vmem:[#allocation2 + $0x3b] sm:$0xff]
  %v2212 = vld [vmem:[#allocation2 + $0x43] sm:$0xff]
  %v2213 = vld [vmem:[#allocation2 + $0x4b] sm:$0xff]
  %v2214 = vld [vmem:[#allocation2 + $0x53] sm:$0xff]
  %v2215 = vld [vmem:[#allocation2 + $0x5b] sm:$0xff]
  %v2216 = vld [vmem:[#allocation2 + $0x63] sm:$0xff]
  %v2217 = vld [vmem:[#allocation2 + $0x6b] sm:$0xff]
  %v2218 = vld [vmem:[#allocation2 + $0x73] sm:$0xff]
  %v2219 = vld [vmem:[#allocation2 + $0x7b] sm:$0xff]
  %v2220 = vld [vmem:[#allocation2 + $0x83] sm:$0xff]
  %v2221 = vld [vmem:[#allocation2 + $0x8b] sm:$0xff]
  %v2222 = vld [vmem:[#allocation2 + $0x93] sm:$0xff]
  %v2223 = vld [vmem:[#allocation2 + $0x9b] sm:$0xff]
  %v2224 = vld [vmem:[#allocation2 + $0xa3] sm:$0xff]
  %v2225 = vld [vmem:[#allocation2 + $0xab] sm:$0xff]
  %v2226 = vld [vmem:[#allocation2 + $0xb3] sm:$0xff]
  %v2227 = vld [vmem:[#allocation2 + $0xbb] sm:$0xff]
  %v2228 = vld [vmem:[#allocation2 + $0xc3] sm:$0xff]
  %v2229 = vld [vmem:[#allocation2 + $0xcb] sm:$0xff]
  %v2230 = vld [vmem:[#allocation2 + $0xd3] sm:$0xff]
  %v2231 = vld [vmem:[#allocation2 + $0xdb] sm:$0xff]
  %v2232 = vld [vmem:[#allocation2 + $0xe3] sm:$0xff]
  %v2233 = vld [vmem:[#allocation2 + $0xeb] sm:$0xff]
  %v2234 = vld [vmem:[#allocation2 + $0xf3] sm:$0xff]
  %v2235 = vld [vmem:[#allocation2 + $0xfb] sm:$0xff]
  %v2236 = vld [vmem:[#allocation2 + $0x103] sm:$0xff]
  %v2237 = vld [vmem:[#allocation2 + $0x10b] sm:$0xff]
  %v2238 = vld [vmem:[#allocation2 + $0x113] sm:$0xff]
  %v2239 = vld [vmem:[#allocation2 + $0x11b] sm:$0xff]
  %v2240 = vld [vmem:[#allocation2 + $0x123] sm:$0xff]
  %v2241 = vld [vmem:[#allocation2 + $0x12b] sm:$0xff]
  %v2242 = vld [vmem:[#allocation2 + $0x133] sm:$0xff]
  %v2243 = vld [vmem:[#allocation2 + $0x13b] sm:$0xff]
  %v2244 = vld [vmem:[#allocation2 + $0x143] sm:$0xff]
  %v2245 = vld [vmem:[#allocation2 + $0x14b] sm:$0xff]
  %v2246 = vld [vmem:[#allocation2 + $0x153] sm:$0xff]
  %v2247 = vld [vmem:[#allocation2 + $0x15b] sm:$0xff]
  %v2248 = vld [vmem:[#allocation2 + $0x163] sm:$0xff]
  %v2249 = vld [vmem:[#allocation2 + $0x16b] sm:$0xff]
  %v2250 = vld [vmem:[#allocation2 + $0x173] sm:$0xff]
  %v2251 = vld [vmem:[#allocation2 + $0x17b] sm:$0xff]
  %v2252 = vld [vmem:[#allocation2 + $0x183] sm:$0xff]
  %v2253 = vld [vmem:[#allocation2 + $0x18b] sm:$0xff]
  %v2254 = vld [vmem:[#allocation2 + $0x193] sm:$0xff]
  %v2255 = vld [vmem:[#allocation2 + $0x19b] sm:$0xff]
  %v2256 = vld [vmem:[#allocation2 + $0x1a3] sm:$0xff]
  %v2257 = vld [vmem:[#allocation2 + $0x1ab] sm:$0xff]
  %v2258 = vld [vmem:[#allocation2 + $0x1b3] sm:$0xff]
  %v2259 = vld [vmem:[#allocation2 + $0x1bb] sm:$0xff]
  %v2260 = vld [vmem:[#allocation2 + $0x1c3] sm:$0xff]
  %v2261 = vld [vmem:[#allocation2 + $0x1cb] sm:$0xff]
  %v2262 = vld [vmem:[#allocation2 + $0x1d3] sm:$0xff]
  %v2263 = vld [vmem:[#allocation2 + $0x1db] sm:$0xff]
  %v2264 = vld [vmem:[#allocation2 + $0x1e3] sm:$0xff]
  %v2265 = vld [vmem:[#allocation2 + $0x1eb] sm:$0xff]
  %v2266 = vld [vmem:[#allocation2 + $0x1f3] sm:$0xff]
  %v2267 = vld [vmem:[#allocation2 + $0x1fb] sm:$0xff]
  %v2268 = vld [vmem:[#allocation2 + $0x203] sm:$0xff]
  %v2269 = vld [vmem:[#allocation2 + $0x20b] sm:$0xff]
  %v2270 = vld [vmem:[#allocation2 + $0x213] sm:$0xff]
  %v2271 = vld [vmem:[#allocation2 + $0x21b] sm:$0xff]
  %v2272 = vld [vmem:[#allocation2 + $0x223] sm:$0xff]
  %v2273 = vld [vmem:[#allocation2 + $0x22b] sm:$0xff]
  %v2274 = vld [vmem:[#allocation2 + $0x233] sm:$0xff]
  %v2275 = vld [vmem:[#allocation2 + $0x23b] sm:$0xff]
  %v2276 = vld [vmem:[#allocation2 + $0x243] sm:$0xff]
  %v2277 = vld [vmem:[#allocation2 + $0x24b] sm:$0xff]
  %v2278 = vld [vmem:[#allocation2 + $0x253] sm:$0xff]
  %v2279 = vld [vmem:[#allocation2 + $0x25b] sm:$0xff]
  %v2280 = vld [vmem:[#allocation2 + $0x263] sm:$0xff]
  %v2281 = vld [vmem:[#allocation2 + $0x26b] sm:$0xff]
  %v2282 = vld [vmem:[#allocation2 + $0x273] sm:$0xff]
  %v2283 = vld [vmem:[#allocation2 + $0x27b] sm:$0xff]
  %v2284 = vld [vmem:[#allocation2 + $0x283] sm:$0xff]
  %v2285 = vld [vmem:[#allocation2 + $0x28b] sm:$0xff]
  %v2286 = vld [vmem:[#allocation2 + $0x293] sm:$0xff]
  %v2287 = vld [vmem:[#allocation2 + $0x29b] sm:$0xff]
  %v2288 = vld [vmem:[#allocation2 + $0x2a3] sm:$0xff]
  %v2289 = vld [vmem:[#allocation2 + $0x2ab] sm:$0xff]
  %2371 = vrot.lane.b32.xlu0 %v1800, 32
  %v2372 = vpop.permute.xlu0 %2371
  %2373 = vrot.lane.b32.xlu0 %v1801, 32
  %v2374 = vpop.permute.xlu0 %2373
  %2375 = vrot.lane.b32.xlu0 %v1802, 32
  %v2376 = vpop.permute.xlu0 %2375
  %2377 = vrot.lane.b32.xlu0 %v1803, 32
  %v2378 = vpop.permute.xlu0 %2377
  %2379 = vrot.lane.b32.xlu0 %v1804, 32
  %v2380 = vpop.permute.xlu0 %2379
  %2381 = vrot.lane.b32.xlu0 %v1805, 32
  %v2382 = vpop.permute.xlu0 %2381
  %2383 = vrot.lane.b32.xlu0 %v1806, 32
  %v2384 = vpop.permute.xlu0 %2383
  %2385 = vrot.lane.b32.xlu0 %v1807, 32
  %v2386 = vpop.permute.xlu0 %2385
  %2387 = vrot.lane.b32.xlu0 %v1808, 32
  %v2388 = vpop.permute.xlu0 %2387
  %2389 = vrot.lane.b32.xlu0 %v1809, 32
  %v2390 = vpop.permute.xlu0 %2389
  %2391 = vrot.lane.b32.xlu0 %v1810, 32
  %v2392 = vpop.permute.xlu0 %2391
  %2393 = vrot.lane.b32.xlu0 %v1811, 32
  %v2394 = vpop.permute.xlu0 %2393
  %2395 = vrot.lane.b32.xlu0 %v1812, 32
  %v2396 = vpop.permute.xlu0 %2395
  %2397 = vrot.lane.b32.xlu0 %v1813, 32
  %v2398 = vpop.permute.xlu0 %2397
  %2399 = vrot.lane.b32.xlu0 %v1814, 32
  %v2400 = vpop.permute.xlu0 %2399
  %2401 = vrot.lane.b32.xlu0 %v1815, 32
  %v2402 = vpop.permute.xlu0 %2401
  %2403 = vrot.lane.b32.xlu0 %v1816, 32
  %v2404 = vpop.permute.xlu0 %2403
  %2405 = vrot.lane.b32.xlu0 %v1817, 32
  %v2406 = vpop.permute.xlu0 %2405
  %2407 = vrot.lane.b32.xlu0 %v1818, 32
  %v2408 = vpop.permute.xlu0 %2407
  %2409 = vrot.lane.b32.xlu0 %v1819, 32
  %v2410 = vpop.permute.xlu0 %2409
  %2411 = vrot.lane.b32.xlu0 %v1820, 32
  %v2412 = vpop.permute.xlu0 %2411
  %2413 = vrot.lane.b32.xlu0 %v1821, 32
  %v2414 = vpop.permute.xlu0 %2413
  %2415 = vrot.lane.b32.xlu0 %v1822, 32
  %v2416 = vpop.permute.xlu0 %2415
  %2417 = vrot.lane.b32.xlu0 %v1823, 32
  %v2418 = vpop.permute.xlu0 %2417
  %2419 = vrot.lane.b32.xlu0 %v1824, 32
  %v2420 = vpop.permute.xlu0 %2419
  %2421 = vrot.lane.b32.xlu0 %v1825, 32
  %v2422 = vpop.permute.xlu0 %2421
  %2423 = vrot.lane.b32.xlu0 %v1826, 32
  %v2424 = vpop.permute.xlu0 %2423
  %2425 = vrot.lane.b32.xlu0 %v1827, 32
  %v2426 = vpop.permute.xlu0 %2425
  %2427 = vrot.lane.b32.xlu0 %v1828, 32
  %v2428 = vpop.permute.xlu0 %2427
  %2429 = vrot.lane.b32.xlu0 %v1829, 32
  %v2430 = vpop.permute.xlu0 %2429
  %2431 = vrot.lane.b32.xlu0 %v1830, 32
  %v2432 = vpop.permute.xlu0 %2431
  %2433 = vrot.lane.b32.xlu0 %v1831, 32
  %v2434 = vpop.permute.xlu0 %2433
  %2435 = vrot.lane.b32.xlu0 %v1832, 32
  %v2436 = vpop.permute.xlu0 %2435
  %2437 = vrot.lane.b32.xlu0 %v1833, 32
  %v2438 = vpop.permute.xlu0 %2437
  %2439 = vrot.lane.b32.xlu0 %v1834, 32
  %v2440 = vpop.permute.xlu0 %2439
  %2441 = vrot.lane.b32.xlu0 %v1835, 32
  %v2442 = vpop.permute.xlu0 %2441
  %2443 = vrot.lane.b32.xlu0 %v1836, 32
  %v2444 = vpop.permute.xlu0 %2443
  %2445 = vrot.lane.b32.xlu0 %v1837, 32
  %v2446 = vpop.permute.xlu0 %2445
  %2447 = vrot.lane.b32.xlu0 %v1838, 32
  %v2448 = vpop.permute.xlu0 %2447
  %2449 = vrot.lane.b32.xlu0 %v1839, 32
  %v2450 = vpop.permute.xlu0 %2449
  %2451 = vrot.lane.b32.xlu0 %v1840, 32
  %v2452 = vpop.permute.xlu0 %2451
  %2453 = vrot.lane.b32.xlu0 %v1841, 32
  %v2454 = vpop.permute.xlu0 %2453
  %2455 = vrot.lane.b32.xlu0 %v1842, 32
  %v2456 = vpop.permute.xlu0 %2455
  %2457 = vrot.lane.b32.xlu0 %v1843, 32
  %v2458 = vpop.permute.xlu0 %2457
  %2459 = vrot.lane.b32.xlu0 %v1844, 32
  %v2460 = vpop.permute.xlu0 %2459
  %2461 = vrot.lane.b32.xlu0 %v1845, 32
  %v2462 = vpop.permute.xlu0 %2461
  %2463 = vrot.lane.b32.xlu0 %v1846, 32
  %v2464 = vpop.permute.xlu0 %2463
  %2465 = vrot.lane.b32.xlu0 %v1847, 32
  %v2466 = vpop.permute.xlu0 %2465
  %2467 = vrot.lane.b32.xlu0 %v1848, 32
  %v2468 = vpop.permute.xlu0 %2467
  %2469 = vrot.lane.b32.xlu0 %v1849, 32
  %v2470 = vpop.permute.xlu0 %2469
  %2471 = vrot.lane.b32.xlu0 %v1850, 32
  %v2472 = vpop.permute.xlu0 %2471
  %2473 = vrot.lane.b32.xlu0 %v1851, 32
  %v2474 = vpop.permute.xlu0 %2473
  %2475 = vrot.lane.b32.xlu0 %v1852, 32
  %v2476 = vpop.permute.xlu0 %2475
  %2477 = vrot.lane.b32.xlu0 %v1853, 32
  %v2478 = vpop.permute.xlu0 %2477
  %2479 = vrot.lane.b32.xlu0 %v1854, 32
  %v2480 = vpop.permute.xlu0 %2479
  %2481 = vrot.lane.b32.xlu0 %v1855, 32
  %v2482 = vpop.permute.xlu0 %2481
  %2483 = vrot.lane.b32.xlu0 %v1856, 32
  %v2484 = vpop.permute.xlu0 %2483
  %2485 = vrot.lane.b32.xlu0 %v1857, 32
  %v2486 = vpop.permute.xlu0 %2485
  %2487 = vrot.lane.b32.xlu0 %v1858, 32
  %v2488 = vpop.permute.xlu0 %2487
  %2489 = vrot.lane.b32.xlu0 %v1859, 32
  %v2490 = vpop.permute.xlu0 %2489
  %2491 = vrot.lane.b32.xlu0 %v1860, 32
  %v2492 = vpop.permute.xlu0 %2491
  %2493 = vrot.lane.b32.xlu0 %v1861, 32
  %v2494 = vpop.permute.xlu0 %2493
  %2495 = vrot.lane.b32.xlu0 %v1862, 32
  %v2496 = vpop.permute.xlu0 %2495
  %2497 = vrot.lane.b32.xlu0 %v1863, 32
  %v2498 = vpop.permute.xlu0 %2497
  %2499 = vrot.lane.b32.xlu0 %v1864, 32
  %v2500 = vpop.permute.xlu0 %2499
  %2501 = vrot.lane.b32.xlu0 %v1865, 32
  %v2502 = vpop.permute.xlu0 %2501
  %2503 = vrot.lane.b32.xlu0 %v1866, 32
  %v2504 = vpop.permute.xlu0 %2503
  %2505 = vrot.lane.b32.xlu0 %v1867, 32
  %v2506 = vpop.permute.xlu0 %2505
  %2507 = vrot.lane.b32.xlu0 %v1868, 32
  %v2508 = vpop.permute.xlu0 %2507
  %2509 = vrot.lane.b32.xlu0 %v1869, 32
  %v2510 = vpop.permute.xlu0 %2509
  %2511 = vrot.lane.b32.xlu0 %v1870, 32
  %v2512 = vpop.permute.xlu0 %2511
  %2513 = vrot.lane.b32.xlu0 %v1871, 32
  %v2514 = vpop.permute.xlu0 %2513
  %2515 = vrot.lane.b32.xlu0 %v1872, 32
  %v2516 = vpop.permute.xlu0 %2515
  %2517 = vrot.lane.b32.xlu0 %v1873, 32
  %v2518 = vpop.permute.xlu0 %2517
  %2519 = vrot.lane.b32.xlu0 %v1874, 32
  %v2520 = vpop.permute.xlu0 %2519
  %2521 = vrot.lane.b32.xlu0 %v1875, 32
  %v2522 = vpop.permute.xlu0 %2521
  %2523 = vrot.lane.b32.xlu0 %v1876, 32
  %v2524 = vpop.permute.xlu0 %2523
  %2525 = vrot.lane.b32.xlu0 %v1877, 32
  %v2526 = vpop.permute.xlu0 %2525
  %2527 = vrot.lane.b32.xlu0 %v1878, 32
  %v2528 = vpop.permute.xlu0 %2527
  %2529 = vrot.lane.b32.xlu0 %v1879, 32
  %v2530 = vpop.permute.xlu0 %2529
  %2531 = vrot.lane.b32.xlu0 %v1880, 32
  %v2532 = vpop.permute.xlu0 %2531
  %2695 = vrot.lane.b32.xlu0 %v1881, 64
  %v2696 = vpop.permute.xlu0 %2695
  %2697 = vrot.lane.b32.xlu0 %v1882, 64
  %v2698 = vpop.permute.xlu0 %2697
  %2699 = vrot.lane.b32.xlu0 %v1883, 64
  %v2700 = vpop.permute.xlu0 %2699
  %2701 = vrot.lane.b32.xlu0 %v1884, 64
  %v2702 = vpop.permute.xlu0 %2701
  %2703 = vrot.lane.b32.xlu0 %v1885, 64
  %v2704 = vpop.permute.xlu0 %2703
  %2705 = vrot.lane.b32.xlu0 %v1886, 64
  %v2706 = vpop.permute.xlu0 %2705
  %2707 = vrot.lane.b32.xlu0 %v1887, 64
  %v2708 = vpop.permute.xlu0 %2707
  %2709 = vrot.lane.b32.xlu0 %v1888, 64
  %v2710 = vpop.permute.xlu0 %2709
  %2711 = vrot.lane.b32.xlu0 %v1889, 64
  %v2712 = vpop.permute.xlu0 %2711
  %2713 = vrot.lane.b32.xlu0 %v1890, 64
  %v2714 = vpop.permute.xlu0 %2713
  %2715 = vrot.lane.b32.xlu0 %v1891, 64
  %v2716 = vpop.permute.xlu0 %2715
  %2717 = vrot.lane.b32.xlu0 %v1892, 64
  %v2718 = vpop.permute.xlu0 %2717
  %2719 = vrot.lane.b32.xlu0 %v1893, 64
  %v2720 = vpop.permute.xlu0 %2719
  %2721 = vrot.lane.b32.xlu0 %v1894, 64
  %v2722 = vpop.permute.xlu0 %2721
  %2723 = vrot.lane.b32.xlu0 %v1895, 64
  %v2724 = vpop.permute.xlu0 %2723
  %2725 = vrot.lane.b32.xlu0 %v1896, 64
  %v2726 = vpop.permute.xlu0 %2725
  %2727 = vrot.lane.b32.xlu0 %v1897, 64
  %v2728 = vpop.permute.xlu0 %2727
  %2729 = vrot.lane.b32.xlu0 %v1898, 64
  %v2730 = vpop.permute.xlu0 %2729
  %2731 = vrot.lane.b32.xlu0 %v1899, 64
  %v2732 = vpop.permute.xlu0 %2731
  %2733 = vrot.lane.b32.xlu0 %v1900, 64
  %v2734 = vpop.permute.xlu0 %2733
  %2735 = vrot.lane.b32.xlu0 %v1901, 64
  %v2736 = vpop.permute.xlu0 %2735
  %2737 = vrot.lane.b32.xlu0 %v1902, 64
  %v2738 = vpop.permute.xlu0 %2737
  %2739 = vrot.lane.b32.xlu0 %v1903, 64
  %v2740 = vpop.permute.xlu0 %2739
  %2741 = vrot.lane.b32.xlu0 %v1904, 64
  %v2742 = vpop.permute.xlu0 %2741
  %2743 = vrot.lane.b32.xlu0 %v1905, 64
  %v2744 = vpop.permute.xlu0 %2743
  %2745 = vrot.lane.b32.xlu0 %v1906, 64
  %v2746 = vpop.permute.xlu0 %2745
  %2747 = vrot.lane.b32.xlu0 %v1907, 64
  %v2748 = vpop.permute.xlu0 %2747
  %2749 = vrot.lane.b32.xlu0 %v1908, 64
  %v2750 = vpop.permute.xlu0 %2749
  %2751 = vrot.lane.b32.xlu0 %v1909, 64
  %v2752 = vpop.permute.xlu0 %2751
  %2753 = vrot.lane.b32.xlu0 %v1910, 64
  %v2754 = vpop.permute.xlu0 %2753
  %2755 = vrot.lane.b32.xlu0 %v1911, 64
  %v2756 = vpop.permute.xlu0 %2755
  %2757 = vrot.lane.b32.xlu0 %v1912, 64
  %v2758 = vpop.permute.xlu0 %2757
  %2759 = vrot.lane.b32.xlu0 %v1913, 64
  %v2760 = vpop.permute.xlu0 %2759
  %2761 = vrot.lane.b32.xlu0 %v1914, 64
  %v2762 = vpop.permute.xlu0 %2761
  %2763 = vrot.lane.b32.xlu0 %v1915, 64
  %v2764 = vpop.permute.xlu0 %2763
  %2765 = vrot.lane.b32.xlu0 %v1916, 64
  %v2766 = vpop.permute.xlu0 %2765
  %2767 = vrot.lane.b32.xlu0 %v1917, 64
  %v2768 = vpop.permute.xlu0 %2767
  %2769 = vrot.lane.b32.xlu0 %v1918, 64
  %v2770 = vpop.permute.xlu0 %2769
  %2771 = vrot.lane.b32.xlu0 %v1919, 64
  %v2772 = vpop.permute.xlu0 %2771
  %2773 = vrot.lane.b32.xlu0 %v1920, 64
  %v2774 = vpop.permute.xlu0 %2773
  %2775 = vrot.lane.b32.xlu0 %v1921, 64
  %v2776 = vpop.permute.xlu0 %2775
  %2777 = vrot.lane.b32.xlu0 %v1922, 64
  %v2778 = vpop.permute.xlu0 %2777
  %2779 = vrot.lane.b32.xlu0 %v1923, 64
  %v2780 = vpop.permute.xlu0 %2779
  %2781 = vrot.lane.b32.xlu0 %v1924, 64
  %v2782 = vpop.permute.xlu0 %2781
  %2783 = vrot.lane.b32.xlu0 %v1925, 64
  %v2784 = vpop.permute.xlu0 %2783
  %2785 = vrot.lane.b32.xlu0 %v1926, 64
  %v2786 = vpop.permute.xlu0 %2785
  %2787 = vrot.lane.b32.xlu0 %v1927, 64
  %v2788 = vpop.permute.xlu0 %2787
  %2789 = vrot.lane.b32.xlu0 %v1928, 64
  %v2790 = vpop.permute.xlu0 %2789
  %2791 = vrot.lane.b32.xlu0 %v1929, 64
  %v2792 = vpop.permute.xlu0 %2791
  %2793 = vrot.lane.b32.xlu0 %v1930, 64
  %v2794 = vpop.permute.xlu0 %2793
  %2795 = vrot.lane.b32.xlu0 %v1931, 64
  %v2796 = vpop.permute.xlu0 %2795
  %2797 = vrot.lane.b32.xlu0 %v1932, 64
  %v2798 = vpop.permute.xlu0 %2797
  %2799 = vrot.lane.b32.xlu0 %v1933, 64
  %v2800 = vpop.permute.xlu0 %2799
  %2801 = vrot.lane.b32.xlu0 %v1934, 64
  %v2802 = vpop.permute.xlu0 %2801
  %2803 = vrot.lane.b32.xlu0 %v1935, 64
  %v2804 = vpop.permute.xlu0 %2803
  %2805 = vrot.lane.b32.xlu0 %v1936, 64
  %v2806 = vpop.permute.xlu0 %2805
  %2807 = vrot.lane.b32.xlu0 %v1937, 64
  %v2808 = vpop.permute.xlu0 %2807
  %2809 = vrot.lane.b32.xlu0 %v1938, 64
  %v2810 = vpop.permute.xlu0 %2809
  %2811 = vrot.lane.b32.xlu0 %v1939, 64
  %v2812 = vpop.permute.xlu0 %2811
  %2813 = vrot.lane.b32.xlu0 %v1940, 64
  %v2814 = vpop.permute.xlu0 %2813
  %2815 = vrot.lane.b32.xlu0 %v1941, 64
  %v2816 = vpop.permute.xlu0 %2815
  %2817 = vrot.lane.b32.xlu0 %v1942, 64
  %v2818 = vpop.permute.xlu0 %2817
  %2819 = vrot.lane.b32.xlu0 %v1943, 64
  %v2820 = vpop.permute.xlu0 %2819
  %2821 = vrot.lane.b32.xlu0 %v1944, 64
  %v2822 = vpop.permute.xlu0 %2821
  %2823 = vrot.lane.b32.xlu0 %v1945, 64
  %v2824 = vpop.permute.xlu0 %2823
  %2825 = vrot.lane.b32.xlu0 %v1946, 64
  %v2826 = vpop.permute.xlu0 %2825
  %2827 = vrot.lane.b32.xlu0 %v1947, 64
  %v2828 = vpop.permute.xlu0 %2827
  %2829 = vrot.lane.b32.xlu0 %v1948, 64
  %v2830 = vpop.permute.xlu0 %2829
  %2831 = vrot.lane.b32.xlu0 %v1949, 64
  %v2832 = vpop.permute.xlu0 %2831
  %2833 = vrot.lane.b32.xlu0 %v1950, 64
  %v2834 = vpop.permute.xlu0 %2833
  %2835 = vrot.lane.b32.xlu0 %v1951, 64
  %v2836 = vpop.permute.xlu0 %2835
  %2837 = vrot.lane.b32.xlu0 %v1952, 64
  %v2838 = vpop.permute.xlu0 %2837
  %2839 = vrot.lane.b32.xlu0 %v1953, 64
  %v2840 = vpop.permute.xlu0 %2839
  %2841 = vrot.lane.b32.xlu0 %v1954, 64
  %v2842 = vpop.permute.xlu0 %2841
  %2843 = vrot.lane.b32.xlu0 %v1955, 64
  %v2844 = vpop.permute.xlu0 %2843
  %2845 = vrot.lane.b32.xlu0 %v1956, 64
  %v2846 = vpop.permute.xlu0 %2845
  %2847 = vrot.lane.b32.xlu0 %v1957, 64
  %v2848 = vpop.permute.xlu0 %2847
  %2849 = vrot.lane.b32.xlu0 %v1958, 64
  %v2850 = vpop.permute.xlu0 %2849
  %2851 = vrot.lane.b32.xlu0 %v1959, 64
  %v2852 = vpop.permute.xlu0 %2851
  %2853 = vrot.lane.b32.xlu0 %v1960, 64
  %v2854 = vpop.permute.xlu0 %2853
  %2855 = vrot.lane.b32.xlu0 %v1961, 64
  %v2856 = vpop.permute.xlu0 %2855
  %2940 = vrot.lane.b32.xlu0 %v1883, 96
  %v2941 = vpop.permute.xlu0 %2940
  %2942 = vrot.lane.b32.xlu0 %v1884, 96
  %v2943 = vpop.permute.xlu0 %2942
  %2944 = vrot.lane.b32.xlu0 %v1885, 96
  %v2945 = vpop.permute.xlu0 %2944
  %2946 = vrot.lane.b32.xlu0 %v1886, 96
  %v2947 = vpop.permute.xlu0 %2946
  %2948 = vrot.lane.b32.xlu0 %v1887, 96
  %v2949 = vpop.permute.xlu0 %2948
  %2950 = vrot.lane.b32.xlu0 %v1888, 96
  %v2951 = vpop.permute.xlu0 %2950
  %2952 = vrot.lane.b32.xlu0 %v1889, 96
  %v2953 = vpop.permute.xlu0 %2952
  %2954 = vrot.lane.b32.xlu0 %v1890, 96
  %v2955 = vpop.permute.xlu0 %2954
  %2956 = vrot.lane.b32.xlu0 %v1891, 96
  %v2957 = vpop.permute.xlu0 %2956
  %2958 = vrot.lane.b32.xlu0 %v1892, 96
  %v2959 = vpop.permute.xlu0 %2958
  %2960 = vrot.lane.b32.xlu0 %v1893, 96
  %v2961 = vpop.permute.xlu0 %2960
  %2962 = vrot.lane.b32.xlu0 %v1894, 96
  %v2963 = vpop.permute.xlu0 %2962
  %2964 = vrot.lane.b32.xlu0 %v1895, 96
  %v2965 = vpop.permute.xlu0 %2964
  %2966 = vrot.lane.b32.xlu0 %v1896, 96
  %v2967 = vpop.permute.xlu0 %2966
  %2968 = vrot.lane.b32.xlu0 %v1897, 96
  %v2969 = vpop.permute.xlu0 %2968
  %2970 = vrot.lane.b32.xlu0 %v1898, 96
  %v2971 = vpop.permute.xlu0 %2970
  %2972 = vrot.lane.b32.xlu0 %v1899, 96
  %v2973 = vpop.permute.xlu0 %2972
  %2974 = vrot.lane.b32.xlu0 %v1900, 96
  %v2975 = vpop.permute.xlu0 %2974
  %2976 = vrot.lane.b32.xlu0 %v1901, 96
  %v2977 = vpop.permute.xlu0 %2976
  %2978 = vrot.lane.b32.xlu0 %v1902, 96
  %v2979 = vpop.permute.xlu0 %2978
  %2980 = vrot.lane.b32.xlu0 %v1903, 96
  %v2981 = vpop.permute.xlu0 %2980
  %2982 = vrot.lane.b32.xlu0 %v1904, 96
  %v2983 = vpop.permute.xlu0 %2982
  %2984 = vrot.lane.b32.xlu0 %v1905, 96
  %v2985 = vpop.permute.xlu0 %2984
  %2986 = vrot.lane.b32.xlu0 %v1906, 96
  %v2987 = vpop.permute.xlu0 %2986
  %2988 = vrot.lane.b32.xlu0 %v1907, 96
  %v2989 = vpop.permute.xlu0 %2988
  %2990 = vrot.lane.b32.xlu0 %v1908, 96
  %v2991 = vpop.permute.xlu0 %2990
  %2992 = vrot.lane.b32.xlu0 %v1909, 96
  %v2993 = vpop.permute.xlu0 %2992
  %2994 = vrot.lane.b32.xlu0 %v1910, 96
  %v2995 = vpop.permute.xlu0 %2994
  %2996 = vrot.lane.b32.xlu0 %v1911, 96
  %v2997 = vpop.permute.xlu0 %2996
  %2998 = vrot.lane.b32.xlu0 %v1912, 96
  %v2999 = vpop.permute.xlu0 %2998
  %3000 = vrot.lane.b32.xlu0 %v1913, 96
  %v3001 = vpop.permute.xlu0 %3000
  %3002 = vrot.lane.b32.xlu0 %v1914, 96
  %v3003 = vpop.permute.xlu0 %3002
  %3004 = vrot.lane.b32.xlu0 %v1915, 96
  %v3005 = vpop.permute.xlu0 %3004
  %3006 = vrot.lane.b32.xlu0 %v1916, 96
  %v3007 = vpop.permute.xlu0 %3006
  %3008 = vrot.lane.b32.xlu0 %v1917, 96
  %v3009 = vpop.permute.xlu0 %3008
  %3010 = vrot.lane.b32.xlu0 %v1918, 96
  %v3011 = vpop.permute.xlu0 %3010
  %3012 = vrot.lane.b32.xlu0 %v1919, 96
  %v3013 = vpop.permute.xlu0 %3012
  %3014 = vrot.lane.b32.xlu0 %v1920, 96
  %v3015 = vpop.permute.xlu0 %3014
  %3016 = vrot.lane.b32.xlu0 %v1921, 96
  %v3017 = vpop.permute.xlu0 %3016
  %3018 = vrot.lane.b32.xlu0 %v1922, 96
  %v3019 = vpop.permute.xlu0 %3018
  %3020 = vrot.lane.b32.xlu0 %v1923, 96
  %v3021 = vpop.permute.xlu0 %3020
  %3022 = vrot.lane.b32.xlu0 %v1924, 96
  %v3023 = vpop.permute.xlu0 %3022
  %3024 = vrot.lane.b32.xlu0 %v1925, 96
  %v3025 = vpop.permute.xlu0 %3024
  %3026 = vrot.lane.b32.xlu0 %v1926, 96
  %v3027 = vpop.permute.xlu0 %3026
  %3028 = vrot.lane.b32.xlu0 %v1927, 96
  %v3029 = vpop.permute.xlu0 %3028
  %3030 = vrot.lane.b32.xlu0 %v1928, 96
  %v3031 = vpop.permute.xlu0 %3030
  %3032 = vrot.lane.b32.xlu0 %v1929, 96
  %v3033 = vpop.permute.xlu0 %3032
  %3034 = vrot.lane.b32.xlu0 %v1930, 96
  %v3035 = vpop.permute.xlu0 %3034
  %3036 = vrot.lane.b32.xlu0 %v1931, 96
  %v3037 = vpop.permute.xlu0 %3036
  %3038 = vrot.lane.b32.xlu0 %v1932, 96
  %v3039 = vpop.permute.xlu0 %3038
  %3040 = vrot.lane.b32.xlu0 %v1933, 96
  %v3041 = vpop.permute.xlu0 %3040
  %3042 = vrot.lane.b32.xlu0 %v1934, 96
  %v3043 = vpop.permute.xlu0 %3042
  %3044 = vrot.lane.b32.xlu0 %v1935, 96
  %v3045 = vpop.permute.xlu0 %3044
  %3046 = vrot.lane.b32.xlu0 %v1936, 96
  %v3047 = vpop.permute.xlu0 %3046
  %3048 = vrot.lane.b32.xlu0 %v1937, 96
  %v3049 = vpop.permute.xlu0 %3048
  %3050 = vrot.lane.b32.xlu0 %v1938, 96
  %v3051 = vpop.permute.xlu0 %3050
  %3052 = vrot.lane.b32.xlu0 %v1939, 96
  %v3053 = vpop.permute.xlu0 %3052
  %3054 = vrot.lane.b32.xlu0 %v1940, 96
  %v3055 = vpop.permute.xlu0 %3054
  %3056 = vrot.lane.b32.xlu0 %v1941, 96
  %v3057 = vpop.permute.xlu0 %3056
  %3058 = vrot.lane.b32.xlu0 %v1942, 96
  %v3059 = vpop.permute.xlu0 %3058
  %3060 = vrot.lane.b32.xlu0 %v1943, 96
  %v3061 = vpop.permute.xlu0 %3060
  %3062 = vrot.lane.b32.xlu0 %v1944, 96
  %v3063 = vpop.permute.xlu0 %3062
  %3064 = vrot.lane.b32.xlu0 %v1945, 96
  %v3065 = vpop.permute.xlu0 %3064
  %3066 = vrot.lane.b32.xlu0 %v1946, 96
  %v3067 = vpop.permute.xlu0 %3066
  %3068 = vrot.lane.b32.xlu0 %v1947, 96
  %v3069 = vpop.permute.xlu0 %3068
  %3070 = vrot.lane.b32.xlu0 %v1948, 96
  %v3071 = vpop.permute.xlu0 %3070
  %3072 = vrot.lane.b32.xlu0 %v1949, 96
  %v3073 = vpop.permute.xlu0 %3072
  %3074 = vrot.lane.b32.xlu0 %v1950, 96
  %v3075 = vpop.permute.xlu0 %3074
  %3076 = vrot.lane.b32.xlu0 %v1951, 96
  %v3077 = vpop.permute.xlu0 %3076
  %3078 = vrot.lane.b32.xlu0 %v1952, 96
  %v3079 = vpop.permute.xlu0 %3078
  %3080 = vrot.lane.b32.xlu0 %v1953, 96
  %v3081 = vpop.permute.xlu0 %3080
  %3082 = vrot.lane.b32.xlu0 %v1954, 96
  %v3083 = vpop.permute.xlu0 %3082
  %3084 = vrot.lane.b32.xlu0 %v1955, 96
  %v3085 = vpop.permute.xlu0 %3084
  %3086 = vrot.lane.b32.xlu0 %v1956, 96
  %v3087 = vpop.permute.xlu0 %3086
  %3088 = vrot.lane.b32.xlu0 %v1957, 96
  %v3089 = vpop.permute.xlu0 %3088
  %3090 = vrot.lane.b32.xlu0 %v1958, 96
  %v3091 = vpop.permute.xlu0 %3090
  %3092 = vrot.lane.b32.xlu0 %v1959, 96
  %v3093 = vpop.permute.xlu0 %3092
  %3094 = vrot.lane.b32.xlu0 %v1960, 96
  %v3095 = vpop.permute.xlu0 %3094
  %3096 = vrot.lane.b32.xlu0 %v1961, 96
  %v3097 = vpop.permute.xlu0 %3096
  %3098 = vrot.lane.b32.xlu0 %v1962, 96
  %v3099 = vpop.permute.xlu0 %3098
  %3100 = vrot.lane.b32.xlu0 %v1963, 96
  %v3101 = vpop.permute.xlu0 %3100
  %3264 = vrot.lane.b32.xlu0 %v2045, 32
  %v3265 = vpop.permute.xlu0 %3264
  %3266 = vrot.lane.b32.xlu0 %v2046, 32
  %v3267 = vpop.permute.xlu0 %3266
  %3268 = vrot.lane.b32.xlu0 %v2047, 32
  %v3269 = vpop.permute.xlu0 %3268
  %3270 = vrot.lane.b32.xlu0 %v2048, 32
  %v3271 = vpop.permute.xlu0 %3270
  %3272 = vrot.lane.b32.xlu0 %v2049, 32
  %v3273 = vpop.permute.xlu0 %3272
  %3274 = vrot.lane.b32.xlu0 %v2050, 32
  %v3275 = vpop.permute.xlu0 %3274
  %3276 = vrot.lane.b32.xlu0 %v2051, 32
  %v3277 = vpop.permute.xlu0 %3276
  %3278 = vrot.lane.b32.xlu0 %v2052, 32
  %v3279 = vpop.permute.xlu0 %3278
  %3280 = vrot.lane.b32.xlu0 %v2053, 32
  %v3281 = vpop.permute.xlu0 %3280
  %3282 = vrot.lane.b32.xlu0 %v2054, 32
  %v3283 = vpop.permute.xlu0 %3282
  %3284 = vrot.lane.b32.xlu0 %v2055, 32
  %v3285 = vpop.permute.xlu0 %3284
  %3286 = vrot.lane.b32.xlu0 %v2056, 32
  %v3287 = vpop.permute.xlu0 %3286
  %3288 = vrot.lane.b32.xlu0 %v2057, 32
  %v3289 = vpop.permute.xlu0 %3288
  %3290 = vrot.lane.b32.xlu0 %v2058, 32
  %v3291 = vpop.permute.xlu0 %3290
  %3292 = vrot.lane.b32.xlu0 %v2059, 32
  %v3293 = vpop.permute.xlu0 %3292
  %3294 = vrot.lane.b32.xlu0 %v2060, 32
  %v3295 = vpop.permute.xlu0 %3294
  %3296 = vrot.lane.b32.xlu0 %v2061, 32
  %v3297 = vpop.permute.xlu0 %3296
  %3298 = vrot.lane.b32.xlu0 %v2062, 32
  %v3299 = vpop.permute.xlu0 %3298
  %3300 = vrot.lane.b32.xlu0 %v2063, 32
  %v3301 = vpop.permute.xlu0 %3300
  %3302 = vrot.lane.b32.xlu0 %v2064, 32
  %v3303 = vpop.permute.xlu0 %3302
  %3304 = vrot.lane.b32.xlu0 %v2065, 32
  %v3305 = vpop.permute.xlu0 %3304
  %3306 = vrot.lane.b32.xlu0 %v2066, 32
  %v3307 = vpop.permute.xlu0 %3306
  %3308 = vrot.lane.b32.xlu0 %v2067, 32
  %v3309 = vpop.permute.xlu0 %3308
  %3310 = vrot.lane.b32.xlu0 %v2068, 32
  %v3311 = vpop.permute.xlu0 %3310
  %3312 = vrot.lane.b32.xlu0 %v2069, 32
  %v3313 = vpop.permute.xlu0 %3312
  %3314 = vrot.lane.b32.xlu0 %v2070, 32
  %v3315 = vpop.permute.xlu0 %3314
  %3316 = vrot.lane.b32.xlu0 %v2071, 32
  %v3317 = vpop.permute.xlu0 %3316
  %3318 = vrot.lane.b32.xlu0 %v2072, 32
  %v3319 = vpop.permute.xlu0 %3318
  %3320 = vrot.lane.b32.xlu0 %v2073, 32
  %v3321 = vpop.permute.xlu0 %3320
  %3322 = vrot.lane.b32.xlu0 %v2074, 32
  %v3323 = vpop.permute.xlu0 %3322
  %3324 = vrot.lane.b32.xlu0 %v2075, 32
  %v3325 = vpop.permute.xlu0 %3324
  %3326 = vrot.lane.b32.xlu0 %v2076, 32
  %v3327 = vpop.permute.xlu0 %3326
  %3328 = vrot.lane.b32.xlu0 %v2077, 32
  %v3329 = vpop.permute.xlu0 %3328
  %3330 = vrot.lane.b32.xlu0 %v2078, 32
  %v3331 = vpop.permute.xlu0 %3330
  %3332 = vrot.lane.b32.xlu0 %v2079, 32
  %v3333 = vpop.permute.xlu0 %3332
  %3334 = vrot.lane.b32.xlu0 %v2080, 32
  %v3335 = vpop.permute.xlu0 %3334
  %3336 = vrot.lane.b32.xlu0 %v2081, 32
  %v3337 = vpop.permute.xlu0 %3336
  %3338 = vrot.lane.b32.xlu0 %v2082, 32
  %v3339 = vpop.permute.xlu0 %3338
  %3340 = vrot.lane.b32.xlu0 %v2083, 32
  %v3341 = vpop.permute.xlu0 %3340
  %3342 = vrot.lane.b32.xlu0 %v2084, 32
  %v3343 = vpop.permute.xlu0 %3342
  %3344 = vrot.lane.b32.xlu0 %v2085, 32
  %v3345 = vpop.permute.xlu0 %3344
  %3346 = vrot.lane.b32.xlu0 %v2086, 32
  %v3347 = vpop.permute.xlu0 %3346
  %3348 = vrot.lane.b32.xlu0 %v2087, 32
  %v3349 = vpop.permute.xlu0 %3348
  %3350 = vrot.lane.b32.xlu0 %v2088, 32
  %v3351 = vpop.permute.xlu0 %3350
  %3352 = vrot.lane.b32.xlu0 %v2089, 32
  %v3353 = vpop.permute.xlu0 %3352
  %3354 = vrot.lane.b32.xlu0 %v2090, 32
  %v3355 = vpop.permute.xlu0 %3354
  %3356 = vrot.lane.b32.xlu0 %v2091, 32
  %v3357 = vpop.permute.xlu0 %3356
  %3358 = vrot.lane.b32.xlu0 %v2092, 32
  %v3359 = vpop.permute.xlu0 %3358
  %3360 = vrot.lane.b32.xlu0 %v2093, 32
  %v3361 = vpop.permute.xlu0 %3360
  %3362 = vrot.lane.b32.xlu0 %v2094, 32
  %v3363 = vpop.permute.xlu0 %3362
  %3364 = vrot.lane.b32.xlu0 %v2095, 32
  %v3365 = vpop.permute.xlu0 %3364
  %3366 = vrot.lane.b32.xlu0 %v2096, 32
  %v3367 = vpop.permute.xlu0 %3366
  %3368 = vrot.lane.b32.xlu0 %v2097, 32
  %v3369 = vpop.permute.xlu0 %3368
  %3370 = vrot.lane.b32.xlu0 %v2098, 32
  %v3371 = vpop.permute.xlu0 %3370
  %3372 = vrot.lane.b32.xlu0 %v2099, 32
  %v3373 = vpop.permute.xlu0 %3372
  %3374 = vrot.lane.b32.xlu0 %v2100, 32
  %v3375 = vpop.permute.xlu0 %3374
  %3376 = vrot.lane.b32.xlu0 %v2101, 32
  %v3377 = vpop.permute.xlu0 %3376
  %3378 = vrot.lane.b32.xlu0 %v2102, 32
  %v3379 = vpop.permute.xlu0 %3378
  %3380 = vrot.lane.b32.xlu0 %v2103, 32
  %v3381 = vpop.permute.xlu0 %3380
  %3382 = vrot.lane.b32.xlu0 %v2104, 32
  %v3383 = vpop.permute.xlu0 %3382
  %3384 = vrot.lane.b32.xlu0 %v2105, 32
  %v3385 = vpop.permute.xlu0 %3384
  %3386 = vrot.lane.b32.xlu0 %v2106, 32
  %v3387 = vpop.permute.xlu0 %3386
  %3388 = vrot.lane.b32.xlu0 %v2107, 32
  %v3389 = vpop.permute.xlu0 %3388
  %3390 = vrot.lane.b32.xlu0 %v2108, 32
  %v3391 = vpop.permute.xlu0 %3390
  %3392 = vrot.lane.b32.xlu0 %v2109, 32
  %v3393 = vpop.permute.xlu0 %3392
  %3394 = vrot.lane.b32.xlu0 %v2110, 32
  %v3395 = vpop.permute.xlu0 %3394
  %3396 = vrot.lane.b32.xlu0 %v2111, 32
  %v3397 = vpop.permute.xlu0 %3396
  %3398 = vrot.lane.b32.xlu0 %v2112, 32
  %v3399 = vpop.permute.xlu0 %3398
  %3400 = vrot.lane.b32.xlu0 %v2113, 32
  %v3401 = vpop.permute.xlu0 %3400
  %3402 = vrot.lane.b32.xlu0 %v2114, 32
  %v3403 = vpop.permute.xlu0 %3402
  %3404 = vrot.lane.b32.xlu0 %v2115, 32
  %v3405 = vpop.permute.xlu0 %3404
  %3406 = vrot.lane.b32.xlu0 %v2116, 32
  %v3407 = vpop.permute.xlu0 %3406
  %3408 = vrot.lane.b32.xlu0 %v2117, 32
  %v3409 = vpop.permute.xlu0 %3408
  %3410 = vrot.lane.b32.xlu0 %v2118, 32
  %v3411 = vpop.permute.xlu0 %3410
  %3412 = vrot.lane.b32.xlu0 %v2119, 32
  %v3413 = vpop.permute.xlu0 %3412
  %3414 = vrot.lane.b32.xlu0 %v2120, 32
  %v3415 = vpop.permute.xlu0 %3414
  %3416 = vrot.lane.b32.xlu0 %v2121, 32
  %v3417 = vpop.permute.xlu0 %3416
  %3418 = vrot.lane.b32.xlu0 %v2122, 32
  %v3419 = vpop.permute.xlu0 %3418
  %3420 = vrot.lane.b32.xlu0 %v2123, 32
  %v3421 = vpop.permute.xlu0 %3420
  %3422 = vrot.lane.b32.xlu0 %v2124, 32
  %v3423 = vpop.permute.xlu0 %3422
  %3424 = vrot.lane.b32.xlu0 %v2125, 32
  %v3425 = vpop.permute.xlu0 %3424
  %3509 = vrot.lane.b32.xlu0 %v2047, 64
  %v3510 = vpop.permute.xlu0 %3509
  %3511 = vrot.lane.b32.xlu0 %v2048, 64
  %v3512 = vpop.permute.xlu0 %3511
  %3513 = vrot.lane.b32.xlu0 %v2049, 64
  %v3514 = vpop.permute.xlu0 %3513
  %3515 = vrot.lane.b32.xlu0 %v2050, 64
  %v3516 = vpop.permute.xlu0 %3515
  %3517 = vrot.lane.b32.xlu0 %v2051, 64
  %v3518 = vpop.permute.xlu0 %3517
  %3519 = vrot.lane.b32.xlu0 %v2052, 64
  %v3520 = vpop.permute.xlu0 %3519
  %3521 = vrot.lane.b32.xlu0 %v2053, 64
  %v3522 = vpop.permute.xlu0 %3521
  %3523 = vrot.lane.b32.xlu0 %v2054, 64
  %v3524 = vpop.permute.xlu0 %3523
  %3525 = vrot.lane.b32.xlu0 %v2055, 64
  %v3526 = vpop.permute.xlu0 %3525
  %3527 = vrot.lane.b32.xlu0 %v2056, 64
  %v3528 = vpop.permute.xlu0 %3527
  %3529 = vrot.lane.b32.xlu0 %v2057, 64
  %v3530 = vpop.permute.xlu0 %3529
  %3531 = vrot.lane.b32.xlu0 %v2058, 64
  %v3532 = vpop.permute.xlu0 %3531
  %3533 = vrot.lane.b32.xlu0 %v2059, 64
  %v3534 = vpop.permute.xlu0 %3533
  %3535 = vrot.lane.b32.xlu0 %v2060, 64
  %v3536 = vpop.permute.xlu0 %3535
  %3537 = vrot.lane.b32.xlu0 %v2061, 64
  %v3538 = vpop.permute.xlu0 %3537
  %3539 = vrot.lane.b32.xlu0 %v2062, 64
  %v3540 = vpop.permute.xlu0 %3539
  %3541 = vrot.lane.b32.xlu0 %v2063, 64
  %v3542 = vpop.permute.xlu0 %3541
  %3543 = vrot.lane.b32.xlu0 %v2064, 64
  %v3544 = vpop.permute.xlu0 %3543
  %3545 = vrot.lane.b32.xlu0 %v2065, 64
  %v3546 = vpop.permute.xlu0 %3545
  %3547 = vrot.lane.b32.xlu0 %v2066, 64
  %v3548 = vpop.permute.xlu0 %3547
  %3549 = vrot.lane.b32.xlu0 %v2067, 64
  %v3550 = vpop.permute.xlu0 %3549
  %3551 = vrot.lane.b32.xlu0 %v2068, 64
  %v3552 = vpop.permute.xlu0 %3551
  %3553 = vrot.lane.b32.xlu0 %v2069, 64
  %v3554 = vpop.permute.xlu0 %3553
  %3555 = vrot.lane.b32.xlu0 %v2070, 64
  %v3556 = vpop.permute.xlu0 %3555
  %3557 = vrot.lane.b32.xlu0 %v2071, 64
  %v3558 = vpop.permute.xlu0 %3557
  %3559 = vrot.lane.b32.xlu0 %v2072, 64
  %v3560 = vpop.permute.xlu0 %3559
  %3561 = vrot.lane.b32.xlu0 %v2073, 64
  %v3562 = vpop.permute.xlu0 %3561
  %3563 = vrot.lane.b32.xlu0 %v2074, 64
  %v3564 = vpop.permute.xlu0 %3563
  %3565 = vrot.lane.b32.xlu0 %v2075, 64
  %v3566 = vpop.permute.xlu0 %3565
  %3567 = vrot.lane.b32.xlu0 %v2076, 64
  %v3568 = vpop.permute.xlu0 %3567
  %3569 = vrot.lane.b32.xlu0 %v2077, 64
  %v3570 = vpop.permute.xlu0 %3569
  %3571 = vrot.lane.b32.xlu0 %v2078, 64
  %v3572 = vpop.permute.xlu0 %3571
  %3573 = vrot.lane.b32.xlu0 %v2079, 64
  %v3574 = vpop.permute.xlu0 %3573
  %3575 = vrot.lane.b32.xlu0 %v2080, 64
  %v3576 = vpop.permute.xlu0 %3575
  %3577 = vrot.lane.b32.xlu0 %v2081, 64
  %v3578 = vpop.permute.xlu0 %3577
  %3579 = vrot.lane.b32.xlu0 %v2082, 64
  %v3580 = vpop.permute.xlu0 %3579
  %3581 = vrot.lane.b32.xlu0 %v2083, 64
  %v3582 = vpop.permute.xlu0 %3581
  %3583 = vrot.lane.b32.xlu0 %v2084, 64
  %v3584 = vpop.permute.xlu0 %3583
  %3585 = vrot.lane.b32.xlu0 %v2085, 64
  %v3586 = vpop.permute.xlu0 %3585
  %3587 = vrot.lane.b32.xlu0 %v2086, 64
  %v3588 = vpop.permute.xlu0 %3587
  %3589 = vrot.lane.b32.xlu0 %v2087, 64
  %v3590 = vpop.permute.xlu0 %3589
  %3591 = vrot.lane.b32.xlu0 %v2088, 64
  %v3592 = vpop.permute.xlu0 %3591
  %3593 = vrot.lane.b32.xlu0 %v2089, 64
  %v3594 = vpop.permute.xlu0 %3593
  %3595 = vrot.lane.b32.xlu0 %v2090, 64
  %v3596 = vpop.permute.xlu0 %3595
  %3597 = vrot.lane.b32.xlu0 %v2091, 64
  %v3598 = vpop.permute.xlu0 %3597
  %3599 = vrot.lane.b32.xlu0 %v2092, 64
  %v3600 = vpop.permute.xlu0 %3599
  %3601 = vrot.lane.b32.xlu0 %v2093, 64
  %v3602 = vpop.permute.xlu0 %3601
  %3603 = vrot.lane.b32.xlu0 %v2094, 64
  %v3604 = vpop.permute.xlu0 %3603
  %3605 = vrot.lane.b32.xlu0 %v2095, 64
  %v3606 = vpop.permute.xlu0 %3605
  %3607 = vrot.lane.b32.xlu0 %v2096, 64
  %v3608 = vpop.permute.xlu0 %3607
  %3609 = vrot.lane.b32.xlu0 %v2097, 64
  %v3610 = vpop.permute.xlu0 %3609
  %3611 = vrot.lane.b32.xlu0 %v2098, 64
  %v3612 = vpop.permute.xlu0 %3611
  %3613 = vrot.lane.b32.xlu0 %v2099, 64
  %v3614 = vpop.permute.xlu0 %3613
  %3615 = vrot.lane.b32.xlu0 %v2100, 64
  %v3616 = vpop.permute.xlu0 %3615
  %3617 = vrot.lane.b32.xlu0 %v2101, 64
  %v3618 = vpop.permute.xlu0 %3617
  %3619 = vrot.lane.b32.xlu0 %v2102, 64
  %v3620 = vpop.permute.xlu0 %3619
  %3621 = vrot.lane.b32.xlu0 %v2103, 64
  %v3622 = vpop.permute.xlu0 %3621
  %3623 = vrot.lane.b32.xlu0 %v2104, 64
  %v3624 = vpop.permute.xlu0 %3623
  %3625 = vrot.lane.b32.xlu0 %v2105, 64
  %v3626 = vpop.permute.xlu0 %3625
  %3627 = vrot.lane.b32.xlu0 %v2106, 64
  %v3628 = vpop.permute.xlu0 %3627
  %3629 = vrot.lane.b32.xlu0 %v2107, 64
  %v3630 = vpop.permute.xlu0 %3629
  %3631 = vrot.lane.b32.xlu0 %v2108, 64
  %v3632 = vpop.permute.xlu0 %3631
  %3633 = vrot.lane.b32.xlu0 %v2109, 64
  %v3634 = vpop.permute.xlu0 %3633
  %3635 = vrot.lane.b32.xlu0 %v2110, 64
  %v3636 = vpop.permute.xlu0 %3635
  %3637 = vrot.lane.b32.xlu0 %v2111, 64
  %v3638 = vpop.permute.xlu0 %3637
  %3639 = vrot.lane.b32.xlu0 %v2112, 64
  %v3640 = vpop.permute.xlu0 %3639
  %3641 = vrot.lane.b32.xlu0 %v2113, 64
  %v3642 = vpop.permute.xlu0 %3641
  %3643 = vrot.lane.b32.xlu0 %v2114, 64
  %v3644 = vpop.permute.xlu0 %3643
  %3645 = vrot.lane.b32.xlu0 %v2115, 64
  %v3646 = vpop.permute.xlu0 %3645
  %3647 = vrot.lane.b32.xlu0 %v2116, 64
  %v3648 = vpop.permute.xlu0 %3647
  %3649 = vrot.lane.b32.xlu0 %v2117, 64
  %v3650 = vpop.permute.xlu0 %3649
  %3651 = vrot.lane.b32.xlu0 %v2118, 64
  %v3652 = vpop.permute.xlu0 %3651
  %3653 = vrot.lane.b32.xlu0 %v2119, 64
  %v3654 = vpop.permute.xlu0 %3653
  %3655 = vrot.lane.b32.xlu0 %v2120, 64
  %v3656 = vpop.permute.xlu0 %3655
  %3657 = vrot.lane.b32.xlu0 %v2121, 64
  %v3658 = vpop.permute.xlu0 %3657
  %3659 = vrot.lane.b32.xlu0 %v2122, 64
  %v3660 = vpop.permute.xlu0 %3659
  %3661 = vrot.lane.b32.xlu0 %v2123, 64
  %v3662 = vpop.permute.xlu0 %3661
  %3663 = vrot.lane.b32.xlu0 %v2124, 64
  %v3664 = vpop.permute.xlu0 %3663
  %3665 = vrot.lane.b32.xlu0 %v2125, 64
  %v3666 = vpop.permute.xlu0 %3665
  %3667 = vrot.lane.b32.xlu0 %v2126, 64
  %v3668 = vpop.permute.xlu0 %3667
  %3669 = vrot.lane.b32.xlu0 %v2127, 64
  %v3670 = vpop.permute.xlu0 %3669
  %3833 = vrot.lane.b32.xlu0 %v2128, 96
  %v3834 = vpop.permute.xlu0 %3833
  %3835 = vrot.lane.b32.xlu0 %v2129, 96
  %v3836 = vpop.permute.xlu0 %3835
  %3837 = vrot.lane.b32.xlu0 %v2130, 96
  %v3838 = vpop.permute.xlu0 %3837
  %3839 = vrot.lane.b32.xlu0 %v2131, 96
  %v3840 = vpop.permute.xlu0 %3839
  %3841 = vrot.lane.b32.xlu0 %v2132, 96
  %v3842 = vpop.permute.xlu0 %3841
  %3843 = vrot.lane.b32.xlu0 %v2133, 96
  %v3844 = vpop.permute.xlu0 %3843
  %3845 = vrot.lane.b32.xlu0 %v2134, 96
  %v3846 = vpop.permute.xlu0 %3845
  %3847 = vrot.lane.b32.xlu0 %v2135, 96
  %v3848 = vpop.permute.xlu0 %3847
  %3849 = vrot.lane.b32.xlu0 %v2136, 96
  %v3850 = vpop.permute.xlu0 %3849
  %3851 = vrot.lane.b32.xlu0 %v2137, 96
  %v3852 = vpop.permute.xlu0 %3851
  %3853 = vrot.lane.b32.xlu0 %v2138, 96
  %v3854 = vpop.permute.xlu0 %3853
  %3855 = vrot.lane.b32.xlu0 %v2139, 96
  %v3856 = vpop.permute.xlu0 %3855
  %3857 = vrot.lane.b32.xlu0 %v2140, 96
  %v3858 = vpop.permute.xlu0 %3857
  %3859 = vrot.lane.b32.xlu0 %v2141, 96
  %v3860 = vpop.permute.xlu0 %3859
  %3861 = vrot.lane.b32.xlu0 %v2142, 96
  %v3862 = vpop.permute.xlu0 %3861
  %3863 = vrot.lane.b32.xlu0 %v2143, 96
  %v3864 = vpop.permute.xlu0 %3863
  %3865 = vrot.lane.b32.xlu0 %v2144, 96
  %v3866 = vpop.permute.xlu0 %3865
  %3867 = vrot.lane.b32.xlu0 %v2145, 96
  %v3868 = vpop.permute.xlu0 %3867
  %3869 = vrot.lane.b32.xlu0 %v2146, 96
  %v3870 = vpop.permute.xlu0 %3869
  %3871 = vrot.lane.b32.xlu0 %v2147, 96
  %v3872 = vpop.permute.xlu0 %3871
  %3873 = vrot.lane.b32.xlu0 %v2148, 96
  %v3874 = vpop.permute.xlu0 %3873
  %3875 = vrot.lane.b32.xlu0 %v2149, 96
  %v3876 = vpop.permute.xlu0 %3875
  %3877 = vrot.lane.b32.xlu0 %v2150, 96
  %v3878 = vpop.permute.xlu0 %3877
  %3879 = vrot.lane.b32.xlu0 %v2151, 96
  %v3880 = vpop.permute.xlu0 %3879
  %3881 = vrot.lane.b32.xlu0 %v2152, 96
  %v3882 = vpop.permute.xlu0 %3881
  %3883 = vrot.lane.b32.xlu0 %v2153, 96
  %v3884 = vpop.permute.xlu0 %3883
  %3885 = vrot.lane.b32.xlu0 %v2154, 96
  %v3886 = vpop.permute.xlu0 %3885
  %3887 = vrot.lane.b32.xlu0 %v2155, 96
  %v3888 = vpop.permute.xlu0 %3887
  %3889 = vrot.lane.b32.xlu0 %v2156, 96
  %v3890 = vpop.permute.xlu0 %3889
  %3891 = vrot.lane.b32.xlu0 %v2157, 96
  %v3892 = vpop.permute.xlu0 %3891
  %3893 = vrot.lane.b32.xlu0 %v2158, 96
  %v3894 = vpop.permute.xlu0 %3893
  %3895 = vrot.lane.b32.xlu0 %v2159, 96
  %v3896 = vpop.permute.xlu0 %3895
  %3897 = vrot.lane.b32.xlu0 %v2160, 96
  %v3898 = vpop.permute.xlu0 %3897
  %3899 = vrot.lane.b32.xlu0 %v2161, 96
  %v3900 = vpop.permute.xlu0 %3899
  %3901 = vrot.lane.b32.xlu0 %v2162, 96
  %v3902 = vpop.permute.xlu0 %3901
  %3903 = vrot.lane.b32.xlu0 %v2163, 96
  %v3904 = vpop.permute.xlu0 %3903
  %3905 = vrot.lane.b32.xlu0 %v2164, 96
  %v3906 = vpop.permute.xlu0 %3905
  %3907 = vrot.lane.b32.xlu0 %v2165, 96
  %v3908 = vpop.permute.xlu0 %3907
  %3909 = vrot.lane.b32.xlu0 %v2166, 96
  %v3910 = vpop.permute.xlu0 %3909
  %3911 = vrot.lane.b32.xlu0 %v2167, 96
  %v3912 = vpop.permute.xlu0 %3911
  %3913 = vrot.lane.b32.xlu0 %v2168, 96
  %v3914 = vpop.permute.xlu0 %3913
  %3915 = vrot.lane.b32.xlu0 %v2169, 96
  %v3916 = vpop.permute.xlu0 %3915
  %3917 = vrot.lane.b32.xlu0 %v2170, 96
  %v3918 = vpop.permute.xlu0 %3917
  %3919 = vrot.lane.b32.xlu0 %v2171, 96
  %v3920 = vpop.permute.xlu0 %3919
  %3921 = vrot.lane.b32.xlu0 %v2172, 96
  %v3922 = vpop.permute.xlu0 %3921
  %3923 = vrot.lane.b32.xlu0 %v2173, 96
  %v3924 = vpop.permute.xlu0 %3923
  %3925 = vrot.lane.b32.xlu0 %v2174, 96
  %v3926 = vpop.permute.xlu0 %3925
  %3927 = vrot.lane.b32.xlu0 %v2175, 96
  %v3928 = vpop.permute.xlu0 %3927
  %3929 = vrot.lane.b32.xlu0 %v2176, 96
  %v3930 = vpop.permute.xlu0 %3929
  %3931 = vrot.lane.b32.xlu0 %v2177, 96
  %v3932 = vpop.permute.xlu0 %3931
  %3933 = vrot.lane.b32.xlu0 %v2178, 96
  %v3934 = vpop.permute.xlu0 %3933
  %3935 = vrot.lane.b32.xlu0 %v2179, 96
  %v3936 = vpop.permute.xlu0 %3935
  %3937 = vrot.lane.b32.xlu0 %v2180, 96
  %v3938 = vpop.permute.xlu0 %3937
  %3939 = vrot.lane.b32.xlu0 %v2181, 96
  %v3940 = vpop.permute.xlu0 %3939
  %3941 = vrot.lane.b32.xlu0 %v2182, 96
  %v3942 = vpop.permute.xlu0 %3941
  %3943 = vrot.lane.b32.xlu0 %v2183, 96
  %v3944 = vpop.permute.xlu0 %3943
  %3945 = vrot.lane.b32.xlu0 %v2184, 96
  %v3946 = vpop.permute.xlu0 %3945
  %3947 = vrot.lane.b32.xlu0 %v2185, 96
  %v3948 = vpop.permute.xlu0 %3947
  %3949 = vrot.lane.b32.xlu0 %v2186, 96
  %v3950 = vpop.permute.xlu0 %3949
  %3951 = vrot.lane.b32.xlu0 %v2187, 96
  %v3952 = vpop.permute.xlu0 %3951
  %3953 = vrot.lane.b32.xlu0 %v2188, 96
  %v3954 = vpop.permute.xlu0 %3953
  %3955 = vrot.lane.b32.xlu0 %v2189, 96
  %v3956 = vpop.permute.xlu0 %3955
  %3957 = vrot.lane.b32.xlu0 %v2190, 96
  %v3958 = vpop.permute.xlu0 %3957
  %3959 = vrot.lane.b32.xlu0 %v2191, 96
  %v3960 = vpop.permute.xlu0 %3959
  %3961 = vrot.lane.b32.xlu0 %v2192, 96
  %v3962 = vpop.permute.xlu0 %3961
  %3963 = vrot.lane.b32.xlu0 %v2193, 96
  %v3964 = vpop.permute.xlu0 %3963
  %3965 = vrot.lane.b32.xlu0 %v2194, 96
  %v3966 = vpop.permute.xlu0 %3965
  %3967 = vrot.lane.b32.xlu0 %v2195, 96
  %v3968 = vpop.permute.xlu0 %3967
  %3969 = vrot.lane.b32.xlu0 %v2196, 96
  %v3970 = vpop.permute.xlu0 %3969
  %3971 = vrot.lane.b32.xlu0 %v2197, 96
  %v3972 = vpop.permute.xlu0 %3971
  %3973 = vrot.lane.b32.xlu0 %v2198, 96
  %v3974 = vpop.permute.xlu0 %3973
  %3975 = vrot.lane.b32.xlu0 %v2199, 96
  %v3976 = vpop.permute.xlu0 %3975
  %3977 = vrot.lane.b32.xlu0 %v2200, 96
  %v3978 = vpop.permute.xlu0 %3977
  %3979 = vrot.lane.b32.xlu0 %v2201, 96
  %v3980 = vpop.permute.xlu0 %3979
  %3981 = vrot.lane.b32.xlu0 %v2202, 96
  %v3982 = vpop.permute.xlu0 %3981
  %3983 = vrot.lane.b32.xlu0 %v2203, 96
  %v3984 = vpop.permute.xlu0 %3983
  %3985 = vrot.lane.b32.xlu0 %v2204, 96
  %v3986 = vpop.permute.xlu0 %3985
  %3987 = vrot.lane.b32.xlu0 %v2205, 96
  %v3988 = vpop.permute.xlu0 %3987
  %3989 = vrot.lane.b32.xlu0 %v2206, 96
  %v3990 = vpop.permute.xlu0 %3989
  %3991 = vrot.lane.b32.xlu0 %v2207, 96
  %v3992 = vpop.permute.xlu0 %3991
  %3993 = vrot.lane.b32.xlu0 %v2208, 96
  %v3994 = vpop.permute.xlu0 %3993
  %v4076 = vsel %vm105, %v1719, %v2372
  %v4077 = vsel %vm105, %v1720, %v2374
  %v4078 = vsel %vm105, %v1721, %v2376
  %v4079 = vsel %vm105, %v1722, %v2378
  %v4080 = vsel %vm105, %v1723, %v2380
  %v4081 = vsel %vm105, %v1724, %v2382
  %v4082 = vsel %vm105, %v1725, %v2384
  %v4083 = vsel %vm105, %v1726, %v2386
  %v4084 = vsel %vm105, %v1727, %v2388
  %v4085 = vsel %vm105, %v1728, %v2390
  %v4086 = vsel %vm105, %v1729, %v2392
  %v4087 = vsel %vm105, %v1730, %v2394
  %v4088 = vsel %vm105, %v1731, %v2396
  %v4089 = vsel %vm105, %v1732, %v2398
  %v4090 = vsel %vm105, %v1733, %v2400
  %v4091 = vsel %vm105, %v1734, %v2402
  %v4092 = vsel %vm105, %v1735, %v2404
  %v4093 = vsel %vm105, %v1736, %v2406
  %v4094 = vsel %vm105, %v1737, %v2408
  %v4095 = vsel %vm105, %v1738, %v2410
  %v4096 = vsel %vm105, %v1739, %v2412
  %v4097 = vsel %vm105, %v1740, %v2414
  %v4098 = vsel %vm105, %v1741, %v2416
  %v4099 = vsel %vm105, %v1742, %v2418
  %v4100 = vsel %vm105, %v1743, %v2420
  %v4101 = vsel %vm105, %v1744, %v2422
  %v4102 = vsel %vm105, %v1745, %v2424
  %v4103 = vsel %vm105, %v1746, %v2426
  %v4104 = vsel %vm105, %v1747, %v2428
  %v4105 = vsel %vm105, %v1748, %v2430
  %v4106 = vsel %vm105, %v1749, %v2432
  %v4107 = vsel %vm105, %v1750, %v2434
  %v4108 = vsel %vm105, %v1751, %v2436
  %v4109 = vsel %vm105, %v1752, %v2438
  %v4110 = vsel %vm105, %v1753, %v2440
  %v4111 = vsel %vm105, %v1754, %v2442
  %v4112 = vsel %vm105, %v1755, %v2444
  %v4113 = vsel %vm105, %v1756, %v2446
  %v4114 = vsel %vm105, %v1757, %v2448
  %v4115 = vsel %vm105, %v1758, %v2450
  %v4116 = vsel %vm105, %v1759, %v2452
  %v4117 = vsel %vm105, %v1760, %v2454
  %v4118 = vsel %vm105, %v1761, %v2456
  %v4119 = vsel %vm105, %v1762, %v2458
  %v4120 = vsel %vm105, %v1763, %v2460
  %v4121 = vsel %vm105, %v1764, %v2462
  %v4122 = vsel %vm105, %v1765, %v2464
  %v4123 = vsel %vm105, %v1766, %v2466
  %v4124 = vsel %vm105, %v1767, %v2468
  %v4125 = vsel %vm105, %v1768, %v2470
  %v4126 = vsel %vm105, %v1769, %v2472
  %v4127 = vsel %vm105, %v1770, %v2474
  %v4128 = vsel %vm105, %v1771, %v2476
  %v4129 = vsel %vm105, %v1772, %v2478
  %v4130 = vsel %vm105, %v1773, %v2480
  %v4131 = vsel %vm105, %v1774, %v2482
  %v4132 = vsel %vm105, %v1775, %v2484
  %v4133 = vsel %vm105, %v1776, %v2486
  %v4134 = vsel %vm105, %v1777, %v2488
  %v4135 = vsel %vm105, %v1778, %v2490
  %v4136 = vsel %vm105, %v1779, %v2492
  %v4137 = vsel %vm105, %v1780, %v2494
  %v4138 = vsel %vm105, %v1781, %v2496
  %v4139 = vsel %vm105, %v1782, %v2498
  %v4140 = vsel %vm105, %v1783, %v2500
  %v4141 = vsel %vm105, %v1784, %v2502
  %v4142 = vsel %vm105, %v1785, %v2504
  %v4143 = vsel %vm105, %v1786, %v2506
  %v4144 = vsel %vm105, %v1787, %v2508
  %v4145 = vsel %vm105, %v1788, %v2510
  %v4146 = vsel %vm105, %v1789, %v2512
  %v4147 = vsel %vm105, %v1790, %v2514
  %v4148 = vsel %vm105, %v1791, %v2516
  %v4149 = vsel %vm105, %v1792, %v2518
  %v4150 = vsel %vm105, %v1793, %v2520
  %v4151 = vsel %vm105, %v1794, %v2522
  %v4152 = vsel %vm105, %v1795, %v2524
  %v4153 = vsel %vm105, %v1796, %v2526
  %v4154 = vsel %vm105, %v1797, %v2528
  %v4155 = vsel %vm105, %v1798, %v2530
  %v4156 = vsel %vm105, %v1799, %v2532
  %vm4157 = vcmask 523264
  %v4158 = vsel %vm4157, %v4076, %v2696
  %v4159 = vsel %vm4157, %v4077, %v2698
  %v4160 = vsel %vm4157, %v4078, %v2700
  %v4161 = vsel %vm4157, %v4079, %v2702
  %v4162 = vsel %vm4157, %v4080, %v2704
  %v4163 = vsel %vm4157, %v4081, %v2706
  %v4164 = vsel %vm4157, %v4082, %v2708
  %v4165 = vsel %vm4157, %v4083, %v2710
  %v4166 = vsel %vm4157, %v4084, %v2712
  %v4167 = vsel %vm4157, %v4085, %v2714
  %v4168 = vsel %vm4157, %v4086, %v2716
  %v4169 = vsel %vm4157, %v4087, %v2718
  %v4170 = vsel %vm4157, %v4088, %v2720
  %v4171 = vsel %vm4157, %v4089, %v2722
  %v4172 = vsel %vm4157, %v4090, %v2724
  %v4173 = vsel %vm4157, %v4091, %v2726
  %v4174 = vsel %vm4157, %v4092, %v2728
  %v4175 = vsel %vm4157, %v4093, %v2730
  %v4176 = vsel %vm4157, %v4094, %v2732
  %v4177 = vsel %vm4157, %v4095, %v2734
  %v4178 = vsel %vm4157, %v4096, %v2736
  %v4179 = vsel %vm4157, %v4097, %v2738
  %v4180 = vsel %vm4157, %v4098, %v2740
  %v4181 = vsel %vm4157, %v4099, %v2742
  %v4182 = vsel %vm4157, %v4100, %v2744
  %v4183 = vsel %vm4157, %v4101, %v2746
  %v4184 = vsel %vm4157, %v4102, %v2748
  %v4185 = vsel %vm4157, %v4103, %v2750
  %v4186 = vsel %vm4157, %v4104, %v2752
  %v4187 = vsel %vm4157, %v4105, %v2754
  %v4188 = vsel %vm4157, %v4106, %v2756
  %v4189 = vsel %vm4157, %v4107, %v2758
  %v4190 = vsel %vm4157, %v4108, %v2760
  %v4191 = vsel %vm4157, %v4109, %v2762
  %v4192 = vsel %vm4157, %v4110, %v2764
  %v4193 = vsel %vm4157, %v4111, %v2766
  %v4194 = vsel %vm4157, %v4112, %v2768
  %v4195 = vsel %vm4157, %v4113, %v2770
  %v4196 = vsel %vm4157, %v4114, %v2772
  %v4197 = vsel %vm4157, %v4115, %v2774
  %v4198 = vsel %vm4157, %v4116, %v2776
  %v4199 = vsel %vm4157, %v4117, %v2778
  %v4200 = vsel %vm4157, %v4118, %v2780
  %v4201 = vsel %vm4157, %v4119, %v2782
  %v4202 = vsel %vm4157, %v4120, %v2784
  %v4203 = vsel %vm4157, %v4121, %v2786
  %v4204 = vsel %vm4157, %v4122, %v2788
  %v4205 = vsel %vm4157, %v4123, %v2790
  %v4206 = vsel %vm4157, %v4124, %v2792
  %v4207 = vsel %vm4157, %v4125, %v2794
  %v4208 = vsel %vm4157, %v4126, %v2796
  %v4209 = vsel %vm4157, %v4127, %v2798
  %v4210 = vsel %vm4157, %v4128, %v2800
  %v4211 = vsel %vm4157, %v4129, %v2802
  %v4212 = vsel %vm4157, %v4130, %v2804
  %v4213 = vsel %vm4157, %v4131, %v2806
  %v4214 = vsel %vm4157, %v4132, %v2808
  %v4215 = vsel %vm4157, %v4133, %v2810
  %v4216 = vsel %vm4157, %v4134, %v2812
  %v4217 = vsel %vm4157, %v4135, %v2814
  %v4218 = vsel %vm4157, %v4136, %v2816
  %v4219 = vsel %vm4157, %v4137, %v2818
  %v4220 = vsel %vm4157, %v4138, %v2820
  %v4221 = vsel %vm4157, %v4139, %v2822
  %v4222 = vsel %vm4157, %v4140, %v2824
  %v4223 = vsel %vm4157, %v4141, %v2826
  %v4224 = vsel %vm4157, %v4142, %v2828
  %v4225 = vsel %vm4157, %v4143, %v2830
  %v4226 = vsel %vm4157, %v4144, %v2832
  %v4227 = vsel %vm4157, %v4145, %v2834
  %v4228 = vsel %vm4157, %v4146, %v2836
  %v4229 = vsel %vm4157, %v4147, %v2838
  %v4230 = vsel %vm4157, %v4148, %v2840
  %v4231 = vsel %vm4157, %v4149, %v2842
  %v4232 = vsel %vm4157, %v4150, %v2844
  %v4233 = vsel %vm4157, %v4151, %v2846
  %v4234 = vsel %vm4157, %v4152, %v2848
  %v4235 = vsel %vm4157, %v4153, %v2850
  %v4236 = vsel %vm4157, %v4154, %v2852
  %v4237 = vsel %vm4157, %v4155, %v2854
  %v4238 = vsel %vm4157, %v4156, %v2856
  %vm4239 = vcmask 785408
  %v4240 = vsel %vm4239, %v4158, %v2941
  %v4241 = vsel %vm4239, %v4159, %v2943
  %v4242 = vsel %vm4239, %v4160, %v2945
  %v4243 = vsel %vm4239, %v4161, %v2947
  %v4244 = vsel %vm4239, %v4162, %v2949
  %v4245 = vsel %vm4239, %v4163, %v2951
  %v4246 = vsel %vm4239, %v4164, %v2953
  %v4247 = vsel %vm4239, %v4165, %v2955
  %v4248 = vsel %vm4239, %v4166, %v2957
  %v4249 = vsel %vm4239, %v4167, %v2959
  %v4250 = vsel %vm4239, %v4168, %v2961
  %v4251 = vsel %vm4239, %v4169, %v2963
  %v4252 = vsel %vm4239, %v4170, %v2965
  %v4253 = vsel %vm4239, %v4171, %v2967
  %v4254 = vsel %vm4239, %v4172, %v2969
  %v4255 = vsel %vm4239, %v4173, %v2971
  %v4256 = vsel %vm4239, %v4174, %v2973
  %v4257 = vsel %vm4239, %v4175, %v2975
  %v4258 = vsel %vm4239, %v4176, %v2977
  %v4259 = vsel %vm4239, %v4177, %v2979
  %v4260 = vsel %vm4239, %v4178, %v2981
  %v4261 = vsel %vm4239, %v4179, %v2983
  %v4262 = vsel %vm4239, %v4180, %v2985
  %v4263 = vsel %vm4239, %v4181, %v2987
  %v4264 = vsel %vm4239, %v4182, %v2989
  %v4265 = vsel %vm4239, %v4183, %v2991
  %v4266 = vsel %vm4239, %v4184, %v2993
  %v4267 = vsel %vm4239, %v4185, %v2995
  %v4268 = vsel %vm4239, %v4186, %v2997
  %v4269 = vsel %vm4239, %v4187, %v2999
  %v4270 = vsel %vm4239, %v4188, %v3001
  %v4271 = vsel %vm4239, %v4189, %v3003
  %v4272 = vsel %vm4239, %v4190, %v3005
  %v4273 = vsel %vm4239, %v4191, %v3007
  %v4274 = vsel %vm4239, %v4192, %v3009
  %v4275 = vsel %vm4239, %v4193, %v3011
  %v4276 = vsel %vm4239, %v4194, %v3013
  %v4277 = vsel %vm4239, %v4195, %v3015
  %v4278 = vsel %vm4239, %v4196, %v3017
  %v4279 = vsel %vm4239, %v4197, %v3019
  %v4280 = vsel %vm4239, %v4198, %v3021
  %v4281 = vsel %vm4239, %v4199, %v3023
  %v4282 = vsel %vm4239, %v4200, %v3025
  %v4283 = vsel %vm4239, %v4201, %v3027
  %v4284 = vsel %vm4239, %v4202, %v3029
  %v4285 = vsel %vm4239, %v4203, %v3031
  %v4286 = vsel %vm4239, %v4204, %v3033
  %v4287 = vsel %vm4239, %v4205, %v3035
  %v4288 = vsel %vm4239, %v4206, %v3037
  %v4289 = vsel %vm4239, %v4207, %v3039
  %v4290 = vsel %vm4239, %v4208, %v3041
  %v4291 = vsel %vm4239, %v4209, %v3043
  %v4292 = vsel %vm4239, %v4210, %v3045
  %v4293 = vsel %vm4239, %v4211, %v3047
  %v4294 = vsel %vm4239, %v4212, %v3049
  %v4295 = vsel %vm4239, %v4213, %v3051
  %v4296 = vsel %vm4239, %v4214, %v3053
  %v4297 = vsel %vm4239, %v4215, %v3055
  %v4298 = vsel %vm4239, %v4216, %v3057
  %v4299 = vsel %vm4239, %v4217, %v3059
  %v4300 = vsel %vm4239, %v4218, %v3061
  %v4301 = vsel %vm4239, %v4219, %v3063
  %v4302 = vsel %vm4239, %v4220, %v3065
  %v4303 = vsel %vm4239, %v4221, %v3067
  %v4304 = vsel %vm4239, %v4222, %v3069
  %v4305 = vsel %vm4239, %v4223, %v3071
  %v4306 = vsel %vm4239, %v4224, %v3073
  %v4307 = vsel %vm4239, %v4225, %v3075
  %v4308 = vsel %vm4239, %v4226, %v3077
  %v4309 = vsel %vm4239, %v4227, %v3079
  %v4310 = vsel %vm4239, %v4228, %v3081
  %v4311 = vsel %vm4239, %v4229, %v3083
  %v4312 = vsel %vm4239, %v4230, %v3085
  %v4313 = vsel %vm4239, %v4231, %v3087
  %v4314 = vsel %vm4239, %v4232, %v3089
  %v4315 = vsel %vm4239, %v4233, %v3091
  %v4316 = vsel %vm4239, %v4234, %v3093
  %v4317 = vsel %vm4239, %v4235, %v3095
  %v4318 = vsel %vm4239, %v4236, %v3097
  %v4319 = vsel %vm4239, %v4237, %v3099
  %v4320 = vsel %vm4239, %v4238, %v3101
  %v4321 = vsel %vm105, %v1964, %v3265
  %v4322 = vsel %vm105, %v1965, %v3267
  %v4323 = vsel %vm105, %v1966, %v3269
  %v4324 = vsel %vm105, %v1967, %v3271
  %v4325 = vsel %vm105, %v1968, %v3273
  %v4326 = vsel %vm105, %v1969, %v3275
  %v4327 = vsel %vm105, %v1970, %v3277
  %v4328 = vsel %vm105, %v1971, %v3279
  %v4329 = vsel %vm105, %v1972, %v3281
  %v4330 = vsel %vm105, %v1973, %v3283
  %v4331 = vsel %vm105, %v1974, %v3285
  %v4332 = vsel %vm105, %v1975, %v3287
  %v4333 = vsel %vm105, %v1976, %v3289
  %v4334 = vsel %vm105, %v1977, %v3291
  %v4335 = vsel %vm105, %v1978, %v3293
  %v4336 = vsel %vm105, %v1979, %v3295
  %v4337 = vsel %vm105, %v1980, %v3297
  %v4338 = vsel %vm105, %v1981, %v3299
  %v4339 = vsel %vm105, %v1982, %v3301
  %v4340 = vsel %vm105, %v1983, %v3303
  %v4341 = vsel %vm105, %v1984, %v3305
  %v4342 = vsel %vm105, %v1985, %v3307
  %v4343 = vsel %vm105, %v1986, %v3309
  %v4344 = vsel %vm105, %v1987, %v3311
  %v4345 = vsel %vm105, %v1988, %v3313
  %v4346 = vsel %vm105, %v1989, %v3315
  %v4347 = vsel %vm105, %v1990, %v3317
  %v4348 = vsel %vm105, %v1991, %v3319
  %v4349 = vsel %vm105, %v1992, %v3321
  %v4350 = vsel %vm105, %v1993, %v3323
  %v4351 = vsel %vm105, %v1994, %v3325
  %v4352 = vsel %vm105, %v1995, %v3327
  %v4353 = vsel %vm105, %v1996, %v3329
  %v4354 = vsel %vm105, %v1997, %v3331
  %v4355 = vsel %vm105, %v1998, %v3333
  %v4356 = vsel %vm105, %v1999, %v3335
  %v4357 = vsel %vm105, %v2000, %v3337
  %v4358 = vsel %vm105, %v2001, %v3339
  %v4359 = vsel %vm105, %v2002, %v3341
  %v4360 = vsel %vm105, %v2003, %v3343
  %v4361 = vsel %vm105, %v2004, %v3345
  %v4362 = vsel %vm105, %v2005, %v3347
  %v4363 = vsel %vm105, %v2006, %v3349
  %v4364 = vsel %vm105, %v2007, %v3351
  %v4365 = vsel %vm105, %v2008, %v3353
  %v4366 = vsel %vm105, %v2009, %v3355
  %v4367 = vsel %vm105, %v2010, %v3357
  %v4368 = vsel %vm105, %v2011, %v3359
  %v4369 = vsel %vm105, %v2012, %v3361
  %v4370 = vsel %vm105, %v2013, %v3363
  %v4371 = vsel %vm105, %v2014, %v3365
  %v4372 = vsel %vm105, %v2015, %v3367
  %v4373 = vsel %vm105, %v2016, %v3369
  %v4374 = vsel %vm105, %v2017, %v3371
  %v4375 = vsel %vm105, %v2018, %v3373
  %v4376 = vsel %vm105, %v2019, %v3375
  %v4377 = vsel %vm105, %v2020, %v3377
  %v4378 = vsel %vm105, %v2021, %v3379
  %v4379 = vsel %vm105, %v2022, %v3381
  %v4380 = vsel %vm105, %v2023, %v3383
  %v4381 = vsel %vm105, %v2024, %v3385
  %v4382 = vsel %vm105, %v2025, %v3387
  %v4383 = vsel %vm105, %v2026, %v3389
  %v4384 = vsel %vm105, %v2027, %v3391
  %v4385 = vsel %vm105, %v2028, %v3393
  %v4386 = vsel %vm105, %v2029, %v3395
  %v4387 = vsel %vm105, %v2030, %v3397
  %v4388 = vsel %vm105, %v2031, %v3399
  %v4389 = vsel %vm105, %v2032, %v3401
  %v4390 = vsel %vm105, %v2033, %v3403
  %v4391 = vsel %vm105, %v2034, %v3405
  %v4392 = vsel %vm105, %v2035, %v3407
  %v4393 = vsel %vm105, %v2036, %v3409
  %v4394 = vsel %vm105, %v2037, %v3411
  %v4395 = vsel %vm105, %v2038, %v3413
  %v4396 = vsel %vm105, %v2039, %v3415
  %v4397 = vsel %vm105, %v2040, %v3417
  %v4398 = vsel %vm105, %v2041, %v3419
  %v4399 = vsel %vm105, %v2042, %v3421
  %v4400 = vsel %vm105, %v2043, %v3423
  %v4401 = vsel %vm105, %v2044, %v3425
  %v4402 = vsel %vm4157, %v4321, %v3510
  %v4403 = vsel %vm4157, %v4322, %v3512
  %v4404 = vsel %vm4157, %v4323, %v3514
  %v4405 = vsel %vm4157, %v4324, %v3516
  %v4406 = vsel %vm4157, %v4325, %v3518
  %v4407 = vsel %vm4157, %v4326, %v3520
  %v4408 = vsel %vm4157, %v4327, %v3522
  %v4409 = vsel %vm4157, %v4328, %v3524
  %v4410 = vsel %vm4157, %v4329, %v3526
  %v4411 = vsel %vm4157, %v4330, %v3528
  %v4412 = vsel %vm4157, %v4331, %v3530
  %v4413 = vsel %vm4157, %v4332, %v3532
  %v4414 = vsel %vm4157, %v4333, %v3534
  %v4415 = vsel %vm4157, %v4334, %v3536
  %v4416 = vsel %vm4157, %v4335, %v3538
  %v4417 = vsel %vm4157, %v4336, %v3540
  %v4418 = vsel %vm4157, %v4337, %v3542
  %v4419 = vsel %vm4157, %v4338, %v3544
  %v4420 = vsel %vm4157, %v4339, %v3546
  %v4421 = vsel %vm4157, %v4340, %v3548
  %v4422 = vsel %vm4157, %v4341, %v3550
  %v4423 = vsel %vm4157, %v4342, %v3552
  %v4424 = vsel %vm4157, %v4343, %v3554
  %v4425 = vsel %vm4157, %v4344, %v3556
  %v4426 = vsel %vm4157, %v4345, %v3558
  %v4427 = vsel %vm4157, %v4346, %v3560
  %v4428 = vsel %vm4157, %v4347, %v3562
  %v4429 = vsel %vm4157, %v4348, %v3564
  %v4430 = vsel %vm4157, %v4349, %v3566
  %v4431 = vsel %vm4157, %v4350, %v3568
  %v4432 = vsel %vm4157, %v4351, %v3570
  %v4433 = vsel %vm4157, %v4352, %v3572
  %v4434 = vsel %vm4157, %v4353, %v3574
  %v4435 = vsel %vm4157, %v4354, %v3576
  %v4436 = vsel %vm4157, %v4355, %v3578
  %v4437 = vsel %vm4157, %v4356, %v3580
  %v4438 = vsel %vm4157, %v4357, %v3582
  %v4439 = vsel %vm4157, %v4358, %v3584
  %v4440 = vsel %vm4157, %v4359, %v3586
  %v4441 = vsel %vm4157, %v4360, %v3588
  %v4442 = vsel %vm4157, %v4361, %v3590
  %v4443 = vsel %vm4157, %v4362, %v3592
  %v4444 = vsel %vm4157, %v4363, %v3594
  %v4445 = vsel %vm4157, %v4364, %v3596
  %v4446 = vsel %vm4157, %v4365, %v3598
  %v4447 = vsel %vm4157, %v4366, %v3600
  %v4448 = vsel %vm4157, %v4367, %v3602
  %v4449 = vsel %vm4157, %v4368, %v3604
  %v4450 = vsel %vm4157, %v4369, %v3606
  %v4451 = vsel %vm4157, %v4370, %v3608
  %v4452 = vsel %vm4157, %v4371, %v3610
  %v4453 = vsel %vm4157, %v4372, %v3612
  %v4454 = vsel %vm4157, %v4373, %v3614
  %v4455 = vsel %vm4157, %v4374, %v3616
  %v4456 = vsel %vm4157, %v4375, %v3618
  %v4457 = vsel %vm4157, %v4376, %v3620
  %v4458 = vsel %vm4157, %v4377, %v3622
  %v4459 = vsel %vm4157, %v4378, %v3624
  %v4460 = vsel %vm4157, %v4379, %v3626
  %v4461 = vsel %vm4157, %v4380, %v3628
  %v4462 = vsel %vm4157, %v4381, %v3630
  %v4463 = vsel %vm4157, %v4382, %v3632
  %v4464 = vsel %vm4157, %v4383, %v3634
  %v4465 = vsel %vm4157, %v4384, %v3636
  %v4466 = vsel %vm4157, %v4385, %v3638
  %v4467 = vsel %vm4157, %v4386, %v3640
  %v4468 = vsel %vm4157, %v4387, %v3642
  %v4469 = vsel %vm4157, %v4388, %v3644
  %v4470 = vsel %vm4157, %v4389, %v3646
  %v4471 = vsel %vm4157, %v4390, %v3648
  %v4472 = vsel %vm4157, %v4391, %v3650
  %v4473 = vsel %vm4157, %v4392, %v3652
  %v4474 = vsel %vm4157, %v4393, %v3654
  %v4475 = vsel %vm4157, %v4394, %v3656
  %v4476 = vsel %vm4157, %v4395, %v3658
  %v4477 = vsel %vm4157, %v4396, %v3660
  %v4478 = vsel %vm4157, %v4397, %v3662
  %v4479 = vsel %vm4157, %v4398, %v3664
  %v4480 = vsel %vm4157, %v4399, %v3666
  %v4481 = vsel %vm4157, %v4400, %v3668
  %v4482 = vsel %vm4157, %v4401, %v3670
  %v4483 = vsel %vm4239, %v4402, %v3834
  %v4484 = vsel %vm4239, %v4403, %v3836
  %v4485 = vsel %vm4239, %v4404, %v3838
  %v4486 = vsel %vm4239, %v4405, %v3840
  %v4487 = vsel %vm4239, %v4406, %v3842
  %v4488 = vsel %vm4239, %v4407, %v3844
  %v4489 = vsel %vm4239, %v4408, %v3846
  %v4490 = vsel %vm4239, %v4409, %v3848
  %v4491 = vsel %vm4239, %v4410, %v3850
  %v4492 = vsel %vm4239, %v4411, %v3852
  %v4493 = vsel %vm4239, %v4412, %v3854
  %v4494 = vsel %vm4239, %v4413, %v3856
  %v4495 = vsel %vm4239, %v4414, %v3858
  %v4496 = vsel %vm4239, %v4415, %v3860
  %v4497 = vsel %vm4239, %v4416, %v3862
  %v4498 = vsel %vm4239, %v4417, %v3864
  %v4499 = vsel %vm4239, %v4418, %v3866
  %v4500 = vsel %vm4239, %v4419, %v3868
  %v4501 = vsel %vm4239, %v4420, %v3870
  %v4502 = vsel %vm4239, %v4421, %v3872
  %v4503 = vsel %vm4239, %v4422, %v3874
  %v4504 = vsel %vm4239, %v4423, %v3876
  %v4505 = vsel %vm4239, %v4424, %v3878
  %v4506 = vsel %vm4239, %v4425, %v3880
  %v4507 = vsel %vm4239, %v4426, %v3882
  %v4508 = vsel %vm4239, %v4427, %v3884
  %v4509 = vsel %vm4239, %v4428, %v3886
  %v4510 = vsel %vm4239, %v4429, %v3888
  %v4511 = vsel %vm4239, %v4430, %v3890
  %v4512 = vsel %vm4239, %v4431, %v3892
  %v4513 = vsel %vm4239, %v4432, %v3894
  %v4514 = vsel %vm4239, %v4433, %v3896
  %v4515 = vsel %vm4239, %v4434, %v3898
  %v4516 = vsel %vm4239, %v4435, %v3900
  %v4517 = vsel %vm4239, %v4436, %v3902
  %v4518 = vsel %vm4239, %v4437, %v3904
  %v4519 = vsel %vm4239, %v4438, %v3906
  %v4520 = vsel %vm4239, %v4439, %v3908
  %v4521 = vsel %vm4239, %v4440, %v3910
  %v4522 = vsel %vm4239, %v4441, %v3912
  %v4523 = vsel %vm4239, %v4442, %v3914
  %v4524 = vsel %vm4239, %v4443, %v3916
  %v4525 = vsel %vm4239, %v4444, %v3918
  %v4526 = vsel %vm4239, %v4445, %v3920
  %v4527 = vsel %vm4239, %v4446, %v3922
  %v4528 = vsel %vm4239, %v4447, %v3924
  %v4529 = vsel %vm4239, %v4448, %v3926
  %v4530 = vsel %vm4239, %v4449, %v3928
  %v4531 = vsel %vm4239, %v4450, %v3930
  %v4532 = vsel %vm4239, %v4451, %v3932
  %v4533 = vsel %vm4239, %v4452, %v3934
  %v4534 = vsel %vm4239, %v4453, %v3936
  %v4535 = vsel %vm4239, %v4454, %v3938
  %v4536 = vsel %vm4239, %v4455, %v3940
  %v4537 = vsel %vm4239, %v4456, %v3942
  %v4538 = vsel %vm4239, %v4457, %v3944
  %v4539 = vsel %vm4239, %v4458, %v3946
  %v4540 = vsel %vm4239, %v4459, %v3948
  %v4541 = vsel %vm4239, %v4460, %v3950
  %v4542 = vsel %vm4239, %v4461, %v3952
  %v4543 = vsel %vm4239, %v4462, %v3954
  %v4544 = vsel %vm4239, %v4463, %v3956
  %v4545 = vsel %vm4239, %v4464, %v3958
  %v4546 = vsel %vm4239, %v4465, %v3960
  %v4547 = vsel %vm4239, %v4466, %v3962
  %v4548 = vsel %vm4239, %v4467, %v3964
  %v4549 = vsel %vm4239, %v4468, %v3966
  %v4550 = vsel %vm4239, %v4469, %v3968
  %v4551 = vsel %vm4239, %v4470, %v3970
  %v4552 = vsel %vm4239, %v4471, %v3972
  %v4553 = vsel %vm4239, %v4472, %v3974
  %v4554 = vsel %vm4239, %v4473, %v3976
  %v4555 = vsel %vm4239, %v4474, %v3978
  %v4556 = vsel %vm4239, %v4475, %v3980
  %v4557 = vsel %vm4239, %v4476, %v3982
  %v4558 = vsel %vm4239, %v4477, %v3984
  %v4559 = vsel %vm4239, %v4478, %v3986
  %v4560 = vsel %vm4239, %v4479, %v3988
  %v4561 = vsel %vm4239, %v4480, %v3990
  %v4562 = vsel %vm4239, %v4481, %v3992
  %v4563 = vsel %vm4239, %v4482, %v3994
  %v4564 = vpack.c.bf16 %v4241, %v4240
  %v4565 = vpack.c.bf16 %v4484, %v4483
  %v4566 = vpack.c.bf16 %v2210, %v2209
  %v4567 = vpack.c.bf16 %v4243, %v4242
  %v4568 = vpack.c.bf16 %v4486, %v4485
  %v4569 = vpack.c.bf16 %v2212, %v2211
  %v4570 = vpack.c.bf16 %v4245, %v4244
  %v4571 = vpack.c.bf16 %v4488, %v4487
  %v4572 = vpack.c.bf16 %v2214, %v2213
  %v4573 = vpack.c.bf16 %v4247, %v4246
  %v4574 = vpack.c.bf16 %v4490, %v4489
  %v4575 = vpack.c.bf16 %v2216, %v2215
  %v4576 = vpack.c.bf16 %v4249, %v4248
  %v4577 = vpack.c.bf16 %v4492, %v4491
  %v4578 = vpack.c.bf16 %v2218, %v2217
  %v4579 = vpack.c.bf16 %v4251, %v4250
  %v4580 = vpack.c.bf16 %v4494, %v4493
  %v4581 = vpack.c.bf16 %v2220, %v2219
  %v4582 = vpack.c.bf16 %v4253, %v4252
  %v4583 = vpack.c.bf16 %v4496, %v4495
  %v4584 = vpack.c.bf16 %v2222, %v2221
  %v4585 = vpack.c.bf16 %v4255, %v4254
  %v4586 = vpack.c.bf16 %v4498, %v4497
  %v4587 = vpack.c.bf16 %v2224, %v2223
  %v4588 = vpack.c.bf16 %v4257, %v4256
  %v4589 = vpack.c.bf16 %v4500, %v4499
  %v4590 = vpack.c.bf16 %v2226, %v2225
  %v4591 = vpack.c.bf16 %v4259, %v4258
  %v4592 = vpack.c.bf16 %v4502, %v4501
  %v4593 = vpack.c.bf16 %v2228, %v2227
  %v4594 = vpack.c.bf16 %v4261, %v4260
  %v4595 = vpack.c.bf16 %v4504, %v4503
  %v4596 = vpack.c.bf16 %v2230, %v2229
  %v4597 = vpack.c.bf16 %v4263, %v4262
  %v4598 = vpack.c.bf16 %v4506, %v4505
  %v4599 = vpack.c.bf16 %v2232, %v2231
  %v4600 = vpack.c.bf16 %v4265, %v4264
  %v4601 = vpack.c.bf16 %v4508, %v4507
  %v4602 = vpack.c.bf16 %v2234, %v2233
  %v4603 = vpack.c.bf16 %v4267, %v4266
  %v4604 = vpack.c.bf16 %v4510, %v4509
  %v4605 = vpack.c.bf16 %v2236, %v2235
  %v4606 = vpack.c.bf16 %v4269, %v4268
  %v4607 = vpack.c.bf16 %v4512, %v4511
  %v4608 = vpack.c.bf16 %v2238, %v2237
  %v4609 = vpack.c.bf16 %v4271, %v4270
  %v4610 = vpack.c.bf16 %v4514, %v4513
  %v4611 = vpack.c.bf16 %v2240, %v2239
  %v4612 = vpack.c.bf16 %v4273, %v4272
  %v4613 = vpack.c.bf16 %v4516, %v4515
  %v4614 = vpack.c.bf16 %v2242, %v2241
  %v4615 = vpack.c.bf16 %v4275, %v4274
  %v4616 = vpack.c.bf16 %v4518, %v4517
  %v4617 = vpack.c.bf16 %v2244, %v2243
  %v4618 = vpack.c.bf16 %v4277, %v4276
  %v4619 = vpack.c.bf16 %v4520, %v4519
  %v4620 = vpack.c.bf16 %v2246, %v2245
  %v4621 = vpack.c.bf16 %v4279, %v4278
  %v4622 = vpack.c.bf16 %v4522, %v4521
  %v4623 = vpack.c.bf16 %v2248, %v2247
  %v4624 = vpack.c.bf16 %v4281, %v4280
  %v4625 = vpack.c.bf16 %v4524, %v4523
  %v4626 = vpack.c.bf16 %v2250, %v2249
  %v4627 = vpack.c.bf16 %v4283, %v4282
  %v4628 = vpack.c.bf16 %v4526, %v4525
  %v4629 = vpack.c.bf16 %v2252, %v2251
  %v4630 = vpack.c.bf16 %v4285, %v4284
  %v4631 = vpack.c.bf16 %v4528, %v4527
  %v4632 = vpack.c.bf16 %v2254, %v2253
  %v4633 = vpack.c.bf16 %v4287, %v4286
  %v4634 = vpack.c.bf16 %v4530, %v4529
  %v4635 = vpack.c.bf16 %v2256, %v2255
  %v4636 = vpack.c.bf16 %v4289, %v4288
  %v4637 = vpack.c.bf16 %v4532, %v4531
  %v4638 = vpack.c.bf16 %v2258, %v2257
  %v4639 = vpack.c.bf16 %v4291, %v4290
  %v4640 = vpack.c.bf16 %v4534, %v4533
  %v4641 = vpack.c.bf16 %v2260, %v2259
  %v4642 = vpack.c.bf16 %v4293, %v4292
  %v4643 = vpack.c.bf16 %v4536, %v4535
  %v4644 = vpack.c.bf16 %v2262, %v2261
  %v4645 = vpack.c.bf16 %v4295, %v4294
  %v4646 = vpack.c.bf16 %v4538, %v4537
  %v4647 = vpack.c.bf16 %v2264, %v2263
  %v4648 = vpack.c.bf16 %v4297, %v4296
  %v4649 = vpack.c.bf16 %v4540, %v4539
  %v4650 = vpack.c.bf16 %v2266, %v2265
  %v4651 = vpack.c.bf16 %v4299, %v4298
  %v4652 = vpack.c.bf16 %v4542, %v4541
  %v4653 = vpack.c.bf16 %v2268, %v2267
  %v4654 = vpack.c.bf16 %v4301, %v4300
  %v4655 = vpack.c.bf16 %v4544, %v4543
  %v4656 = vpack.c.bf16 %v2270, %v2269
  %v4657 = vpack.c.bf16 %v4303, %v4302
  %v4658 = vpack.c.bf16 %v4546, %v4545
  %v4659 = vpack.c.bf16 %v2272, %v2271
  %v4660 = vpack.c.bf16 %v4305, %v4304
  %v4661 = vpack.c.bf16 %v4548, %v4547
  %v4662 = vpack.c.bf16 %v2274, %v2273
  %v4663 = vpack.c.bf16 %v4307, %v4306
  %v4664 = vpack.c.bf16 %v4550, %v4549
  %v4665 = vpack.c.bf16 %v2276, %v2275
  %v4666 = vpack.c.bf16 %v4309, %v4308
  %v4667 = vpack.c.bf16 %v4552, %v4551
  %v4668 = vpack.c.bf16 %v2278, %v2277
  %v4669 = vpack.c.bf16 %v4311, %v4310
  %v4670 = vpack.c.bf16 %v4554, %v4553
  %v4671 = vpack.c.bf16 %v2280, %v2279
  %v4672 = vpack.c.bf16 %v4313, %v4312
  %v4673 = vpack.c.bf16 %v4556, %v4555
  %v4674 = vpack.c.bf16 %v2282, %v2281
  %v4675 = vpack.c.bf16 %v4315, %v4314
  %v4676 = vpack.c.bf16 %v4558, %v4557
  %v4677 = vpack.c.bf16 %v2284, %v2283
  %v4678 = vpack.c.bf16 %v4317, %v4316
  %v4679 = vpack.c.bf16 %v4560, %v4559
  %v4680 = vpack.c.bf16 %v2286, %v2285
  %v4681 = vpack.c.bf16 %v4319, %v4318
  %v4682 = vpack.c.bf16 %v4562, %v4561
  %v4683 = vpack.c.bf16 %v2288, %v2287
  %v4684 = vpack.c.bf16 %v4320, %v4320
  %v4685 = vpack.c.bf16 %v4563, %v4563
  %v4686 = vpack.c.bf16 %v2289, %v2289
  %v4687 = vld [vmem:[%s4] sm:$0xf]
  %v4688 = vld [vmem:[%s4 + $0x4] sm:$0xf]
  %v4689 = vld [vmem:[%s4 + $0x8] sm:$0xf]
  %v4690 = vld [vmem:[%s4 + $0xc] sm:$0xf]
  %v4691 = vld [vmem:[%s4 + $0x10] sm:$0xf]
  %v4692 = vld [vmem:[%s4 + $0x14] sm:$0xf]
  %v4693 = vld [vmem:[%s4 + $0x18] sm:$0xf]
  %v4694 = vld [vmem:[%s4 + $0x1c] sm:$0xf]
  %v4695 = vld [vmem:[%s4 + $0x20] sm:$0xf]
  %v4696 = vld [vmem:[%s4 + $0x24] sm:$0xf]
  %v4697 = vld [vmem:[%s4 + $0x28] sm:$0xf]
  %v4698 = vld [vmem:[%s4 + $0x2c] sm:$0xf]
  %v4699 = vld [vmem:[%s4 + $0x30] sm:$0xf]
  %v4700 = vld [vmem:[%s4 + $0x34] sm:$0xf]
  %v4701 = vld [vmem:[%s4 + $0x38] sm:$0xf]
  %v4702 = vld [vmem:[%s4 + $0x3c] sm:$0xf]
  %v4703 = vld [vmem:[%s4 + $0x40] sm:$0xf]
  %v4704 = vld [vmem:[%s4 + $0x44] sm:$0xf]
  %v4705 = vld [vmem:[%s4 + $0x48] sm:$0xf]
  %v4706 = vld [vmem:[%s4 + $0x4c] sm:$0xf]
  %v4707 = vld [vmem:[%s4 + $0x50] sm:$0xf]
  %v4708 = vld [vmem:[%s4 + $0x54] sm:$0xf]
  %v4709 = vld [vmem:[%s4 + $0x58] sm:$0xf]
  %v4710 = vld [vmem:[%s4 + $0x5c] sm:$0xf]
  %v4711 = vld [vmem:[%s4 + $0x60] sm:$0xf]
  %v4712 = vld [vmem:[%s4 + $0x64] sm:$0xf]
  %v4713 = vld [vmem:[%s4 + $0x68] sm:$0xf]
  %v4714 = vld [vmem:[%s4 + $0x6c] sm:$0xf]
  %v4715 = vld [vmem:[%s4 + $0x70] sm:$0xf]
  %v4716 = vld [vmem:[%s4 + $0x74] sm:$0xf]
  %v4717 = vld [vmem:[%s4 + $0x78] sm:$0xf]
  %v4718 = vld [vmem:[%s4 + $0x7c] sm:$0xf]
  %v4719 = vld [vmem:[%s4 + $0x80] sm:$0xf]
  %v4720 = vld [vmem:[%s4 + $0x84] sm:$0xf]
  %v4721 = vld [vmem:[%s4 + $0x88] sm:$0xf]
  %v4722 = vld [vmem:[%s4 + $0x8c] sm:$0xf]
  %v4723 = vld [vmem:[%s5] sm:$0x1]
  %v4725 = vlaneseq
  %v4726 = vshrl.u32 %v4725, 7
  %v4727 = vsub.s32 0, %v4726
  %v4728 = vrot.slane %v4723, %v4727
  %v4766 = vunpack.c.l.b16 %v4687
  %v4767 = vunpack.c.l.b16 %v4688
  %v4768 = vunpack.c.l.b16 %v4689
  %v4769 = vunpack.c.l.b16 %v4690
  %v4770 = vunpack.c.l.b16 %v4691
  %v4771 = vunpack.c.l.b16 %v4692
  %v4772 = vunpack.c.l.b16 %v4693
  %v4773 = vunpack.c.l.b16 %v4694
  %v4774 = vunpack.c.l.b16 %v4695
  %v4775 = vunpack.c.l.b16 %v4696
  %v4776 = vunpack.c.l.b16 %v4697
  %v4777 = vunpack.c.l.b16 %v4698
  %v4778 = vunpack.c.l.b16 %v4699
  %v4779 = vunpack.c.l.b16 %v4700
  %v4780 = vunpack.c.l.b16 %v4701
  %v4781 = vunpack.c.l.b16 %v4702
  %v4782 = vunpack.c.l.b16 %v4703
  %v4783 = vunpack.c.l.b16 %v4704
  %v4784 = vunpack.c.l.b16 %v4705
  %v4785 = vunpack.c.l.b16 %v4706
  %v4786 = vunpack.c.l.b16 %v4707
  %v4787 = vunpack.c.l.b16 %v4708
  %v4788 = vunpack.c.l.b16 %v4709
  %v4789 = vunpack.c.l.b16 %v4710
  %v4790 = vunpack.c.l.b16 %v4711
  %v4791 = vunpack.c.l.b16 %v4712
  %v4792 = vunpack.c.l.b16 %v4713
  %v4793 = vunpack.c.l.b16 %v4714
  %v4794 = vunpack.c.l.b16 %v4715
  %v4795 = vunpack.c.l.b16 %v4716
  %v4796 = vunpack.c.l.b16 %v4717
  %v4797 = vunpack.c.l.b16 %v4718
  %v4798 = vunpack.c.l.b16 %v4719
  %v4799 = vunpack.c.l.b16 %v4720
  %v4800 = vunpack.c.l.b16 %v4721
  %v4801 = vunpack.c.l.b16 %v4722
  %v4802 = vpack.c.b16 %v4767, %v4766
  %v4803 = vpack.c.b16 %v4769, %v4768
  %v4804 = vpack.c.b16 %v4771, %v4770
  %v4805 = vpack.c.b16 %v4773, %v4772
  %v4806 = vpack.c.b16 %v4775, %v4774
  %v4807 = vpack.c.b16 %v4777, %v4776
  %v4808 = vpack.c.b16 %v4779, %v4778
  %v4809 = vpack.c.b16 %v4781, %v4780
  %v4810 = vpack.c.b16 %v4783, %v4782
  %v4811 = vpack.c.b16 %v4785, %v4784
  %v4812 = vpack.c.b16 %v4787, %v4786
  %v4813 = vpack.c.b16 %v4789, %v4788
  %v4814 = vpack.c.b16 %v4791, %v4790
  %v4815 = vpack.c.b16 %v4793, %v4792
  %v4816 = vpack.c.b16 %v4795, %v4794
  %v4817 = vpack.c.b16 %v4797, %v4796
  %v4818 = vpack.c.b16 %v4799, %v4798
  %v4819 = vpack.c.b16 %v4801, %v4800
  %v4839 = vsel %vm105, %v4566, 0
  %v4842 = vsel %vm105, %v4569, 0
  %v4845 = vsel %vm105, %v4572, 0
  %v4848 = vsel %vm105, %v4575, 0
  %v4851 = vsel %vm105, %v4578, 0
  %v4854 = vsel %vm105, %v4581, 0
  %v4857 = vsel %vm105, %v4584, 0
  %v4860 = vsel %vm105, %v4587, 0
  %v4863 = vsel %vm105, %v4590, 0
  %v4866 = vsel %vm105, %v4593, 0
  %v4869 = vsel %vm105, %v4596, 0
  %v4872 = vsel %vm105, %v4599, 0
  %v4875 = vsel %vm105, %v4602, 0
  %v4878 = vsel %vm105, %v4605, 0
  %v4881 = vsel %vm105, %v4608, 0
  %v4884 = vsel %vm105, %v4611, 0
  %v4887 = vsel %vm105, %v4614, 0
  %v4890 = vsel %vm105, %v4617, 0
  %v4893 = vsel %vm105, %v4620, 0
  %v4896 = vsel %vm105, %v4623, 0
  %v4899 = vsel %vm105, %v4626, 0
  %v4902 = vsel %vm105, %v4629, 0
  %v4905 = vsel %vm105, %v4632, 0
  %v4908 = vsel %vm105, %v4635, 0
  %v4911 = vsel %vm105, %v4638, 0
  %v4914 = vsel %vm105, %v4641, 0
  %v4917 = vsel %vm105, %v4644, 0
  %v4920 = vsel %vm105, %v4647, 0
  %v4923 = vsel %vm105, %v4650, 0
  %v4926 = vsel %vm105, %v4653, 0
  %v4929 = vsel %vm105, %v4656, 0
  %v4932 = vsel %vm105, %v4659, 0
  %v4935 = vsel %vm105, %v4662, 0
  %v4938 = vsel %vm105, %v4665, 0
  %v4941 = vsel %vm105, %v4668, 0
  %v4944 = vsel %vm105, %v4671, 0
  %v4947 = vsel %vm105, %v4674, 0
  %v4950 = vsel %vm105, %v4677, 0
  %v4953 = vsel %vm105, %v4680, 0
  %v4956 = vsel %vm105, %v4683, 0
  %v4959 = vsel %vm105, %v4686, 0
  %4961 = vmatprep.subr.bf16.mxu0 0
  %4962 = vmatpush1.bf16.msra.mxu0 %v4802
  %4963 = vmatprep.subr.bf16.mxu0 0
  %4964 = vmatpush1.bf16.msra.mxu0 %v4803
  %4965 = vmatprep.subr.bf16.mxu0 0
  %4966 = vmatpush1.bf16.msra.mxu0 %v4804
  %4967 = vmatprep.subr.bf16.mxu0 0
  %4968 = vmatpush1.bf16.msra.mxu0 %v4805
  %4969 = vmatprep.subr.bf16.mxu0 0
  %4970 = vmatpush1.bf16.msra.mxu0 %v4806
  %4971 = vmatprep.subr.bf16.mxu0 0
  %4972 = vmatpush1.bf16.msra.mxu0 %v4807
  %4973 = vmatprep.subr.bf16.mxu0 0
  %4974 = vmatpush1.bf16.msra.mxu0 %v4808
  %4975 = vmatprep.subr.bf16.mxu0 0
  %4976 = vmatpush1.bf16.msra.mxu0 %v4809
  %4977 = vmatprep.subr.bf16.mxu0 0
  %4978 = vmatpush1.bf16.msra.mxu0 %v4810
  %4979 = vmatprep.subr.bf16.mxu0 0
  %4980 = vmatpush1.bf16.msra.mxu0 %v4811
  %4981 = vmatprep.subr.bf16.mxu0 0
  %4982 = vmatpush1.bf16.msra.mxu0 %v4812
  %4983 = vmatprep.subr.bf16.mxu0 0
  %4984 = vmatpush1.bf16.msra.mxu0 %v4813
  %4985 = vmatprep.subr.bf16.mxu0 0
  %4986 = vmatpush1.bf16.msra.mxu0 %v4814
  %4987 = vmatprep.subr.bf16.mxu0 0
  %4988 = vmatpush1.bf16.msra.mxu0 %v4815
  %4989 = vmatprep.subr.bf16.mxu0 0
  %4990 = vmatpush1.bf16.msra.mxu0 %v4816
  %4991 = vmatprep.subr.bf16.mxu0 0
  %4992 = vmatpush1.bf16.msra.mxu0 %v4817
  %4993 = vmatprep.mubr.bf16.mxu0 %v4565
  %4994 = vmatmul.mubr.bf16.gmra.mrb[0].mxu0 %v4564
  %v4995 = vpop.f32.mrb[0].mxu0
  %v4996 = vadd.f32 %v4728, %v4995
  %v4997 = vpop.f32.mrb[0].mxu0
  %v4998 = vpop.f32.mrb[0].mxu0
  %v4999 = vadd.f32 %v4728, %v4998
  %v5000 = vpop.f32.mrb[0].mxu0
  %5001 = vmatprep.mubr.bf16.mxu0 %v4568
  %5002 = vmatmul.mubr.bf16.gmra.mrb[0].mxu0 %v4567
  %v5003 = vpop.f32.mrb[0].mxu0
  %v5004 = vadd.f32 %v4728, %v5003
  %v5005 = vpop.f32.mrb[0].mxu0
  %v5006 = vpop.f32.mrb[0].mxu0
  %v5007 = vadd.f32 %v4728, %v5006
  %v5008 = vpop.f32.mrb[0].mxu0
  %5009 = vmatprep.mubr.bf16.mxu0 %v4571
  %5010 = vmatmul.mubr.bf16.gmra.mrb[0].mxu0 %v4570
  %v5011 = vpop.f32.mrb[0].mxu0
  %v5012 = vadd.f32 %v4728, %v5011
  %v5013 = vpop.f32.mrb[0].mxu0
  %v5014 = vpop.f32.mrb[0].mxu0
  %v5015 = vadd.f32 %v4728, %v5014
  %v5016 = vpop.f32.mrb[0].mxu0
  %5017 = vmatprep.mubr.bf16.mxu0 %v4574
  %5018 = vmatmul.mubr.bf16.gmra.mrb[0].mxu0 %v4573
  %v5019 = vpop.f32.mrb[0].mxu0
  %v5020 = vadd.f32 %v4728, %v5019
  %v5021 = vpop.f32.mrb[0].mxu0
  %v5022 = vpop.f32.mrb[0].mxu0
  %v5023 = vadd.f32 %v4728, %v5022
  %v5024 = vpop.f32.mrb[0].mxu0
  %5025 = vmatprep.mubr.bf16.mxu0 %v4577
  %5026 = vmatmul.mubr.bf16.gmra.mrb[0].mxu0 %v4576
  %v5027 = vpop.f32.mrb[0].mxu0
  %v5028 = vadd.f32 %v4728, %v5027
  %v5029 = vpop.f32.mrb[0].mxu0
  %v5030 = vpop.f32.mrb[0].mxu0
  %v5031 = vadd.f32 %v4728, %v5030
  %v5032 = vpop.f32.mrb[0].mxu0
  %5033 = vmatprep.mubr.bf16.mxu0 %v4580
  %5034 = vmatmul.mubr.bf16.gmra.mrb[0].mxu0 %v4579
  %v5035 = vpop.f32.mrb[0].mxu0
  %v5036 = vadd.f32 %v4728, %v5035
  %v5037 = vpop.f32.mrb[0].mxu0
  %v5038 = vpop.f32.mrb[0].mxu0
  %v5039 = vadd.f32 %v4728, %v5038
  %v5040 = vpop.f32.mrb[0].mxu0
  %5041 = vmatprep.mubr.bf16.mxu0 %v4583
  %5042 = vmatmul.mubr.bf16.gmra.mrb[0].mxu0 %v4582
  %v5043 = vpop.f32.mrb[0].mxu0
  %v5044 = vadd.f32 %v4728, %v5043
  %v5045 = vpop.f32.mrb[0].mxu0
  %v5046 = vpop.f32.mrb[0].mxu0
  %v5047 = vadd.f32 %v4728, %v5046
  %v5048 = vpop.f32.mrb[0].mxu0
  %5049 = vmatprep.mubr.bf16.mxu0 %v4586
  %5050 = vmatmul.mubr.bf16.gmra.mrb[0].mxu0 %v4585
  %v5051 = vpop.f32.mrb[0].mxu0
  %v5052 = vadd.f32 %v4728, %v5051
  %v5053 = vpop.f32.mrb[0].mxu0
  %v5054 = vpop.f32.mrb[0].mxu0
  %v5055 = vadd.f32 %v4728, %v5054
  %v5056 = vpop.f32.mrb[0].mxu0
  %5057 = vmatprep.mubr.bf16.mxu0 %v4589
  %5058 = vmatmul.mubr.bf16.gmra.mrb[0].mxu0 %v4588
  %v5059 = vpop.f32.mrb[0].mxu0
  %v5060 = vadd.f32 %v4728, %v5059
  %v5061 = vpop.f32.mrb[0].mxu0
  %v5062 = vpop.f32.mrb[0].mxu0
  %v5063 = vadd.f32 %v4728, %v5062
  %v5064 = vpop.f32.mrb[0].mxu0
  %5065 = vmatprep.mubr.bf16.mxu0 %v4592
  %5066 = vmatmul.mubr.bf16.gmra.mrb[0].mxu0 %v4591
  %v5067 = vpop.f32.mrb[0].mxu0
  %v5068 = vadd.f32 %v4728, %v5067
  %v5069 = vpop.f32.mrb[0].mxu0
  %v5070 = vpop.f32.mrb[0].mxu0
  %v5071 = vadd.f32 %v4728, %v5070
  %v5072 = vpop.f32.mrb[0].mxu0
  %5073 = vmatprep.mubr.bf16.mxu0 %v4595
  %5074 = vmatmul.mubr.bf16.gmra.mrb[0].mxu0 %v4594
  %v5075 = vpop.f32.mrb[0].mxu0
  %v5076 = vadd.f32 %v4728, %v5075
  %v5077 = vpop.f32.mrb[0].mxu0
  %v5078 = vpop.f32.mrb[0].mxu0
  %v5079 = vadd.f32 %v4728, %v5078
  %v5080 = vpop.f32.mrb[0].mxu0
  %5081 = vmatprep.mubr.bf16.mxu0 %v4598
  %5082 = vmatmul.mubr.bf16.gmra.mrb[0].mxu0 %v4597
  %v5083 = vpop.f32.mrb[0].mxu0
  %v5084 = vadd.f32 %v4728, %v5083
  %v5085 = vpop.f32.mrb[0].mxu0
  %v5086 = vpop.f32.mrb[0].mxu0
  %v5087 = vadd.f32 %v4728, %v5086
  %v5088 = vpop.f32.mrb[0].mxu0
  %5089 = vmatprep.mubr.bf16.mxu0 %v4601
  %5090 = vmatmul.mubr.bf16.gmra.mrb[0].mxu0 %v4600
  %v5091 = vpop.f32.mrb[0].mxu0
  %v5092 = vadd.f32 %v4728, %v5091
  %v5093 = vpop.f32.mrb[0].mxu0
  %v5094 = vpop.f32.mrb[0].mxu0
  %v5095 = vadd.f32 %v4728, %v5094
  %v5096 = vpop.f32.mrb[0].mxu0
  %5097 = vmatprep.mubr.bf16.mxu0 %v4604
  %5098 = vmatmul.mubr.bf16.gmra.mrb[0].mxu0 %v4603
  %v5099 = vpop.f32.mrb[0].mxu0
  %v5100 = vadd.f32 %v4728, %v5099
  %v5101 = vpop.f32.mrb[0].mxu0
  %v5102 = vpop.f32.mrb[0].mxu0
  %v5103 = vadd.f32 %v4728, %v5102
  %v5104 = vpop.f32.mrb[0].mxu0
  %5105 = vmatprep.mubr.bf16.mxu0 %v4607
  %5106 = vmatmul.mubr.bf16.gmra.mrb[0].mxu0 %v4606
  %v5107 = vpop.f32.mrb[0].mxu0
  %v5108 = vadd.f32 %v4728, %v5107
  %v5109 = vpop.f32.mrb[0].mxu0
  %v5110 = vpop.f32.mrb[0].mxu0
  %v5111 = vadd.f32 %v4728, %v5110
  %v5112 = vpop.f32.mrb[0].mxu0
  %5113 = vmatprep.mubr.bf16.mxu0 %v4610
  %5114 = vmatmul.mubr.bf16.gmra.mrb[0].mxu0 %v4609
  %v5115 = vpop.f32.mrb[0].mxu0
  %v5116 = vadd.f32 %v4728, %v5115
  %v5117 = vpop.f32.mrb[0].mxu0
  %v5118 = vpop.f32.mrb[0].mxu0
  %v5119 = vadd.f32 %v4728, %v5118
  %v5120 = vpop.f32.mrb[0].mxu0
  %5121 = vmatprep.mubr.bf16.mxu0 %v4613
  %5122 = vmatmul.mubr.bf16.gmra.mrb[0].mxu0 %v4612
  %v5123 = vpop.f32.mrb[0].mxu0
  %v5124 = vadd.f32 %v4728, %v5123
  %v5125 = vpop.f32.mrb[0].mxu0
  %v5126 = vpop.f32.mrb[0].mxu0
  %v5127 = vadd.f32 %v4728, %v5126
  %v5128 = vpop.f32.mrb[0].mxu0
  %5129 = vmatprep.mubr.bf16.mxu0 %v4616
  %5130 = vmatmul.mubr.bf16.gmra.mrb[0].mxu0 %v4615
  %v5131 = vpop.f32.mrb[0].mxu0
  %v5132 = vadd.f32 %v4728, %v5131
  %v5133 = vpop.f32.mrb[0].mxu0
  %v5134 = vpop.f32.mrb[0].mxu0
  %v5135 = vadd.f32 %v4728, %v5134
  %v5136 = vpop.f32.mrb[0].mxu0
  %5137 = vmatprep.mubr.bf16.mxu0 %v4619
  %5138 = vmatmul.mubr.bf16.gmra.mrb[0].mxu0 %v4618
  %v5139 = vpop.f32.mrb[0].mxu0
  %v5140 = vadd.f32 %v4728, %v5139
  %v5141 = vpop.f32.mrb[0].mxu0
  %v5142 = vpop.f32.mrb[0].mxu0
  %v5143 = vadd.f32 %v4728, %v5142
  %v5144 = vpop.f32.mrb[0].mxu0
  %5145 = vmatprep.mubr.bf16.mxu0 %v4622
  %5146 = vmatmul.mubr.bf16.gmra.mrb[0].mxu0 %v4621
  %v5147 = vpop.f32.mrb[0].mxu0
  %v5148 = vadd.f32 %v4728, %v5147
  %v5149 = vpop.f32.mrb[0].mxu0
  %v5150 = vpop.f32.mrb[0].mxu0
  %v5151 = vadd.f32 %v4728, %v5150
  %v5152 = vpop.f32.mrb[0].mxu0
  %5153 = vmatprep.mubr.bf16.mxu0 %v4625
  %5154 = vmatmul.mubr.bf16.gmra.mrb[0].mxu0 %v4624
  %v5155 = vpop.f32.mrb[0].mxu0
  %v5156 = vadd.f32 %v4728, %v5155
  %v5157 = vpop.f32.mrb[0].mxu0
  %v5158 = vpop.f32.mrb[0].mxu0
  %v5159 = vadd.f32 %v4728, %v5158
  %v5160 = vpop.f32.mrb[0].mxu0
  %5161 = vmatprep.mubr.bf16.mxu0 %v4628
  %5162 = vmatmul.mubr.bf16.gmra.mrb[0].mxu0 %v4627
  %v5163 = vpop.f32.mrb[0].mxu0
  %v5164 = vadd.f32 %v4728, %v5163
  %v5165 = vpop.f32.mrb[0].mxu0
  %v5166 = vpop.f32.mrb[0].mxu0
  %v5167 = vadd.f32 %v4728, %v5166
  %v5168 = vpop.f32.mrb[0].mxu0
  %5169 = vmatprep.mubr.bf16.mxu0 %v4631
  %5170 = vmatmul.mubr.bf16.gmra.mrb[0].mxu0 %v4630
  %v5171 = vpop.f32.mrb[0].mxu0
  %v5172 = vadd.f32 %v4728, %v5171
  %v5173 = vpop.f32.mrb[0].mxu0
  %v5174 = vpop.f32.mrb[0].mxu0
  %v5175 = vadd.f32 %v4728, %v5174
  %v5176 = vpop.f32.mrb[0].mxu0
  %5177 = vmatprep.mubr.bf16.mxu0 %v4634
  %5178 = vmatmul.mubr.bf16.gmra.mrb[0].mxu0 %v4633
  %v5179 = vpop.f32.mrb[0].mxu0
  %v5180 = vadd.f32 %v4728, %v5179
  %v5181 = vpop.f32.mrb[0].mxu0
  %v5182 = vpop.f32.mrb[0].mxu0
  %v5183 = vadd.f32 %v4728, %v5182
  %v5184 = vpop.f32.mrb[0].mxu0
  %5185 = vmatprep.mubr.bf16.mxu0 %v4637
  %5186 = vmatmul.mubr.bf16.gmra.mrb[0].mxu0 %v4636
  %v5187 = vpop.f32.mrb[0].mxu0
  %v5188 = vadd.f32 %v4728, %v5187
  %v5189 = vpop.f32.mrb[0].mxu0
  %v5190 = vpop.f32.mrb[0].mxu0
  %v5191 = vadd.f32 %v4728, %v5190
  %v5192 = vpop.f32.mrb[0].mxu0
  %5193 = vmatprep.mubr.bf16.mxu0 %v4640
  %5194 = vmatmul.mubr.bf16.gmra.mrb[0].mxu0 %v4639
  %v5195 = vpop.f32.mrb[0].mxu0
  %v5196 = vadd.f32 %v4728, %v5195
  %v5197 = vpop.f32.mrb[0].mxu0
  %v5198 = vpop.f32.mrb[0].mxu0
  %v5199 = vadd.f32 %v4728, %v5198
  %v5200 = vpop.f32.mrb[0].mxu0
  %5201 = vmatprep.mubr.bf16.mxu0 %v4643
  %5202 = vmatmul.mubr.bf16.gmra.mrb[0].mxu0 %v4642
  %v5203 = vpop.f32.mrb[0].mxu0
  %v5204 = vadd.f32 %v4728, %v5203
  %v5205 = vpop.f32.mrb[0].mxu0
  %v5206 = vpop.f32.mrb[0].mxu0
  %v5207 = vadd.f32 %v4728, %v5206
  %v5208 = vpop.f32.mrb[0].mxu0
  %5209 = vmatprep.mubr.bf16.mxu0 %v4646
  %5210 = vmatmul.mubr.bf16.gmra.mrb[0].mxu0 %v4645
  %v5211 = vpop.f32.mrb[0].mxu0
  %v5212 = vadd.f32 %v4728, %v5211
  %v5213 = vpop.f32.mrb[0].mxu0
  %v5214 = vpop.f32.mrb[0].mxu0
  %v5215 = vadd.f32 %v4728, %v5214
  %v5216 = vpop.f32.mrb[0].mxu0
  %5217 = vmatprep.mubr.bf16.mxu0 %v4649
  %5218 = vmatmul.mubr.bf16.gmra.mrb[0].mxu0 %v4648
  %v5219 = vpop.f32.mrb[0].mxu0
  %v5220 = vadd.f32 %v4728, %v5219
  %v5221 = vpop.f32.mrb[0].mxu0
  %v5222 = vpop.f32.mrb[0].mxu0
  %v5223 = vadd.f32 %v4728, %v5222
  %v5224 = vpop.f32.mrb[0].mxu0
  %5225 = vmatprep.mubr.bf16.mxu0 %v4652
  %5226 = vmatmul.mubr.bf16.gmra.mrb[0].mxu0 %v4651
  %v5227 = vpop.f32.mrb[0].mxu0
  %v5228 = vadd.f32 %v4728, %v5227
  %v5229 = vpop.f32.mrb[0].mxu0
  %v5230 = vpop.f32.mrb[0].mxu0
  %v5231 = vadd.f32 %v4728, %v5230
  %v5232 = vpop.f32.mrb[0].mxu0
  %5233 = vmatprep.mubr.bf16.mxu0 %v4655
  %5234 = vmatmul.mubr.bf16.gmra.mrb[0].mxu0 %v4654
  %v5235 = vpop.f32.mrb[0].mxu0
  %v5236 = vadd.f32 %v4728, %v5235
  %v5237 = vpop.f32.mrb[0].mxu0
  %v5238 = vpop.f32.mrb[0].mxu0
  %v5239 = vadd.f32 %v4728, %v5238
  %v5240 = vpop.f32.mrb[0].mxu0
  %5241 = vmatprep.mubr.bf16.mxu0 %v4658
  %5242 = vmatmul.mubr.bf16.gmra.mrb[0].mxu0 %v4657
  %v5243 = vpop.f32.mrb[0].mxu0
  %v5244 = vadd.f32 %v4728, %v5243
  %v5245 = vpop.f32.mrb[0].mxu0
  %v5246 = vpop.f32.mrb[0].mxu0
  %v5247 = vadd.f32 %v4728, %v5246
  %v5248 = vpop.f32.mrb[0].mxu0
  %5249 = vmatprep.mubr.bf16.mxu0 %v4661
  %5250 = vmatmul.mubr.bf16.gmra.mrb[0].mxu0 %v4660
  %v5251 = vpop.f32.mrb[0].mxu0
  %v5252 = vadd.f32 %v4728, %v5251
  %v5253 = vpop.f32.mrb[0].mxu0
  %v5254 = vpop.f32.mrb[0].mxu0
  %v5255 = vadd.f32 %v4728, %v5254
  %v5256 = vpop.f32.mrb[0].mxu0
  %5257 = vmatprep.mubr.bf16.mxu0 %v4664
  %5258 = vmatmul.mubr.bf16.gmra.mrb[0].mxu0 %v4663
  %v5259 = vpop.f32.mrb[0].mxu0
  %v5260 = vadd.f32 %v4728, %v5259
  %v5261 = vpop.f32.mrb[0].mxu0
  %v5262 = vpop.f32.mrb[0].mxu0
  %v5263 = vadd.f32 %v4728, %v5262
  %v5264 = vpop.f32.mrb[0].mxu0
  %5265 = vmatprep.mubr.bf16.mxu0 %v4667
  %5266 = vmatmul.mubr.bf16.gmra.mrb[0].mxu0 %v4666
  %v5267 = vpop.f32.mrb[0].mxu0
  %v5268 = vadd.f32 %v4728, %v5267
  %v5269 = vpop.f32.mrb[0].mxu0
  %v5270 = vpop.f32.mrb[0].mxu0
  %v5271 = vadd.f32 %v4728, %v5270
  %v5272 = vpop.f32.mrb[0].mxu0
  %5273 = vmatprep.mubr.bf16.mxu0 %v4670
  %5274 = vmatmul.mubr.bf16.gmra.mrb[0].mxu0 %v4669
  %v5275 = vpop.f32.mrb[0].mxu0
  %v5276 = vadd.f32 %v4728, %v5275
  %v5277 = vpop.f32.mrb[0].mxu0
  %v5278 = vpop.f32.mrb[0].mxu0
  %v5279 = vadd.f32 %v4728, %v5278
  %v5280 = vpop.f32.mrb[0].mxu0
  %5281 = vmatprep.mubr.bf16.mxu0 %v4673
  %5282 = vmatmul.mubr.bf16.gmra.mrb[0].mxu0 %v4672
  %v5283 = vpop.f32.mrb[0].mxu0
  %v5284 = vadd.f32 %v4728, %v5283
  %v5285 = vpop.f32.mrb[0].mxu0
  %v5286 = vpop.f32.mrb[0].mxu0
  %v5287 = vadd.f32 %v4728, %v5286
  %v5288 = vpop.f32.mrb[0].mxu0
  %5289 = vmatprep.mubr.bf16.mxu0 %v4676
  %5290 = vmatmul.mubr.bf16.gmra.mrb[0].mxu0 %v4675
  %v5291 = vpop.f32.mrb[0].mxu0
  %v5292 = vadd.f32 %v4728, %v5291
  %v5293 = vpop.f32.mrb[0].mxu0
  %v5294 = vpop.f32.mrb[0].mxu0
  %v5295 = vadd.f32 %v4728, %v5294
  %v5296 = vpop.f32.mrb[0].mxu0
  %5297 = vmatprep.mubr.bf16.mxu0 %v4679
  %5298 = vmatmul.mubr.bf16.gmra.mrb[0].mxu0 %v4678
  %v5299 = vpop.f32.mrb[0].mxu0
  %v5300 = vadd.f32 %v4728, %v5299
  %v5301 = vpop.f32.mrb[0].mxu0
  %v5302 = vpop.f32.mrb[0].mxu0
  %v5303 = vadd.f32 %v4728, %v5302
  %v5304 = vpop.f32.mrb[0].mxu0
  %5305 = vmatprep.mubr.bf16.mxu0 %v4682
  %5306 = vmatmul.mubr.bf16.gmra.mrb[0].mxu0 %v4681
  %v5307 = vpop.f32.mrb[0].mxu0
  %v5308 = vadd.f32 %v4728, %v5307
  %v5309 = vpop.f32.mrb[0].mxu0
  %v5310 = vpop.f32.mrb[0].mxu0
  %v5311 = vadd.f32 %v4728, %v5310
  %v5312 = vpop.f32.mrb[0].mxu0
  %5313 = vmatprep.mubr.bf16.mxu0 %v4685
  %5314 = vmatmul.mubr.bf16.gmra.mrb[0].mxu0 %v4684
  %v5315 = vpop.f32.mrb[0].mxu0
  %v5316 = vadd.f32 %v4728, %v5315
  %v5317 = vpop.f32.mrb[0].mxu0
  %v5318 = vpop.f32.mrb[0].mxu0
  %v5319 = vpop.f32.mrb[0].mxu0
  %5320 = vdwg.mxu0
  %5321 = vmatprep.subr.bf16.mxu0 0
  %5322 = vmatpush1.bf16.msra.mxu0 %v4818
  %5323 = vmatprep.subr.bf16.mxu0 0
  %5324 = vmatpush1.bf16.msra.mxu0 %v4819
  %5325 = vmatprep.subr.bf16.mxu0 0
  %5326 = vmatpush1.bf16.msra.mxu0 0
  %5327 = vmatprep.subr.bf16.mxu0 0
  %5328 = vmatpush1.bf16.msra.mxu0 0
  %5329 = vmatprep.subr.bf16.mxu0 0
  %5330 = vmatpush1.bf16.msra.mxu0 0
  %5331 = vmatprep.subr.bf16.mxu0 0
  %5332 = vmatpush1.bf16.msra.mxu0 0
  %5333 = vmatprep.subr.bf16.mxu0 0
  %5334 = vmatpush1.bf16.msra.mxu0 0
  %5335 = vmatprep.subr.bf16.mxu0 0
  %5336 = vmatpush1.bf16.msra.mxu0 0
  %5337 = vmatprep.subr.bf16.mxu0 0
  %5338 = vmatpush1.bf16.msra.mxu0 0
  %5339 = vmatprep.subr.bf16.mxu0 0
  %5340 = vmatpush1.bf16.msra.mxu0 0
  %5341 = vmatprep.subr.bf16.mxu0 0
  %5342 = vmatpush1.bf16.msra.mxu0 0
  %5343 = vmatprep.subr.bf16.mxu0 0
  %5344 = vmatpush1.bf16.msra.mxu0 0
  %5345 = vmatprep.subr.bf16.mxu0 0
  %5346 = vmatpush1.bf16.msra.mxu0 0
  %5347 = vmatprep.subr.bf16.mxu0 0
  %5348 = vmatpush1.bf16.msra.mxu0 0
  %5349 = vmatprep.subr.bf16.mxu0 0
  %5350 = vmatpush1.bf16.msra.mxu0 0
  %5351 = vmatprep.subr.bf16.mxu0 0
  %5352 = vmatpush1.bf16.msra.mxu0 0
  %5353 = vmatprep.mubr.bf16.mxu0 0
  %5354 = vmatmul.mubr.bf16.gmra.mrb[0].mxu0 %v4839
  %v5355 = vpop.f32.mrb[0].mxu0
  %v5356 = vadd.f32 %v4996, %v5355
  %v5357 = vpop.f32.mrb[0].mxu0
  %v5358 = vpop.f32.mrb[0].mxu0
  %v5359 = vadd.f32 %v4999, %v5358
  %v5360 = vpop.f32.mrb[0].mxu0
  %5361 = vmatprep.mubr.bf16.mxu0 0
  %5362 = vmatmul.mubr.bf16.gmra.mrb[0].mxu0 %v4842
  %v5363 = vpop.f32.mrb[0].mxu0
  %v5364 = vadd.f32 %v5004, %v5363
  %v5365 = vpop.f32.mrb[0].mxu0
  %v5366 = vpop.f32.mrb[0].mxu0
  %v5367 = vadd.f32 %v5007, %v5366
  %v5368 = vpop.f32.mrb[0].mxu0
  %5369 = vmatprep.mubr.bf16.mxu0 0
  %5370 = vmatmul.mubr.bf16.gmra.mrb[0].mxu0 %v4845
  %v5371 = vpop.f32.mrb[0].mxu0
  %v5372 = vadd.f32 %v5012, %v5371
  %v5373 = vpop.f32.mrb[0].mxu0
  %v5374 = vpop.f32.mrb[0].mxu0
  %v5375 = vadd.f32 %v5015, %v5374
  %v5376 = vpop.f32.mrb[0].mxu0
  %5377 = vmatprep.mubr.bf16.mxu0 0
  %5378 = vmatmul.mubr.bf16.gmra.mrb[0].mxu0 %v4848
  %v5379 = vpop.f32.mrb[0].mxu0
  %v5380 = vadd.f32 %v5020, %v5379
  %v5381 = vpop.f32.mrb[0].mxu0
  %v5382 = vpop.f32.mrb[0].mxu0
  %v5383 = vadd.f32 %v5023, %v5382
  %v5384 = vpop.f32.mrb[0].mxu0
  %5385 = vmatprep.mubr.bf16.mxu0 0
  %5386 = vmatmul.mubr.bf16.gmra.mrb[0].mxu0 %v4851
  %v5387 = vpop.f32.mrb[0].mxu0
  %v5388 = vadd.f32 %v5028, %v5387
  %v5389 = vpop.f32.mrb[0].mxu0
  %v5390 = vpop.f32.mrb[0].mxu0
  %v5391 = vadd.f32 %v5031, %v5390
  %v5392 = vpop.f32.mrb[0].mxu0
  %5393 = vmatprep.mubr.bf16.mxu0 0
  %5394 = vmatmul.mubr.bf16.gmra.mrb[0].mxu0 %v4854
  %v5395 = vpop.f32.mrb[0].mxu0
  %v5396 = vadd.f32 %v5036, %v5395
  %v5397 = vpop.f32.mrb[0].mxu0
  %v5398 = vpop.f32.mrb[0].mxu0
  %v5399 = vadd.f32 %v5039, %v5398
  %v5400 = vpop.f32.mrb[0].mxu0
  %5401 = vmatprep.mubr.bf16.mxu0 0
  %5402 = vmatmul.mubr.bf16.gmra.mrb[0].mxu0 %v4857
  %v5403 = vpop.f32.mrb[0].mxu0
  %v5404 = vadd.f32 %v5044, %v5403
  %v5405 = vpop.f32.mrb[0].mxu0
  %v5406 = vpop.f32.mrb[0].mxu0
  %v5407 = vadd.f32 %v5047, %v5406
  %v5408 = vpop.f32.mrb[0].mxu0
  %5409 = vmatprep.mubr.bf16.mxu0 0
  %5410 = vmatmul.mubr.bf16.gmra.mrb[0].mxu0 %v4860
  %v5411 = vpop.f32.mrb[0].mxu0
  %v5412 = vadd.f32 %v5052, %v5411
  %v5413 = vpop.f32.mrb[0].mxu0
  %v5414 = vpop.f32.mrb[0].mxu0
  %v5415 = vadd.f32 %v5055, %v5414
  %v5416 = vpop.f32.mrb[0].mxu0
  %5417 = vmatprep.mubr.bf16.mxu0 0
  %5418 = vmatmul.mubr.bf16.gmra.mrb[0].mxu0 %v4863
  %v5419 = vpop.f32.mrb[0].mxu0
  %v5420 = vadd.f32 %v5060, %v5419
  %v5421 = vpop.f32.mrb[0].mxu0
  %v5422 = vpop.f32.mrb[0].mxu0
  %v5423 = vadd.f32 %v5063, %v5422
  %v5424 = vpop.f32.mrb[0].mxu0
  %5425 = vmatprep.mubr.bf16.mxu0 0
  %5426 = vmatmul.mubr.bf16.gmra.mrb[0].mxu0 %v4866
  %v5427 = vpop.f32.mrb[0].mxu0
  %v5428 = vadd.f32 %v5068, %v5427
  %v5429 = vpop.f32.mrb[0].mxu0
  %v5430 = vpop.f32.mrb[0].mxu0
  %v5431 = vadd.f32 %v5071, %v5430
  %v5432 = vpop.f32.mrb[0].mxu0
  %5433 = vmatprep.mubr.bf16.mxu0 0
  %5434 = vmatmul.mubr.bf16.gmra.mrb[0].mxu0 %v4869
  %v5435 = vpop.f32.mrb[0].mxu0
  %v5436 = vadd.f32 %v5076, %v5435
  %v5437 = vpop.f32.mrb[0].mxu0
  %v5438 = vpop.f32.mrb[0].mxu0
  %v5439 = vadd.f32 %v5079, %v5438
  %v5440 = vpop.f32.mrb[0].mxu0
  %5441 = vmatprep.mubr.bf16.mxu0 0
  %5442 = vmatmul.mubr.bf16.gmra.mrb[0].mxu0 %v4872
  %v5443 = vpop.f32.mrb[0].mxu0
  %v5444 = vadd.f32 %v5084, %v5443
  %v5445 = vpop.f32.mrb[0].mxu0
  %v5446 = vpop.f32.mrb[0].mxu0
  %v5447 = vadd.f32 %v5087, %v5446
  %v5448 = vpop.f32.mrb[0].mxu0
  %5449 = vmatprep.mubr.bf16.mxu0 0
  %5450 = vmatmul.mubr.bf16.gmra.mrb[0].mxu0 %v4875
  %v5451 = vpop.f32.mrb[0].mxu0
  %v5452 = vadd.f32 %v5092, %v5451
  %v5453 = vpop.f32.mrb[0].mxu0
  %v5454 = vpop.f32.mrb[0].mxu0
  %v5455 = vadd.f32 %v5095, %v5454
  %v5456 = vpop.f32.mrb[0].mxu0
  %5457 = vmatprep.mubr.bf16.mxu0 0
  %5458 = vmatmul.mubr.bf16.gmra.mrb[0].mxu0 %v4878
  %v5459 = vpop.f32.mrb[0].mxu0
  %v5460 = vadd.f32 %v5100, %v5459
  %v5461 = vpop.f32.mrb[0].mxu0
  %v5462 = vpop.f32.mrb[0].mxu0
  %v5463 = vadd.f32 %v5103, %v5462
  %v5464 = vpop.f32.mrb[0].mxu0
  %5465 = vmatprep.mubr.bf16.mxu0 0
  %5466 = vmatmul.mubr.bf16.gmra.mrb[0].mxu0 %v4881
  %v5467 = vpop.f32.mrb[0].mxu0
  %v5468 = vadd.f32 %v5108, %v5467
  %v5469 = vpop.f32.mrb[0].mxu0
  %v5470 = vpop.f32.mrb[0].mxu0
  %v5471 = vadd.f32 %v5111, %v5470
  %v5472 = vpop.f32.mrb[0].mxu0
  %5473 = vmatprep.mubr.bf16.mxu0 0
  %5474 = vmatmul.mubr.bf16.gmra.mrb[0].mxu0 %v4884
  %v5475 = vpop.f32.mrb[0].mxu0
  %v5476 = vadd.f32 %v5116, %v5475
  %v5477 = vpop.f32.mrb[0].mxu0
  %v5478 = vpop.f32.mrb[0].mxu0
  %v5479 = vadd.f32 %v5119, %v5478
  %v5480 = vpop.f32.mrb[0].mxu0
  %5481 = vmatprep.mubr.bf16.mxu0 0
  %5482 = vmatmul.mubr.bf16.gmra.mrb[0].mxu0 %v4887
  %v5483 = vpop.f32.mrb[0].mxu0
  %v5484 = vadd.f32 %v5124, %v5483
  %v5485 = vpop.f32.mrb[0].mxu0
  %v5486 = vpop.f32.mrb[0].mxu0
  %v5487 = vadd.f32 %v5127, %v5486
  %v5488 = vpop.f32.mrb[0].mxu0
  %5489 = vmatprep.mubr.bf16.mxu0 0
  %5490 = vmatmul.mubr.bf16.gmra.mrb[0].mxu0 %v4890
  %v5491 = vpop.f32.mrb[0].mxu0
  %v5492 = vadd.f32 %v5132, %v5491
  %v5493 = vpop.f32.mrb[0].mxu0
  %v5494 = vpop.f32.mrb[0].mxu0
  %v5495 = vadd.f32 %v5135, %v5494
  %v5496 = vpop.f32.mrb[0].mxu0
  %5497 = vmatprep.mubr.bf16.mxu0 0
  %5498 = vmatmul.mubr.bf16.gmra.mrb[0].mxu0 %v4893
  %v5499 = vpop.f32.mrb[0].mxu0
  %v5500 = vadd.f32 %v5140, %v5499
  %v5501 = vpop.f32.mrb[0].mxu0
  %v5502 = vpop.f32.mrb[0].mxu0
  %v5503 = vadd.f32 %v5143, %v5502
  %v5504 = vpop.f32.mrb[0].mxu0
  %5505 = vmatprep.mubr.bf16.mxu0 0
  %5506 = vmatmul.mubr.bf16.gmra.mrb[0].mxu0 %v4896
  %v5507 = vpop.f32.mrb[0].mxu0
  %v5508 = vadd.f32 %v5148, %v5507
  %v5509 = vpop.f32.mrb[0].mxu0
  %v5510 = vpop.f32.mrb[0].mxu0
  %v5511 = vadd.f32 %v5151, %v5510
  %v5512 = vpop.f32.mrb[0].mxu0
  %5513 = vmatprep.mubr.bf16.mxu0 0
  %5514 = vmatmul.mubr.bf16.gmra.mrb[0].mxu0 %v4899
  %v5515 = vpop.f32.mrb[0].mxu0
  %v5516 = vadd.f32 %v5156, %v5515
  %v5517 = vpop.f32.mrb[0].mxu0
  %v5518 = vpop.f32.mrb[0].mxu0
  %v5519 = vadd.f32 %v5159, %v5518
  %v5520 = vpop.f32.mrb[0].mxu0
  %5521 = vmatprep.mubr.bf16.mxu0 0
  %5522 = vmatmul.mubr.bf16.gmra.mrb[0].mxu0 %v4902
  %v5523 = vpop.f32.mrb[0].mxu0
  %v5524 = vadd.f32 %v5164, %v5523
  %v5525 = vpop.f32.mrb[0].mxu0
  %v5526 = vpop.f32.mrb[0].mxu0
  %v5527 = vadd.f32 %v5167, %v5526
  %v5528 = vpop.f32.mrb[0].mxu0
  %5529 = vmatprep.mubr.bf16.mxu0 0
  %5530 = vmatmul.mubr.bf16.gmra.mrb[0].mxu0 %v4905
  %v5531 = vpop.f32.mrb[0].mxu0
  %v5532 = vadd.f32 %v5172, %v5531
  %v5533 = vpop.f32.mrb[0].mxu0
  %v5534 = vpop.f32.mrb[0].mxu0
  %v5535 = vadd.f32 %v5175, %v5534
  %v5536 = vpop.f32.mrb[0].mxu0
  %5537 = vmatprep.mubr.bf16.mxu0 0
  %5538 = vmatmul.mubr.bf16.gmra.mrb[0].mxu0 %v4908
  %v5539 = vpop.f32.mrb[0].mxu0
  %v5540 = vadd.f32 %v5180, %v5539
  %v5541 = vpop.f32.mrb[0].mxu0
  %v5542 = vpop.f32.mrb[0].mxu0
  %v5543 = vadd.f32 %v5183, %v5542
  %v5544 = vpop.f32.mrb[0].mxu0
  %5545 = vmatprep.mubr.bf16.mxu0 0
  %5546 = vmatmul.mubr.bf16.gmra.mrb[0].mxu0 %v4911
  %v5547 = vpop.f32.mrb[0].mxu0
  %v5548 = vadd.f32 %v5188, %v5547
  %v5549 = vpop.f32.mrb[0].mxu0
  %v5550 = vpop.f32.mrb[0].mxu0
  %v5551 = vadd.f32 %v5191, %v5550
  %v5552 = vpop.f32.mrb[0].mxu0
  %5553 = vmatprep.mubr.bf16.mxu0 0
  %5554 = vmatmul.mubr.bf16.gmra.mrb[0].mxu0 %v4914
  %v5555 = vpop.f32.mrb[0].mxu0
  %v5556 = vadd.f32 %v5196, %v5555
  %v5557 = vpop.f32.mrb[0].mxu0
  %v5558 = vpop.f32.mrb[0].mxu0
  %v5559 = vadd.f32 %v5199, %v5558
  %v5560 = vpop.f32.mrb[0].mxu0
  %5561 = vmatprep.mubr.bf16.mxu0 0
  %5562 = vmatmul.mubr.bf16.gmra.mrb[0].mxu0 %v4917
  %v5563 = vpop.f32.mrb[0].mxu0
  %v5564 = vadd.f32 %v5204, %v5563
  %v5565 = vpop.f32.mrb[0].mxu0
  %v5566 = vpop.f32.mrb[0].mxu0
  %v5567 = vadd.f32 %v5207, %v5566
  %v5568 = vpop.f32.mrb[0].mxu0
  %5569 = vmatprep.mubr.bf16.mxu0 0
  %5570 = vmatmul.mubr.bf16.gmra.mrb[0].mxu0 %v4920
  %v5571 = vpop.f32.mrb[0].mxu0
  %v5572 = vadd.f32 %v5212, %v5571
  %v5573 = vpop.f32.mrb[0].mxu0
  %v5574 = vpop.f32.mrb[0].mxu0
  %v5575 = vadd.f32 %v5215, %v5574
  %v5576 = vpop.f32.mrb[0].mxu0
  %5577 = vmatprep.mubr.bf16.mxu0 0
  %5578 = vmatmul.mubr.bf16.gmra.mrb[0].mxu0 %v4923
  %v5579 = vpop.f32.mrb[0].mxu0
  %v5580 = vadd.f32 %v5220, %v5579
  %v5581 = vpop.f32.mrb[0].mxu0
  %v5582 = vpop.f32.mrb[0].mxu0
  %v5583 = vadd.f32 %v5223, %v5582
  %v5584 = vpop.f32.mrb[0].mxu0
  %5585 = vmatprep.mubr.bf16.mxu0 0
  %5586 = vmatmul.mubr.bf16.gmra.mrb[0].mxu0 %v4926
  %v5587 = vpop.f32.mrb[0].mxu0
  %v5588 = vadd.f32 %v5228, %v5587
  %v5589 = vpop.f32.mrb[0].mxu0
  %v5590 = vpop.f32.mrb[0].mxu0
  %v5591 = vadd.f32 %v5231, %v5590
  %v5592 = vpop.f32.mrb[0].mxu0
  %5593 = vmatprep.mubr.bf16.mxu0 0
  %5594 = vmatmul.mubr.bf16.gmra.mrb[0].mxu0 %v4929
  %v5595 = vpop.f32.mrb[0].mxu0
  %v5596 = vadd.f32 %v5236, %v5595
  %v5597 = vpop.f32.mrb[0].mxu0
  %v5598 = vpop.f32.mrb[0].mxu0
  %v5599 = vadd.f32 %v5239, %v5598
  %v5600 = vpop.f32.mrb[0].mxu0
  %5601 = vmatprep.mubr.bf16.mxu0 0
  %5602 = vmatmul.mubr.bf16.gmra.mrb[0].mxu0 %v4932
  %v5603 = vpop.f32.mrb[0].mxu0
  %v5604 = vadd.f32 %v5244, %v5603
  %v5605 = vpop.f32.mrb[0].mxu0
  %v5606 = vpop.f32.mrb[0].mxu0
  %v5607 = vadd.f32 %v5247, %v5606
  %v5608 = vpop.f32.mrb[0].mxu0
  %5609 = vmatprep.mubr.bf16.mxu0 0
  %5610 = vmatmul.mubr.bf16.gmra.mrb[0].mxu0 %v4935
  %v5611 = vpop.f32.mrb[0].mxu0
  %v5612 = vadd.f32 %v5252, %v5611
  %v5613 = vpop.f32.mrb[0].mxu0
  %v5614 = vpop.f32.mrb[0].mxu0
  %v5615 = vadd.f32 %v5255, %v5614
  %v5616 = vpop.f32.mrb[0].mxu0
  %5617 = vmatprep.mubr.bf16.mxu0 0
  %5618 = vmatmul.mubr.bf16.gmra.mrb[0].mxu0 %v4938
  %v5619 = vpop.f32.mrb[0].mxu0
  %v5620 = vadd.f32 %v5260, %v5619
  %v5621 = vpop.f32.mrb[0].mxu0
  %v5622 = vpop.f32.mrb[0].mxu0
  %v5623 = vadd.f32 %v5263, %v5622
  %v5624 = vpop.f32.mrb[0].mxu0
  %5625 = vmatprep.mubr.bf16.mxu0 0
  %5626 = vmatmul.mubr.bf16.gmra.mrb[0].mxu0 %v4941
  %v5627 = vpop.f32.mrb[0].mxu0
  %v5628 = vadd.f32 %v5268, %v5627
  %v5629 = vpop.f32.mrb[0].mxu0
  %v5630 = vpop.f32.mrb[0].mxu0
  %v5631 = vadd.f32 %v5271, %v5630
  %v5632 = vpop.f32.mrb[0].mxu0
  %5633 = vmatprep.mubr.bf16.mxu0 0
  %5634 = vmatmul.mubr.bf16.gmra.mrb[0].mxu0 %v4944
  %v5635 = vpop.f32.mrb[0].mxu0
  %v5636 = vadd.f32 %v5276, %v5635
  %v5637 = vpop.f32.mrb[0].mxu0
  %v5638 = vpop.f32.mrb[0].mxu0
  %v5639 = vadd.f32 %v5279, %v5638
  %v5640 = vpop.f32.mrb[0].mxu0
  %5641 = vmatprep.mubr.bf16.mxu0 0
  %5642 = vmatmul.mubr.bf16.gmra.mrb[0].mxu0 %v4947
  %v5643 = vpop.f32.mrb[0].mxu0
  %v5644 = vadd.f32 %v5284, %v5643
  %v5645 = vpop.f32.mrb[0].mxu0
  %v5646 = vpop.f32.mrb[0].mxu0
  %v5647 = vadd.f32 %v5287, %v5646
  %v5648 = vpop.f32.mrb[0].mxu0
  %5649 = vmatprep.mubr.bf16.mxu0 0
  %5650 = vmatmul.mubr.bf16.gmra.mrb[0].mxu0 %v4950
  %v5651 = vpop.f32.mrb[0].mxu0
  %v5652 = vadd.f32 %v5292, %v5651
  %v5653 = vpop.f32.mrb[0].mxu0
  %v5654 = vpop.f32.mrb[0].mxu0
  %v5655 = vadd.f32 %v5295, %v5654
  %v5656 = vpop.f32.mrb[0].mxu0
  %5657 = vmatprep.mubr.bf16.mxu0 0
  %5658 = vmatmul.mubr.bf16.gmra.mrb[0].mxu0 %v4953
  %v5659 = vpop.f32.mrb[0].mxu0
  %v5660 = vadd.f32 %v5300, %v5659
  %v5661 = vpop.f32.mrb[0].mxu0
  %v5662 = vpop.f32.mrb[0].mxu0
  %v5663 = vadd.f32 %v5303, %v5662
  %v5664 = vpop.f32.mrb[0].mxu0
  %5665 = vmatprep.mubr.bf16.mxu0 0
  %5666 = vmatmul.mubr.bf16.gmra.mrb[0].mxu0 %v4956
  %v5667 = vpop.f32.mrb[0].mxu0
  %v5668 = vadd.f32 %v5308, %v5667
  %v5669 = vpop.f32.mrb[0].mxu0
  %v5670 = vpop.f32.mrb[0].mxu0
  %v5671 = vadd.f32 %v5311, %v5670
  %v5672 = vpop.f32.mrb[0].mxu0
  %5673 = vmatprep.mubr.bf16.mxu0 0
  %5674 = vmatmul.mubr.bf16.gmra.mrb[0].mxu0 %v4959
  %v5675 = vpop.f32.mrb[0].mxu0
  %v5676 = vadd.f32 %v5316, %v5675
  %v5677 = vpop.f32.mrb[0].mxu0
  %v5678 = vpop.f32.mrb[0].mxu0
  %v5679 = vpop.f32.mrb[0].mxu0
  %5680 = vdwg.mxu0
  %5681 = vst.msk [vmem:[%s6] sm:$0xff] %vm105, %v5356
  %5682 = vst.msk [vmem:[%s6 + $0x8] sm:$0xff] %vm105, %v5359
  %5683 = vst.msk [vmem:[%s6 + $0x10] sm:$0xff] %vm105, %v5364
  %5684 = vst.msk [vmem:[%s6 + $0x18] sm:$0xff] %vm105, %v5367
  %5685 = vst.msk [vmem:[%s6 + $0x20] sm:$0xff] %vm105, %v5372
  %5686 = vst.msk [vmem:[%s6 + $0x28] sm:$0xff] %vm105, %v5375
  %5687 = vst.msk [vmem:[%s6 + $0x30] sm:$0xff] %vm105, %v5380
  %5688 = vst.msk [vmem:[%s6 + $0x38] sm:$0xff] %vm105, %v5383
  %5689 = vst.msk [vmem:[%s6 + $0x40] sm:$0xff] %vm105, %v5388
  %5690 = vst.msk [vmem:[%s6 + $0x48] sm:$0xff] %vm105, %v5391
  %5691 = vst.msk [vmem:[%s6 + $0x50] sm:$0xff] %vm105, %v5396
  %5692 = vst.msk [vmem:[%s6 + $0x58] sm:$0xff] %vm105, %v5399
  %5693 = vst.msk [vmem:[%s6 + $0x60] sm:$0xff] %vm105, %v5404
  %5694 = vst.msk [vmem:[%s6 + $0x68] sm:$0xff] %vm105, %v5407
  %5695 = vst.msk [vmem:[%s6 + $0x70] sm:$0xff] %vm105, %v5412
  %5696 = vst.msk [vmem:[%s6 + $0x78] sm:$0xff] %vm105, %v5415
  %5697 = vst.msk [vmem:[%s6 + $0x80] sm:$0xff] %vm105, %v5420
  %5698 = vst.msk [vmem:[%s6 + $0x88] sm:$0xff] %vm105, %v5423
  %5699 = vst.msk [vmem:[%s6 + $0x90] sm:$0xff] %vm105, %v5428
  %5700 = vst.msk [vmem:[%s6 + $0x98] sm:$0xff] %vm105, %v5431
  %5701 = vst.msk [vmem:[%s6 + $0xa0] sm:$0xff] %vm105, %v5436
  %5702 = vst.msk [vmem:[%s6 + $0xa8] sm:$0xff] %vm105, %v5439
  %5703 = vst.msk [vmem:[%s6 + $0xb0] sm:$0xff] %vm105, %v5444
  %5704 = vst.msk [vmem:[%s6 + $0xb8] sm:$0xff] %vm105, %v5447
  %5705 = vst.msk [vmem:[%s6 + $0xc0] sm:$0xff] %vm105, %v5452
  %5706 = vst.msk [vmem:[%s6 + $0xc8] sm:$0xff] %vm105, %v5455
  %5707 = vst.msk [vmem:[%s6 + $0xd0] sm:$0xff] %vm105, %v5460
  %5708 = vst.msk [vmem:[%s6 + $0xd8] sm:$0xff] %vm105, %v5463
  %5709 = vst.msk [vmem:[%s6 + $0xe0] sm:$0xff] %vm105, %v5468
  %5710 = vst.msk [vmem:[%s6 + $0xe8] sm:$0xff] %vm105, %v5471
  %5711 = vst.msk [vmem:[%s6 + $0xf0] sm:$0xff] %vm105, %v5476
  %5712 = vst.msk [vmem:[%s6 + $0xf8] sm:$0xff] %vm105, %v5479
  %5713 = vst.msk [vmem:[%s6 + $0x100] sm:$0xff] %vm105, %v5484
  %5714 = vst.msk [vmem:[%s6 + $0x108] sm:$0xff] %vm105, %v5487
  %5715 = vst.msk [vmem:[%s6 + $0x110] sm:$0xff] %vm105, %v5492
  %5716 = vst.msk [vmem:[%s6 + $0x118] sm:$0xff] %vm105, %v5495
  %5717 = vst.msk [vmem:[%s6 + $0x120] sm:$0xff] %vm105, %v5500
  %5718 = vst.msk [vmem:[%s6 + $0x128] sm:$0xff] %vm105, %v5503
  %5719 = vst.msk [vmem:[%s6 + $0x130] sm:$0xff] %vm105, %v5508
  %5720 = vst.msk [vmem:[%s6 + $0x138] sm:$0xff] %vm105, %v5511
  %5721 = vst.msk [vmem:[%s6 + $0x140] sm:$0xff] %vm105, %v5516
  %5722 = vst.msk [vmem:[%s6 + $0x148] sm:$0xff] %vm105, %v5519
  %5723 = vst.msk [vmem:[%s6 + $0x150] sm:$0xff] %vm105, %v5524
  %5724 = vst.msk [vmem:[%s6 + $0x158] sm:$0xff] %vm105, %v5527
  %5725 = vst.msk [vmem:[%s6 + $0x160] sm:$0xff] %vm105, %v5532
  %5726 = vst.msk [vmem:[%s6 + $0x168] sm:$0xff] %vm105, %v5535
  %5727 = vst.msk [vmem:[%s6 + $0x170] sm:$0xff] %vm105, %v5540
  %5728 = vst.msk [vmem:[%s6 + $0x178] sm:$0xff] %vm105, %v5543
  %5729 = vst.msk [vmem:[%s6 + $0x180] sm:$0xff] %vm105, %v5548
  %5730 = vst.msk [vmem:[%s6 + $0x188] sm:$0xff] %vm105, %v5551
  %5731 = vst.msk [vmem:[%s6 + $0x190] sm:$0xff] %vm105, %v5556
  %5732 = vst.msk [vmem:[%s6 + $0x198] sm:$0xff] %vm105, %v5559
  %5733 = vst.msk [vmem:[%s6 + $0x1a0] sm:$0xff] %vm105, %v5564
  %5734 = vst.msk [vmem:[%s6 + $0x1a8] sm:$0xff] %vm105, %v5567
  %5735 = vst.msk [vmem:[%s6 + $0x1b0] sm:$0xff] %vm105, %v5572
  %5736 = vst.msk [vmem:[%s6 + $0x1b8] sm:$0xff] %vm105, %v5575
  %5737 = vst.msk [vmem:[%s6 + $0x1c0] sm:$0xff] %vm105, %v5580
  %5738 = vst.msk [vmem:[%s6 + $0x1c8] sm:$0xff] %vm105, %v5583
  %5739 = vst.msk [vmem:[%s6 + $0x1d0] sm:$0xff] %vm105, %v5588
  %5740 = vst.msk [vmem:[%s6 + $0x1d8] sm:$0xff] %vm105, %v5591
  %5741 = vst.msk [vmem:[%s6 + $0x1e0] sm:$0xff] %vm105, %v5596
  %5742 = vst.msk [vmem:[%s6 + $0x1e8] sm:$0xff] %vm105, %v5599
  %5743 = vst.msk [vmem:[%s6 + $0x1f0] sm:$0xff] %vm105, %v5604
  %5744 = vst.msk [vmem:[%s6 + $0x1f8] sm:$0xff] %vm105, %v5607
  %5745 = vst.msk [vmem:[%s6 + $0x200] sm:$0xff] %vm105, %v5612
  %5746 = vst.msk [vmem:[%s6 + $0x208] sm:$0xff] %vm105, %v5615
  %5747 = vst.msk [vmem:[%s6 + $0x210] sm:$0xff] %vm105, %v5620
  %5748 = vst.msk [vmem:[%s6 + $0x218] sm:$0xff] %vm105, %v5623
  %5749 = vst.msk [vmem:[%s6 + $0x220] sm:$0xff] %vm105, %v5628
  %5750 = vst.msk [vmem:[%s6 + $0x228] sm:$0xff] %vm105, %v5631
  %5751 = vst.msk [vmem:[%s6 + $0x230] sm:$0xff] %vm105, %v5636
  %5752 = vst.msk [vmem:[%s6 + $0x238] sm:$0xff] %vm105, %v5639
  %5753 = vst.msk [vmem:[%s6 + $0x240] sm:$0xff] %vm105, %v5644
  %5754 = vst.msk [vmem:[%s6 + $0x248] sm:$0xff] %vm105, %v5647
  %5755 = vst.msk [vmem:[%s6 + $0x250] sm:$0xff] %vm105, %v5652
  %5756 = vst.msk [vmem:[%s6 + $0x258] sm:$0xff] %vm105, %v5655
  %5757 = vst.msk [vmem:[%s6 + $0x260] sm:$0xff] %vm105, %v5660
  %5758 = vst.msk [vmem:[%s6 + $0x268] sm:$0xff] %vm105, %v5663
  %5759 = vst.msk [vmem:[%s6 + $0x270] sm:$0xff] %vm105, %v5668
  %5760 = vst.msk [vmem:[%s6 + $0x278] sm:$0xff] %vm105, %v5671
  %5761 = vst.msk [vmem:[%s6 + $0x280] sm:$0xff] %vm105, %v5676
  // Predicated region
  $region26: #{conv_pair_pallas.1} parent=0 // pred_check
    _
  $region27: #{conv_pair_pallas.1} parent=0 // pred_check_branch
    %5763 = sbr.rel (0) target = $region29
  $region28: #{conv_pair_pallas.1} parent=0 // pred_region
    _
  $region29: #{conv_pair_pallas.1} parent=0 // pred_fallthru
    _
  // Predicated region
  $region30: #{conv_pair_pallas.1} parent=0 // pred_check
    _
  $region31: #{conv_pair_pallas.1} parent=0 // pred_check_branch
    %5765 = sbr.rel (0) target = $region33
  $region32: #{conv_pair_pallas.1} parent=0 // pred_region
    _
  $region33: #{conv_pair_pallas.1} parent=0 // pred_fallthru
    _

</llo_original>
